<compile_context>
chip_gen: v5e
topology: v5e:2x2
jax: 0.10.0
libtpu: 0.0.40
codegen_flags: <defaults>
</compile_context>

<pallas_src>
import jax
import jax.numpy as jnp
import numpy as np
from jax.experimental import pallas as pl
from jax.experimental.pallas import tpu as pltpu

jax.config.update("jax_default_matmul_precision", "highest")

E = 5                    # ensemble members
IN_DIM = 2               # SimpleRVInputProbNN input_dim
H1, H2, H3 = 64, 32, 16
OUT_DIM = 1              # output_val_dim
HEAD = 2 * OUT_DIM       # (mean, logvar) per member

IN_AUG = IN_DIM + 1          # input + ones channel
D1 = E * H1 + 1              # 321  (per-member fc1 outputs + ones channel)
D2 = E * H2 + 1              # 161
D3 = E * 2 * H3 + 1          # 161  (fc3_mean | fc3_logvar fused)
OUT_LANES = 128              # lane-dense output slab width
assert 2 * E * OUT_DIM <= OUT_LANES


def _ensemble_kernel(x_ref, w1_ref, w2_ref, w3_ref, wh_ref,
                     out_ref, em_ref, ev_ref):
    """Fused 5-member ensemble forward + ensemble-statistics epilogue.

    Packed-parameter layouts (built once, host-side):
      w1: (IN_AUG, D1)   members concatenated; row IN_DIM = biases; last
                         column = ones-channel passthrough.
      w2: (D1, D2)       block-diagonal; last row = biases + passthrough.
      w3: (D2, D3)       block-diagonal, fc3_mean|fc3_logvar fused; last row =
                         biases + passthrough.
      wh: (D3, 128)      block-diagonal heads; lanes 0..E-1 = means,
                         lanes E..2E-1 = logvars, rest zero; last row = biases.
    """
    hp = jax.lax.Precision.HIGHEST
    x = x_ref[...]                                                  # (B, IN_AUG)
    h1 = jnp.maximum(
        jnp.dot(x, w1_ref[...], preferred_element_type=jnp.float32, precision=hp), 0.0)
    h2 = jnp.maximum(
        jnp.dot(h1, w2_ref[...], preferred_element_type=jnp.float32, precision=hp), 0.0)
    h3 = jnp.maximum(
        jnp.dot(h2, w3_ref[...], preferred_element_type=jnp.float32, precision=hp), 0.0)
    out = jnp.dot(h3, wh_ref[...], preferred_element_type=jnp.float32, precision=hp)
    out_ref[...] = out                                              # (B, 128) lane-dense

    # ----- ensemble statistics epilogue (OUT_DIM == 1) -----
    lane = jax.lax.broadcasted_iota(jnp.int32, out.shape, 1)
    mean_mask = lane < E * OUT_DIM
    logvar_mask = (lane >= E * OUT_DIM) & (lane < 2 * E * OUT_DIM)
    inv_n = 1.0 / float(out.shape[0] * E)                           # 1 / (B*E)

    mean_vals = jnp.where(mean_mask, out, 0.0)
    em = jnp.sum(jnp.sum(mean_vals, axis=1, keepdims=True),
                 axis=0, keepdims=True) * inv_n                     # (1, 1)
    var_terms = jnp.where(logvar_mask, jnp.exp(out), 0.0) + mean_vals * mean_vals
    second = jnp.sum(jnp.sum(var_terms, axis=1, keepdims=True),
                     axis=0, keepdims=True) * inv_n                 # (1, 1)
    em_ref[...] = em
    ev_ref[...] = second - em * em


def ensemble_forward(x, packed_params):
    B = x.shape[0]
    x_aug = jnp.concatenate(
        [x.astype(jnp.float32), jnp.ones((B, 1), jnp.float32)], axis=1)  # (B, IN_AUG)
    vmem = pl.BlockSpec(memory_space=pltpu.MemorySpace.VMEM)        # full-resident, 1 DMA each

    out_slab, ensemble_mean, ensemble_variance = pl.pallas_call(
        _ensemble_kernel,
        out_shape=(
            jax.ShapeDtypeStruct((B, OUT_LANES), jnp.float32),
            jax.ShapeDtypeStruct((1, OUT_DIM), jnp.float32),
            jax.ShapeDtypeStruct((1, OUT_DIM), jnp.float32),
        ),
        in_specs=[vmem] * 5,
        out_specs=(vmem, vmem, vmem),
        # No grid: one invocation; packed parameters are ~0.4 MB, which fits
        # VMEM on v5e / v6e / v7x trivially.
        # TODO(synk): for large batches, add a batch grid axis with a
        # sublane-multiple TILE_B (128 on v5e, 256 on v6e/v7x, sized against
        # v7x's 32 MiB scoped VMEM) marked "parallel" so v7x's second
        # TensorCore can be used.
    )(x_aug, *packed_params)

    heads = out_slab[:, :2 * E * OUT_DIM]                           # (B, 2*E*OUT_DIM)
    means = heads[:, :E * OUT_DIM].reshape(B, E, OUT_DIM)
    logvars = heads[:, E * OUT_DIM:].reshape(B, E, OUT_DIM)
    # member-major ordering (same as torch.cat over ensemble members)
    mean_samples = jnp.transpose(means, (1, 0, 2)).reshape(E * B, OUT_DIM)
    logvar_samples = jnp.transpose(logvars, (1, 0, 2)).reshape(E * B, OUT_DIM)
    return ensemble_mean, ensemble_variance, mean_samples, logvar_samples


# ----------------------------- parameter handling -----------------------------

def init_raw_params(key):
    """Per-member PyTorch nn.Linear-style init: U(-1/sqrt(fan_in), 1/sqrt(fan_in))."""
    def linear(k, fan_in, fan_out):
        kw, kb = jax.random.split(k)
        bound = 1.0 / np.sqrt(fan_in)
        w = jax.random.uniform(kw, (E, fan_in, fan_out), jnp.float32, -bound, bound)
        b = jax.random.uniform(kb, (E, 1, fan_out), jnp.float32, -bound, bound)
        return w, b

    ks = jax.random.split(key, 6)
    w1, b1 = linear(ks[0], IN_DIM, H1)
    w2, b2 = linear(ks[1], H1, H2)
    w3m, b3m = linear(ks[2], H2, H3)
    w3l, b3l = linear(ks[3], H2, H3)
    wm, bm = linear(ks[4], H3, OUT_DIM)
    wl, bl = linear(ks[5], H3, OUT_DIM)
    return (w1, b1, w2, b2, w3m, b3m, w3l, b3l, wm, bm, wl, bl)


def pack_params(raw):
    """Fuse the 5 members' layers + biases into 4 augmented weight slabs."""
    w1, b1, w2, b2, w3m, b3m, w3l, b3l, wm, bm, wl, bl = [np.asarray(p) for p in raw]

    W1 = np.zeros((IN_AUG, D1), np.float32)
    W2 = np.zeros((D1, D2), np.float32)
    W3 = np.zeros((D2, D3), np.float32)
    WH = np.zeros((D3, OUT_LANES), np.float32)

    for e in range(E):
        # fc1: weights + bias row
        W1[:IN_DIM, e * H1:(e + 1) * H1] = w1[e]
        W1[IN_DIM, e * H1:(e + 1) * H1] = b1[e, 0]
        # fc2: block-diagonal weights + bias row
        W2[e * H1:(e + 1) * H1, e * H2:(e + 1) * H2] = w2[e]
        W2[D1 - 1, e * H2:(e + 1) * H2] = b2[e, 0]
        # fc3_mean | fc3_logvar fused, block-diagonal + bias row
        c0 = e * 2 * H3
        W3[e * H2:(e + 1) * H2, c0:c0 + H3] = w3m[e]
        W3[e * H2:(e + 1) * H2, c0 + H3:c0 + 2 * H3] = w3l[e]
        W3[D2 - 1, c0:c0 + H3] = b3m[e, 0]
        W3[D2 - 1, c0 + H3:c0 + 2 * H3] = b3l[e, 0]
        # heads: mean -> lanes [e*OUT_DIM), logvar -> lanes [(E+e)*OUT_DIM)
        WH[c0:c0 + H3, e * OUT_DIM:(e + 1) * OUT_DIM] = wm[e]
        WH[c0 + H3:c0 + 2 * H3, (E + e) * OUT_DIM:(E + e + 1) * OUT_DIM] = wl[e]
        WH[D3 - 1, e * OUT_DIM:(e + 1) * OUT_DIM] = bm[e, 0]
        WH[D3 - 1, (E + e) * OUT_DIM:(E + e + 1) * OUT_DIM] = bl[e, 0]

    # ones-channel passthrough columns (keep the constant 1 alive through ReLU)
    W1[IN_DIM, D1 - 1] = 1.0
    W2[D1 - 1, D2 - 1] = 1.0
    W3[D2 - 1, D3 - 1] = 1.0

    return tuple(jnp.asarray(a) for a in (W1, W2, W3, WH))


# --------------------------------- reference ----------------------------------

def reference_forward(x, raw):
    """Pure-JAX replica: 5x SimpleRVInputProbNN.forward + ensemble statistics."""
    w1, b1, w2, b2, w3m, b3m, w3l, b3l, wm, bm, wl, bl = raw
    means, logvars = [], []
    for e in range(E):
        h1 = jax.nn.relu(x @ w1[e] + b1[e])
        h2 = jax.nn.relu(h1 @ w2[e] + b2[e])
        hm = jax.nn.relu(h2 @ w3m[e] + b3m[e])
        hl = jax.nn.relu(h2 @ w3l[e] + b3l[e])
        means.append(hm @ wm[e] + bm[e])
        logvars.append(hl @ wl[e] + bl[e])
    mean_s = jnp.concatenate(means, axis=0)                          # (E*B, 1)
    logvar_s = jnp.concatenate(logvars, axis=0)                      # (E*B, 1)
    em = jnp.mean(mean_s, axis=0, keepdims=True)                     # (1, 1)
    ev = jnp.mean(jnp.exp(logvar_s) + mean_s ** 2, axis=0, keepdims=True) - em ** 2
    return em, ev, mean_s, logvar_s


if __name__ == "__main__":
    key = jax.random.PRNGKey(0)
    kx, kp = jax.random.split(key)
    B = 8
    x = jax.random.normal(kx, (B, IN_DIM), jnp.float32)

    raw_params = init_raw_params(kp)
    packed_params = pack_params(raw_params)

    em, ev, mean_s, logvar_s = ensemble_forward(x, packed_params)
    jax.block_until_ready((em, ev, mean_s, logvar_s))

    em_r, ev_r, mean_r, logvar_r = reference_forward(x, raw_params)
    assert em.shape == (1, OUT_DIM) and ev.shape == (1, OUT_DIM)
    assert mean_s.shape == (E * B, OUT_DIM) and logvar_s.shape == (E * B, OUT_DIM)
    np.testing.assert_allclose(np.asarray(mean_s), np.asarray(mean_r), rtol=1e-4, atol=1e-5)
    np.testing.assert_allclose(np.asarray(logvar_s), np.asarray(logvar_r), rtol=1e-4, atol=1e-5)
    np.testing.assert_allclose(np.asarray(em), np.asarray(em_r), rtol=1e-4, atol=1e-5)
    np.testing.assert_allclose(np.asarray(ev), np.asarray(ev_r), rtol=1e-4, atol=1e-5)
    print("KERNEL_OK")
</pallas_src>

<mosaic_0001>
module attributes {stable_mosaic.version = 11 : i64} {
  func.func @_ensemble_kernel(%arg0: memref<8x3xf32, #tpu.memory_space<vmem>>, %arg1: memref<3x321xf32, #tpu.memory_space<vmem>>, %arg2: memref<321x161xf32, #tpu.memory_space<vmem>>, %arg3: memref<161x161xf32, #tpu.memory_space<vmem>>, %arg4: memref<161x128xf32, #tpu.memory_space<vmem>>, %arg5: memref<8x128xf32, #tpu.memory_space<vmem>>, %arg6: memref<1x1xf32, #tpu.memory_space<vmem>>, %arg7: memref<1x1xf32, #tpu.memory_space<vmem>>) attributes {dimension_semantics = [], scalar_prefetch = 0 : i64, scratch_operands = 0 : i64, tpu.core_type = #tpu.core_type<tc>} {
    %c0 = arith.constant 0 : index
    %c0_0 = arith.constant 0 : index
    %0 = vector.load %arg0[%c0, %c0_0] : memref<8x3xf32, #tpu.memory_space<vmem>>, vector<8x3xf32>
    %c0_1 = arith.constant 0 : index
    %c0_2 = arith.constant 0 : index
    %1 = vector.load %arg1[%c0_1, %c0_2] : memref<3x321xf32, #tpu.memory_space<vmem>>, vector<3x321xf32>
    %cst = arith.constant dense<0.000000e+00> : vector<8x321xf32>
    %2 = tpu.matmul %0, %1, %cst {dimension_numbers = #tpu.dot_dimension_numbers<[1], [0], [0], [1], [0, 0, 1, 1], [], []>, precision = #tpu.contract_precision<fp32>} : vector<8x3xf32>, vector<3x321xf32>, vector<8x321xf32> -> vector<8x321xf32>
    %cst_3 = arith.constant 0.000000e+00 : f32
    %3 = vector.broadcast %cst_3 : f32 to vector<8x321xf32>
    %4 = arith.maximumf %2, %3 : vector<8x321xf32>
    %c0_4 = arith.constant 0 : index
    %c0_5 = arith.constant 0 : index
    %5 = vector.load %arg2[%c0_4, %c0_5] : memref<321x161xf32, #tpu.memory_space<vmem>>, vector<321x161xf32>
    %cst_6 = arith.constant dense<0.000000e+00> : vector<8x161xf32>
    %6 = tpu.matmul %4, %5, %cst_6 {dimension_numbers = #tpu.dot_dimension_numbers<[1], [0], [0], [1], [0, 0, 1, 1], [], []>, precision = #tpu.contract_precision<fp32>} : vector<8x321xf32>, vector<321x161xf32>, vector<8x161xf32> -> vector<8x161xf32>
    %cst_7 = arith.constant 0.000000e+00 : f32
    %7 = vector.broadcast %cst_7 : f32 to vector<8x161xf32>
    %8 = arith.maximumf %6, %7 : vector<8x161xf32>
    %c0_8 = arith.constant 0 : index
    %c0_9 = arith.constant 0 : index
    %9 = vector.load %arg3[%c0_8, %c0_9] : memref<161x161xf32, #tpu.memory_space<vmem>>, vector<161x161xf32>
    %cst_10 = arith.constant dense<0.000000e+00> : vector<8x161xf32>
    %10 = tpu.matmul %8, %9, %cst_10 {dimension_numbers = #tpu.dot_dimension_numbers<[1], [0], [0], [1], [0, 0, 1, 1], [], []>, precision = #tpu.contract_precision<fp32>} : vector<8x161xf32>, vector<161x161xf32>, vector<8x161xf32> -> vector<8x161xf32>
    %cst_11 = arith.constant 0.000000e+00 : f32
    %11 = vector.broadcast %cst_11 : f32 to vector<8x161xf32>
    %12 = arith.maximumf %10, %11 : vector<8x161xf32>
    %c0_12 = arith.constant 0 : index
    %c0_13 = arith.constant 0 : index
    %13 = vector.load %arg4[%c0_12, %c0_13] : memref<161x128xf32, #tpu.memory_space<vmem>>, vector<161x128xf32>
    %cst_14 = arith.constant dense<0.000000e+00> : vector<8x128xf32>
    %14 = tpu.matmul %12, %13, %cst_14 {dimension_numbers = #tpu.dot_dimension_numbers<[1], [0], [0], [1], [0, 0, 1, 1], [], []>, precision = #tpu.contract_precision<fp32>} : vector<8x161xf32>, vector<161x128xf32>, vector<8x128xf32> -> vector<8x128xf32>
    %c0_15 = arith.constant 0 : index
    %c0_16 = arith.constant 0 : index
    %15 = vector.load %arg5[%c0_15, %c0_16] : memref<8x128xf32, #tpu.memory_space<vmem>>, vector<8x128xf32>
    tpu.vector_store %arg5[%c0_15, %c0_16], %14 {strides = array<i32>} : memref<8x128xf32, #tpu.memory_space<vmem>>, vector<8x128xf32>,
    %16 = tpu.iota {dimensions = array<i32: 1>} : vector<8x128xi32>
    %c5_i32 = arith.constant 5 : i32
    %17 = vector.broadcast %c5_i32 : i32 to vector<8x128xi32>
    %18 = arith.cmpi slt, %16, %17 : vector<8x128xi32>
    %c5_i32_17 = arith.constant 5 : i32
    %19 = vector.broadcast %c5_i32_17 : i32 to vector<8x128xi32>
    %20 = arith.cmpi sge, %16, %19 : vector<8x128xi32>
    %c10_i32 = arith.constant 10 : i32
    %21 = vector.broadcast %c10_i32 : i32 to vector<8x128xi32>
    %22 = arith.cmpi slt, %16, %21 : vector<8x128xi32>
    %23 = arith.andi %20, %22 : vector<8x128xi1>
    %cst_18 = arith.constant 0.000000e+00 : f32
    %24 = vector.broadcast %cst_18 : f32 to vector<8x128xf32>
    %25 = arith.select %18, %14, %24 : vector<8x128xi1>, vector<8x128xf32>
    %cst_19 = arith.constant dense<0.000000e+00> : vector<8xf32>
    %26 = vector.multi_reduction <add>, %25, %cst_19 [1] : vector<8x128xf32> to vector<8xf32>
    %27 = vector.shape_cast %26 : vector<8xf32> to vector<8x1xf32>
    %cst_20 = arith.constant dense<0.000000e+00> : vector<1xf32>
    %28 = vector.multi_reduction <add>, %27, %cst_20 [0] : vector<8x1xf32> to vector<1xf32>
    %29 = vector.shape_cast %28 : vector<1xf32> to vector<1x1xf32>
    %cst_21 = arith.constant 2.500000e-02 : f32
    %30 = vector.broadcast %cst_21 : f32 to vector<1x1xf32>
    %31 = arith.mulf %29, %30 : vector<1x1xf32>
    %32 = math.exp %14 : vector<8x128xf32>
    %cst_22 = arith.constant 0.000000e+00 : f32
    %33 = vector.broadcast %cst_22 : f32 to vector<8x128xf32>
    %34 = arith.select %23, %32, %33 : vector<8x128xi1>, vector<8x128xf32>
    %35 = arith.mulf %25, %25 : vector<8x128xf32>
    %36 = arith.addf %34, %35 : vector<8x128xf32>
    %cst_23 = arith.constant dense<0.000000e+00> : vector<8xf32>
    %37 = vector.multi_reduction <add>, %36, %cst_23 [1] : vector<8x128xf32> to vector<8xf32>
    %38 = vector.shape_cast %37 : vector<8xf32> to vector<8x1xf32>
    %cst_24 = arith.constant dense<0.000000e+00> : vector<1xf32>
    %39 = vector.multi_reduction <add>, %38, %cst_24 [0] : vector<8x1xf32> to vector<1xf32>
    %40 = vector.shape_cast %39 : vector<1xf32> to vector<1x1xf32>
    %cst_25 = arith.constant 2.500000e-02 : f32
    %41 = vector.broadcast %cst_25 : f32 to vector<1x1xf32>
    %42 = arith.mulf %40, %41 : vector<1x1xf32>
    %c0_26 = arith.constant 0 : index
    %c0_27 = arith.constant 0 : index
    %43 = vector.load %arg6[%c0_26, %c0_27] : memref<1x1xf32, #tpu.memory_space<vmem>>, vector<1x1xf32>
    tpu.vector_store %arg6[%c0_26, %c0_27], %31 {strides = array<i32>} : memref<1x1xf32, #tpu.memory_space<vmem>>, vector<1x1xf32>,
    %44 = arith.mulf %31, %31 : vector<1x1xf32>
    %45 = arith.subf %42, %44 : vector<1x1xf32>
    %c0_28 = arith.constant 0 : index
    %c0_29 = arith.constant 0 : index
    %46 = vector.load %arg7[%c0_28, %c0_29] : memref<1x1xf32, #tpu.memory_space<vmem>>, vector<1x1xf32>
    tpu.vector_store %arg7[%c0_28, %c0_29], %45 {strides = array<i32>} : memref<1x1xf32, #tpu.memory_space<vmem>>, vector<1x1xf32>,
    return
  }
}

</mosaic_0001>

<llo_original>
// kernel: tpu_custom_call.1
$region0: #{tpu_custom_call.1}
  #allocation0 [shape = 'u32[]', space=smem, size = 0x4, offset = 0x4, fixed_abs, tag = 'smem constant byte address 0x4 - core index']
  #allocation1 [shape = 'u32[72,128]{1,0:T(1,128)}', space=vmem, size = 0x9000, scoped, tag = 'internal scratch']
  %s0 = inlined_call_operand.vmem [shape: f32[8,3], index: 0, kind: input, shape index: {}]
  %s1 = inlined_call_operand.vmem [shape: f32[3,321], index: 1, kind: input, shape index: {}]
  %s2 = inlined_call_operand.vmem [shape: f32[321,161], index: 2, kind: input, shape index: {}]
  %s3 = inlined_call_operand.vmem [shape: f32[161,161], index: 3, kind: input, shape index: {}]
  %s4 = inlined_call_operand.vmem [shape: f32[161,128], index: 4, kind: input, shape index: {}]
  %s5 = inlined_call_operand.hbm [shape: f32[8,128], index: 5, kind: output, shape index: {0}]
  %s6 = inlined_call_operand.hbm [shape: f32[1,1], index: 6, kind: output, shape index: {1}]
  %s7 = inlined_call_operand.hbm [shape: f32[1,1], index: 7, kind: output, shape index: {2}]
  %8 = xla_tuple %s5, %s6, %s7
  %s9 = sld [smem:[#allocation0]]
  $region46: #{tpu_custom_call.1} parent=0
    _
  %s11 = ssub.s32 1, %s9
  %s12 = scalar_select 0, %s11, %s9
  $region1: #{tpu_custom_call.1} parent=0
    #allocation2 [shape = 'u8[4096]{0}', space=vmem, size = 0x1000, scoped, tag = 'output window, operand 0, single buffered']
    #allocation3 [shape = 's32[1]{0}', space=sflag, size = 0x4, scoped, tag = 'scoped memory for tpu_custom_call.1']
    #allocation4 [shape = 'u8[512]{0}', space=vmem, size = 0x400, scoped, tag = 'output window, operand 1, single buffered']
    #allocation5 [shape = 's32[1]{0}', space=sflag, size = 0x4, scoped, tag = 'scoped memory for tpu_custom_call.1']
    #allocation6 [shape = 'u8[512]{0}', space=vmem, size = 0x400, scoped, tag = 'output window, operand 2, single buffered']
    %13 = vsyncpa [#allocation3], 0
    %14 = vsyncpa [#allocation5], 0
    // Predicated region
    $region2: #{tpu_custom_call.1} parent=1 // pred_check
      _
    $region3: #{tpu_custom_call.1} parent=1 // pred_check_branch
      %16 = sbr.rel (0) target = $region5
    $region4: #{tpu_custom_call.1} parent=1 // pred_region
      _
    $region5: #{tpu_custom_call.1} parent=1 // pred_fallthru
      _
    // Predicated region
    $region6: #{tpu_custom_call.1} parent=1 // pred_check
      _
    $region7: #{tpu_custom_call.1} parent=1 // pred_check_branch
      %18 = sbr.rel (0) target = $region9
    $region8: #{tpu_custom_call.1} parent=1 // pred_region
      _
    $region9: #{tpu_custom_call.1} parent=1 // pred_fallthru
      _
    // Predicated region
    $region10: #{tpu_custom_call.1} parent=1 // pred_check
      _
    $region11: #{tpu_custom_call.1} parent=1 // pred_check_branch
      %20 = sbr.rel (0) target = $region13
    $region12: #{tpu_custom_call.1} parent=1 // pred_region
      _
    $region13: #{tpu_custom_call.1} parent=1 // pred_fallthru
      _
    // Predicated region
    $region14: #{tpu_custom_call.1} parent=1 // pred_check
      _
    $region15: #{tpu_custom_call.1} parent=1 // pred_check_branch
      %22 = sbr.rel (0) target = $region17
    $region16: #{tpu_custom_call.1} parent=1 // pred_region
      _
    $region17: #{tpu_custom_call.1} parent=1 // pred_fallthru
      _
    // Predicated region
    $region18: #{tpu_custom_call.1} parent=1 // pred_check
      _
    $region19: #{tpu_custom_call.1} parent=1 // pred_check_branch
      %24 = sbr.rel (0) target = $region21
    $region20: #{tpu_custom_call.1} parent=1 // pred_region
      _
    $region21: #{tpu_custom_call.1} parent=1 // pred_fallthru
      _
    %v25 = vld [vmem:[%s0] sm:$0xff]
    %v26 = vld [vmem:[%s1] sm:$0x77]
    %v27 = vld [vmem:[%s1 + $0x8] sm:$0x7]
    %30 = vst [vmem:[#allocation1] ss:$2 sm:$0xff] %v26
    %s31 = scalar_lea.vmem [#allocation1], 16
    %32 = vst [vmem:[%s31] ss:$2 sm:$0xff] %v27
    %v33 = vld.sshfl [vmem:[#allocation1] sm:$0xff pattern:$0x75316420]
    %v34 = vld.sshfl [vmem:[#allocation1 + $0x8] sm:$0xff pattern:$0x75316420]
    %v35 = vld.sshfl [vmem:[#allocation1 + $0x10] sm:$0xff pattern:$0x75316420]
    %vm36 = vcmask 23552
    %v38 = vsel %vm36, %v25, 0
    %vm40 = vcmask 1042432
    %v41 = vsel %vm40, %v33, 0
    %v43 = vsel %vm40, %v34, 0
    %v45 = vsel %vm40, %v35, 0
    %47 = vmatpush.msra.mxu0 0.0
    %48 = vmatpush.msra.mxu0 0.0
    %49 = vmatpush.msra.mxu0 0.0
    %50 = vmatpush.msra.mxu0 0.0
    %51 = vmatpush.msra.mxu0 0.0
    %52 = vmatpush.msra.mxu0 0.0
    %53 = vmatpush.msra.mxu0 0.0
    %54 = vmatpush.msra.mxu0 0.0
    %55 = vmatpush.msra.mxu0 0.0
    %56 = vmatpush.msra.mxu0 0.0
    %57 = vmatpush.msra.mxu0 0.0
    %58 = vmatpush.msra.mxu0 0.0
    %59 = vmatpush.msra.mxu0 0.0
    %60 = vmatpush.msra.mxu0 0.0
    %61 = vmatpush.msra.mxu0 0.0
    %v62 = vand.u32 %v41, 4294901760
    %63 = vmatpush.msra.mxu0 %v62
    %v64 = vand.u32 %v38, 4294901760
    %v65 = vsub.f32 %v38, %v64
    %v66 = vand.u32 %v65, 4294901760
    %v67 = vsub.f32 %v65, %v66
    %v68 = vand.u32 %v67, 4294901760
    %69 = vmatmul.f32.gmra.mxu0 %v68
    %v70 = vpop.f32.mrf.mxu0
    %v71 = vadd.f32 0.0, %v70
    %72 = vdwg.mxu0
    %73 = vmatpush.msra.mxu0 0.0
    %74 = vmatpush.msra.mxu0 0.0
    %75 = vmatpush.msra.mxu0 0.0
    %76 = vmatpush.msra.mxu0 0.0
    %77 = vmatpush.msra.mxu0 0.0
    %78 = vmatpush.msra.mxu0 0.0
    %79 = vmatpush.msra.mxu0 0.0
    %80 = vmatpush.msra.mxu0 0.0
    %81 = vmatpush.msra.mxu0 0.0
    %82 = vmatpush.msra.mxu0 0.0
    %83 = vmatpush.msra.mxu0 0.0
    %84 = vmatpush.msra.mxu0 0.0
    %85 = vmatpush.msra.mxu0 0.0
    %86 = vmatpush.msra.mxu0 0.0
    %87 = vmatpush.msra.mxu0 0.0
    %v88 = vand.u32 %v41, 4294901760
    %v89 = vsub.f32 %v41, %v88
    %v90 = vand.u32 %v89, 4294901760
    %v91 = vsub.f32 %v89, %v90
    %v92 = vand.u32 %v91, 4294901760
    %93 = vmatpush.msra.mxu0 %v92
    %v94 = vand.u32 %v38, 4294901760
    %95 = vmatmul.f32.gmra.mxu0 %v94
    %v96 = vpop.f32.mrf.mxu0
    %v97 = vadd.f32 %v71, %v96
    %98 = vdwg.mxu0
    %99 = vmatpush.msra.mxu0 0.0
    %100 = vmatpush.msra.mxu0 0.0
    %101 = vmatpush.msra.mxu0 0.0
    %102 = vmatpush.msra.mxu0 0.0
    %103 = vmatpush.msra.mxu0 0.0
    %104 = vmatpush.msra.mxu0 0.0
    %105 = vmatpush.msra.mxu0 0.0
    %106 = vmatpush.msra.mxu0 0.0
    %107 = vmatpush.msra.mxu0 0.0
    %108 = vmatpush.msra.mxu0 0.0
    %109 = vmatpush.msra.mxu0 0.0
    %110 = vmatpush.msra.mxu0 0.0
    %111 = vmatpush.msra.mxu0 0.0
    %112 = vmatpush.msra.mxu0 0.0
    %113 = vmatpush.msra.mxu0 0.0
    %v114 = vand.u32 %v41, 4294901760
    %v115 = vsub.f32 %v41, %v114
    %116 = vmatpush.msra.mxu0 %v115
    %v117 = vand.u32 %v38, 4294901760
    %v118 = vsub.f32 %v38, %v117
    %119 = vmatmul.f32.gmra.mxu0 %v118
    %v120 = vpop.f32.mrf.mxu0
    %v121 = vadd.f32 %v97, %v120
    %122 = vdwg.mxu0
    %123 = vmatpush.msra.mxu0 0.0
    %124 = vmatpush.msra.mxu0 0.0
    %125 = vmatpush.msra.mxu0 0.0
    %126 = vmatpush.msra.mxu0 0.0
    %127 = vmatpush.msra.mxu0 0.0
    %128 = vmatpush.msra.mxu0 0.0
    %129 = vmatpush.msra.mxu0 0.0
    %130 = vmatpush.msra.mxu0 0.0
    %131 = vmatpush.msra.mxu0 0.0
    %132 = vmatpush.msra.mxu0 0.0
    %133 = vmatpush.msra.mxu0 0.0
    %134 = vmatpush.msra.mxu0 0.0
    %135 = vmatpush.msra.mxu0 0.0
    %136 = vmatpush.msra.mxu0 0.0
    %137 = vmatpush.msra.mxu0 0.0
    %v138 = vand.u32 %v41, 4294901760
    %139 = vmatpush.msra.mxu0 %v138
    %v140 = vand.u32 %v38, 4294901760
    %v141 = vsub.f32 %v38, %v140
    %v142 = vand.u32 %v141, 4294901760
    %143 = vmatmul.f32.gmra.mxu0 %v142
    %v144 = vpop.f32.mrf.mxu0
    %v145 = vadd.f32 %v121, %v144
    %146 = vdwg.mxu0
    %147 = vmatpush.msra.mxu0 0.0
    %148 = vmatpush.msra.mxu0 0.0
    %149 = vmatpush.msra.mxu0 0.0
    %150 = vmatpush.msra.mxu0 0.0
    %151 = vmatpush.msra.mxu0 0.0
    %152 = vmatpush.msra.mxu0 0.0
    %153 = vmatpush.msra.mxu0 0.0
    %154 = vmatpush.msra.mxu0 0.0
    %155 = vmatpush.msra.mxu0 0.0
    %156 = vmatpush.msra.mxu0 0.0
    %157 = vmatpush.msra.mxu0 0.0
    %158 = vmatpush.msra.mxu0 0.0
    %159 = vmatpush.msra.mxu0 0.0
    %160 = vmatpush.msra.mxu0 0.0
    %161 = vmatpush.msra.mxu0 0.0
    %v162 = vand.u32 %v41, 4294901760
    %v163 = vsub.f32 %v41, %v162
    %v164 = vand.u32 %v163, 4294901760
    %165 = vmatpush.msra.mxu0 %v164
    %v166 = vand.u32 %v38, 4294901760
    %167 = vmatmul.f32.gmra.mxu0 %v166
    %v168 = vpop.f32.mrf.mxu0
    %v169 = vadd.f32 %v145, %v168
    %170 = vdwg.mxu0
    %171 = vmatpush.msra.mxu0 0.0
    %172 = vmatpush.msra.mxu0 0.0
    %173 = vmatpush.msra.mxu0 0.0
    %174 = vmatpush.msra.mxu0 0.0
    %175 = vmatpush.msra.mxu0 0.0
    %176 = vmatpush.msra.mxu0 0.0
    %177 = vmatpush.msra.mxu0 0.0
    %178 = vmatpush.msra.mxu0 0.0
    %179 = vmatpush.msra.mxu0 0.0
    %180 = vmatpush.msra.mxu0 0.0
    %181 = vmatpush.msra.mxu0 0.0
    %182 = vmatpush.msra.mxu0 0.0
    %183 = vmatpush.msra.mxu0 0.0
    %184 = vmatpush.msra.mxu0 0.0
    %185 = vmatpush.msra.mxu0 0.0
    %v186 = vand.u32 %v41, 4294901760
    %187 = vmatpush.msra.mxu0 %v186
    %v188 = vand.u32 %v38, 4294901760
    %189 = vmatmul.f32.gmra.mxu0 %v188
    %v190 = vpop.f32.mrf.mxu0
    %v191 = vadd.f32 %v169, %v190
    %192 = vdwg.mxu0
    %193 = vmatpush.msra.mxu0 0.0
    %194 = vmatpush.msra.mxu0 0.0
    %195 = vmatpush.msra.mxu0 0.0
    %196 = vmatpush.msra.mxu0 0.0
    %197 = vmatpush.msra.mxu0 0.0
    %198 = vmatpush.msra.mxu0 0.0
    %199 = vmatpush.msra.mxu0 0.0
    %200 = vmatpush.msra.mxu0 0.0
    %201 = vmatpush.msra.mxu0 0.0
    %202 = vmatpush.msra.mxu0 0.0
    %203 = vmatpush.msra.mxu0 0.0
    %204 = vmatpush.msra.mxu0 0.0
    %205 = vmatpush.msra.mxu0 0.0
    %206 = vmatpush.msra.mxu0 0.0
    %207 = vmatpush.msra.mxu0 0.0
    %v208 = vand.u32 %v43, 4294901760
    %209 = vmatpush.msra.mxu0 %v208
    %v210 = vand.u32 %v38, 4294901760
    %v211 = vsub.f32 %v38, %v210
    %v212 = vand.u32 %v211, 4294901760
    %v213 = vsub.f32 %v211, %v212
    %v214 = vand.u32 %v213, 4294901760
    %215 = vmatmul.f32.gmra.mxu0 %v214
    %v216 = vpop.f32.mrf.mxu0
    %v217 = vadd.f32 0.0, %v216
    %218 = vdwg.mxu0
    %219 = vmatpush.msra.mxu0 0.0
    %220 = vmatpush.msra.mxu0 0.0
    %221 = vmatpush.msra.mxu0 0.0
    %222 = vmatpush.msra.mxu0 0.0
    %223 = vmatpush.msra.mxu0 0.0
    %224 = vmatpush.msra.mxu0 0.0
    %225 = vmatpush.msra.mxu0 0.0
    %226 = vmatpush.msra.mxu0 0.0
    %227 = vmatpush.msra.mxu0 0.0
    %228 = vmatpush.msra.mxu0 0.0
    %229 = vmatpush.msra.mxu0 0.0
    %230 = vmatpush.msra.mxu0 0.0
    %231 = vmatpush.msra.mxu0 0.0
    %232 = vmatpush.msra.mxu0 0.0
    %233 = vmatpush.msra.mxu0 0.0
    %v234 = vand.u32 %v43, 4294901760
    %v235 = vsub.f32 %v43, %v234
    %v236 = vand.u32 %v235, 4294901760
    %v237 = vsub.f32 %v235, %v236
    %v238 = vand.u32 %v237, 4294901760
    %239 = vmatpush.msra.mxu0 %v238
    %v240 = vand.u32 %v38, 4294901760
    %241 = vmatmul.f32.gmra.mxu0 %v240
    %v242 = vpop.f32.mrf.mxu0
    %v243 = vadd.f32 %v217, %v242
    %244 = vdwg.mxu0
    %245 = vmatpush.msra.mxu0 0.0
    %246 = vmatpush.msra.mxu0 0.0
    %247 = vmatpush.msra.mxu0 0.0
    %248 = vmatpush.msra.mxu0 0.0
    %249 = vmatpush.msra.mxu0 0.0
    %250 = vmatpush.msra.mxu0 0.0
    %251 = vmatpush.msra.mxu0 0.0
    %252 = vmatpush.msra.mxu0 0.0
    %253 = vmatpush.msra.mxu0 0.0
    %254 = vmatpush.msra.mxu0 0.0
    %255 = vmatpush.msra.mxu0 0.0
    %256 = vmatpush.msra.mxu0 0.0
    %257 = vmatpush.msra.mxu0 0.0
    %258 = vmatpush.msra.mxu0 0.0
    %259 = vmatpush.msra.mxu0 0.0
    %v260 = vand.u32 %v43, 4294901760
    %v261 = vsub.f32 %v43, %v260
    %262 = vmatpush.msra.mxu0 %v261
    %v263 = vand.u32 %v38, 4294901760
    %v264 = vsub.f32 %v38, %v263
    %265 = vmatmul.f32.gmra.mxu0 %v264
    %v266 = vpop.f32.mrf.mxu0
    %v267 = vadd.f32 %v243, %v266
    %268 = vdwg.mxu0
    %269 = vmatpush.msra.mxu0 0.0
    %270 = vmatpush.msra.mxu0 0.0
    %271 = vmatpush.msra.mxu0 0.0
    %272 = vmatpush.msra.mxu0 0.0
    %273 = vmatpush.msra.mxu0 0.0
    %274 = vmatpush.msra.mxu0 0.0
    %275 = vmatpush.msra.mxu0 0.0
    %276 = vmatpush.msra.mxu0 0.0
    %277 = vmatpush.msra.mxu0 0.0
    %278 = vmatpush.msra.mxu0 0.0
    %279 = vmatpush.msra.mxu0 0.0
    %280 = vmatpush.msra.mxu0 0.0
    %281 = vmatpush.msra.mxu0 0.0
    %282 = vmatpush.msra.mxu0 0.0
    %283 = vmatpush.msra.mxu0 0.0
    %v284 = vand.u32 %v43, 4294901760
    %285 = vmatpush.msra.mxu0 %v284
    %v286 = vand.u32 %v38, 4294901760
    %v287 = vsub.f32 %v38, %v286
    %v288 = vand.u32 %v287, 4294901760
    %289 = vmatmul.f32.gmra.mxu0 %v288
    %v290 = vpop.f32.mrf.mxu0
    %v291 = vadd.f32 %v267, %v290
    %292 = vdwg.mxu0
    %293 = vmatpush.msra.mxu0 0.0
    %294 = vmatpush.msra.mxu0 0.0
    %295 = vmatpush.msra.mxu0 0.0
    %296 = vmatpush.msra.mxu0 0.0
    %297 = vmatpush.msra.mxu0 0.0
    %298 = vmatpush.msra.mxu0 0.0
    %299 = vmatpush.msra.mxu0 0.0
    %300 = vmatpush.msra.mxu0 0.0
    %301 = vmatpush.msra.mxu0 0.0
    %302 = vmatpush.msra.mxu0 0.0
    %303 = vmatpush.msra.mxu0 0.0
    %304 = vmatpush.msra.mxu0 0.0
    %305 = vmatpush.msra.mxu0 0.0
    %306 = vmatpush.msra.mxu0 0.0
    %307 = vmatpush.msra.mxu0 0.0
    %v308 = vand.u32 %v43, 4294901760
    %v309 = vsub.f32 %v43, %v308
    %v310 = vand.u32 %v309, 4294901760
    %311 = vmatpush.msra.mxu0 %v310
    %v312 = vand.u32 %v38, 4294901760
    %313 = vmatmul.f32.gmra.mxu0 %v312
    %v314 = vpop.f32.mrf.mxu0
    %v315 = vadd.f32 %v291, %v314
    %316 = vdwg.mxu0
    %317 = vmatpush.msra.mxu0 0.0
    %318 = vmatpush.msra.mxu0 0.0
    %319 = vmatpush.msra.mxu0 0.0
    %320 = vmatpush.msra.mxu0 0.0
    %321 = vmatpush.msra.mxu0 0.0
    %322 = vmatpush.msra.mxu0 0.0
    %323 = vmatpush.msra.mxu0 0.0
    %324 = vmatpush.msra.mxu0 0.0
    %325 = vmatpush.msra.mxu0 0.0
    %326 = vmatpush.msra.mxu0 0.0
    %327 = vmatpush.msra.mxu0 0.0
    %328 = vmatpush.msra.mxu0 0.0
    %329 = vmatpush.msra.mxu0 0.0
    %330 = vmatpush.msra.mxu0 0.0
    %331 = vmatpush.msra.mxu0 0.0
    %v332 = vand.u32 %v43, 4294901760
    %333 = vmatpush.msra.mxu0 %v332
    %v334 = vand.u32 %v38, 4294901760
    %335 = vmatmul.f32.gmra.mxu0 %v334
    %v336 = vpop.f32.mrf.mxu0
    %v337 = vadd.f32 %v315, %v336
    %338 = vdwg.mxu0
    %339 = vmatpush.msra.mxu0 0.0
    %340 = vmatpush.msra.mxu0 0.0
    %341 = vmatpush.msra.mxu0 0.0
    %342 = vmatpush.msra.mxu0 0.0
    %343 = vmatpush.msra.mxu0 0.0
    %344 = vmatpush.msra.mxu0 0.0
    %345 = vmatpush.msra.mxu0 0.0
    %346 = vmatpush.msra.mxu0 0.0
    %347 = vmatpush.msra.mxu0 0.0
    %348 = vmatpush.msra.mxu0 0.0
    %349 = vmatpush.msra.mxu0 0.0
    %350 = vmatpush.msra.mxu0 0.0
    %351 = vmatpush.msra.mxu0 0.0
    %352 = vmatpush.msra.mxu0 0.0
    %353 = vmatpush.msra.mxu0 0.0
    %v354 = vand.u32 %v45, 4294901760
    %355 = vmatpush.msra.mxu0 %v354
    %v356 = vand.u32 %v38, 4294901760
    %v357 = vsub.f32 %v38, %v356
    %v358 = vand.u32 %v357, 4294901760
    %v359 = vsub.f32 %v357, %v358
    %v360 = vand.u32 %v359, 4294901760
    %361 = vmatmul.f32.gmra.mxu0 %v360
    %v362 = vpop.f32.mrf.mxu0
    %v363 = vadd.f32 0.0, %v362
    %364 = vdwg.mxu0
    %365 = vmatpush.msra.mxu0 0.0
    %366 = vmatpush.msra.mxu0 0.0
    %367 = vmatpush.msra.mxu0 0.0
    %368 = vmatpush.msra.mxu0 0.0
    %369 = vmatpush.msra.mxu0 0.0
    %370 = vmatpush.msra.mxu0 0.0
    %371 = vmatpush.msra.mxu0 0.0
    %372 = vmatpush.msra.mxu0 0.0
    %373 = vmatpush.msra.mxu0 0.0
    %374 = vmatpush.msra.mxu0 0.0
    %375 = vmatpush.msra.mxu0 0.0
    %376 = vmatpush.msra.mxu0 0.0
    %377 = vmatpush.msra.mxu0 0.0
    %378 = vmatpush.msra.mxu0 0.0
    %379 = vmatpush.msra.mxu0 0.0
    %v380 = vand.u32 %v45, 4294901760
    %v381 = vsub.f32 %v45, %v380
    %v382 = vand.u32 %v381, 4294901760
    %v383 = vsub.f32 %v381, %v382
    %v384 = vand.u32 %v383, 4294901760
    %385 = vmatpush.msra.mxu0 %v384
    %v386 = vand.u32 %v38, 4294901760
    %387 = vmatmul.f32.gmra.mxu0 %v386
    %v388 = vpop.f32.mrf.mxu0
    %v389 = vadd.f32 %v363, %v388
    %390 = vdwg.mxu0
    %391 = vmatpush.msra.mxu0 0.0
    %392 = vmatpush.msra.mxu0 0.0
    %393 = vmatpush.msra.mxu0 0.0
    %394 = vmatpush.msra.mxu0 0.0
    %395 = vmatpush.msra.mxu0 0.0
    %396 = vmatpush.msra.mxu0 0.0
    %397 = vmatpush.msra.mxu0 0.0
    %398 = vmatpush.msra.mxu0 0.0
    %399 = vmatpush.msra.mxu0 0.0
    %400 = vmatpush.msra.mxu0 0.0
    %401 = vmatpush.msra.mxu0 0.0
    %402 = vmatpush.msra.mxu0 0.0
    %403 = vmatpush.msra.mxu0 0.0
    %404 = vmatpush.msra.mxu0 0.0
    %405 = vmatpush.msra.mxu0 0.0
    %v406 = vand.u32 %v45, 4294901760
    %v407 = vsub.f32 %v45, %v406
    %408 = vmatpush.msra.mxu0 %v407
    %v409 = vand.u32 %v38, 4294901760
    %v410 = vsub.f32 %v38, %v409
    %411 = vmatmul.f32.gmra.mxu0 %v410
    %v412 = vpop.f32.mrf.mxu0
    %v413 = vadd.f32 %v389, %v412
    %414 = vdwg.mxu0
    %415 = vmatpush.msra.mxu0 0.0
    %416 = vmatpush.msra.mxu0 0.0
    %417 = vmatpush.msra.mxu0 0.0
    %418 = vmatpush.msra.mxu0 0.0
    %419 = vmatpush.msra.mxu0 0.0
    %420 = vmatpush.msra.mxu0 0.0
    %421 = vmatpush.msra.mxu0 0.0
    %422 = vmatpush.msra.mxu0 0.0
    %423 = vmatpush.msra.mxu0 0.0
    %424 = vmatpush.msra.mxu0 0.0
    %425 = vmatpush.msra.mxu0 0.0
    %426 = vmatpush.msra.mxu0 0.0
    %427 = vmatpush.msra.mxu0 0.0
    %428 = vmatpush.msra.mxu0 0.0
    %429 = vmatpush.msra.mxu0 0.0
    %v430 = vand.u32 %v45, 4294901760
    %431 = vmatpush.msra.mxu0 %v430
    %v432 = vand.u32 %v38, 4294901760
    %v433 = vsub.f32 %v38, %v432
    %v434 = vand.u32 %v433, 4294901760
    %435 = vmatmul.f32.gmra.mxu0 %v434
    %v436 = vpop.f32.mrf.mxu0
    %v437 = vadd.f32 %v413, %v436
    %438 = vdwg.mxu0
    %439 = vmatpush.msra.mxu0 0.0
    %440 = vmatpush.msra.mxu0 0.0
    %441 = vmatpush.msra.mxu0 0.0
    %442 = vmatpush.msra.mxu0 0.0
    %443 = vmatpush.msra.mxu0 0.0
    %444 = vmatpush.msra.mxu0 0.0
    %445 = vmatpush.msra.mxu0 0.0
    %446 = vmatpush.msra.mxu0 0.0
    %447 = vmatpush.msra.mxu0 0.0
    %448 = vmatpush.msra.mxu0 0.0
    %449 = vmatpush.msra.mxu0 0.0
    %450 = vmatpush.msra.mxu0 0.0
    %451 = vmatpush.msra.mxu0 0.0
    %452 = vmatpush.msra.mxu0 0.0
    %453 = vmatpush.msra.mxu0 0.0
    %v454 = vand.u32 %v45, 4294901760
    %v455 = vsub.f32 %v45, %v454
    %v456 = vand.u32 %v455, 4294901760
    %457 = vmatpush.msra.mxu0 %v456
    %v458 = vand.u32 %v38, 4294901760
    %459 = vmatmul.f32.gmra.mxu0 %v458
    %v460 = vpop.f32.mrf.mxu0
    %v461 = vadd.f32 %v437, %v460
    %462 = vdwg.mxu0
    %463 = vmatpush.msra.mxu0 0.0
    %464 = vmatpush.msra.mxu0 0.0
    %465 = vmatpush.msra.mxu0 0.0
    %466 = vmatpush.msra.mxu0 0.0
    %467 = vmatpush.msra.mxu0 0.0
    %468 = vmatpush.msra.mxu0 0.0
    %469 = vmatpush.msra.mxu0 0.0
    %470 = vmatpush.msra.mxu0 0.0
    %471 = vmatpush.msra.mxu0 0.0
    %472 = vmatpush.msra.mxu0 0.0
    %473 = vmatpush.msra.mxu0 0.0
    %474 = vmatpush.msra.mxu0 0.0
    %475 = vmatpush.msra.mxu0 0.0
    %476 = vmatpush.msra.mxu0 0.0
    %477 = vmatpush.msra.mxu0 0.0
    %v478 = vand.u32 %v45, 4294901760
    %479 = vmatpush.msra.mxu0 %v478
    %v480 = vand.u32 %v38, 4294901760
    %481 = vmatmul.f32.gmra.mxu0 %v480
    %v482 = vpop.f32.mrf.mxu0
    %v483 = vadd.f32 %v461, %v482
    %484 = vdwg.mxu0
    %v485 = vmax.f32 %v191, 0.0
    %v486 = vmax.f32 %v337, 0.0
    %v487 = vmax.f32 %v483, 0.0
    %v488 = vld [vmem:[%s2] sm:$0xff]
    %v489 = vld [vmem:[%s2 + $0x8] sm:$0xff]
    %v490 = vld [vmem:[%s2 + $0x10] sm:$0xff]
    %v491 = vld [vmem:[%s2 + $0x18] sm:$0xff]
    %v492 = vld [vmem:[%s2 + $0x20] sm:$0xff]
    %v493 = vld [vmem:[%s2 + $0x28] sm:$0xff]
    %v494 = vld [vmem:[%s2 + $0x30] sm:$0xff]
    %v495 = vld [vmem:[%s2 + $0x38] sm:$0xff]
    %v496 = vld [vmem:[%s2 + $0x40] sm:$0xff]
    %v497 = vld [vmem:[%s2 + $0x48] sm:$0xff]
    %v498 = vld [vmem:[%s2 + $0x50] sm:$0xff]
    %v499 = vld [vmem:[%s2 + $0x58] sm:$0xff]
    %v500 = vld [vmem:[%s2 + $0x60] sm:$0xff]
    %v501 = vld [vmem:[%s2 + $0x68] sm:$0xff]
    %v502 = vld [vmem:[%s2 + $0x70] sm:$0xff]
    %v503 = vld [vmem:[%s2 + $0x78] sm:$0xff]
    %v504 = vld [vmem:[%s2 + $0x80] sm:$0xff]
    %v505 = vld [vmem:[%s2 + $0x88] sm:$0xff]
    %v506 = vld [vmem:[%s2 + $0x90] sm:$0xff]
    %v507 = vld [vmem:[%s2 + $0x98] sm:$0xff]
    %v508 = vld [vmem:[%s2 + $0xa0] sm:$0xff]
    %v509 = vld [vmem:[%s2 + $0xa8] sm:$0xff]
    %v510 = vld [vmem:[%s2 + $0xb0] sm:$0xff]
    %v511 = vld [vmem:[%s2 + $0xb8] sm:$0xff]
    %v512 = vld [vmem:[%s2 + $0xc0] sm:$0xff]
    %v513 = vld [vmem:[%s2 + $0xc8] sm:$0xff]
    %v514 = vld [vmem:[%s2 + $0xd0] sm:$0xff]
    %v515 = vld [vmem:[%s2 + $0xd8] sm:$0xff]
    %v516 = vld [vmem:[%s2 + $0xe0] sm:$0xff]
    %v517 = vld [vmem:[%s2 + $0xe8] sm:$0xff]
    %v518 = vld [vmem:[%s2 + $0xf0] sm:$0xff]
    %v519 = vld [vmem:[%s2 + $0xf8] sm:$0xff]
    %v520 = vld [vmem:[%s2 + $0x100] sm:$0xff]
    %v521 = vld [vmem:[%s2 + $0x108] sm:$0xff]
    %v522 = vld [vmem:[%s2 + $0x110] sm:$0xff]
    %v523 = vld [vmem:[%s2 + $0x118] sm:$0xff]
    %v524 = vld [vmem:[%s2 + $0x120] sm:$0xff]
    %v525 = vld [vmem:[%s2 + $0x128] sm:$0xff]
    %v526 = vld [vmem:[%s2 + $0x130] sm:$0xff]
    %v527 = vld [vmem:[%s2 + $0x138] sm:$0xff]
    %v528 = vld [vmem:[%s2 + $0x140] sm:$0xff]
    %v529 = vld [vmem:[%s2 + $0x148] sm:$0xff]
    %v530 = vld [vmem:[%s2 + $0x150] sm:$0xff]
    %v531 = vld [vmem:[%s2 + $0x158] sm:$0xff]
    %v532 = vld [vmem:[%s2 + $0x160] sm:$0xff]
    %v533 = vld [vmem:[%s2 + $0x168] sm:$0xff]
    %v534 = vld [vmem:[%s2 + $0x170] sm:$0xff]
    %v535 = vld [vmem:[%s2 + $0x178] sm:$0xff]
    %v536 = vld [vmem:[%s2 + $0x180] sm:$0xff]
    %v537 = vld [vmem:[%s2 + $0x188] sm:$0xff]
    %v538 = vld [vmem:[%s2 + $0x190] sm:$0xff]
    %v539 = vld [vmem:[%s2 + $0x198] sm:$0xff]
    %v540 = vld [vmem:[%s2 + $0x1a0] sm:$0xff]
    %v541 = vld [vmem:[%s2 + $0x1a8] sm:$0xff]
    %v542 = vld [vmem:[%s2 + $0x1b0] sm:$0xff]
    %v543 = vld [vmem:[%s2 + $0x1b8] sm:$0xff]
    %v544 = vld [vmem:[%s2 + $0x1c0] sm:$0xff]
    %v545 = vld [vmem:[%s2 + $0x1c8] sm:$0xff]
    %v546 = vld [vmem:[%s2 + $0x1d0] sm:$0xff]
    %v547 = vld [vmem:[%s2 + $0x1d8] sm:$0xff]
    %v548 = vld [vmem:[%s2 + $0x1e0] sm:$0xff]
    %v549 = vld [vmem:[%s2 + $0x1e8] sm:$0xff]
    %v550 = vld [vmem:[%s2 + $0x1f0] sm:$0xff]
    %v551 = vld [vmem:[%s2 + $0x1f8] sm:$0xff]
    %v552 = vld [vmem:[%s2 + $0x200] sm:$0xff]
    %v553 = vld [vmem:[%s2 + $0x208] sm:$0xff]
    %v554 = vld [vmem:[%s2 + $0x210] sm:$0xff]
    %v555 = vld [vmem:[%s2 + $0x218] sm:$0xff]
    %v556 = vld [vmem:[%s2 + $0x220] sm:$0xff]
    %v557 = vld [vmem:[%s2 + $0x228] sm:$0xff]
    %v558 = vld [vmem:[%s2 + $0x230] sm:$0xff]
    %v559 = vld [vmem:[%s2 + $0x238] sm:$0xff]
    %v560 = vld [vmem:[%s2 + $0x240] sm:$0xff]
    %v561 = vld [vmem:[%s2 + $0x248] sm:$0xff]
    %v562 = vld [vmem:[%s2 + $0x250] sm:$0xff]
    %v563 = vld [vmem:[%s2 + $0x258] sm:$0xff]
    %v564 = vld [vmem:[%s2 + $0x260] sm:$0xff]
    %v565 = vld [vmem:[%s2 + $0x268] sm:$0xff]
    %v566 = vld [vmem:[%s2 + $0x270] sm:$0xff]
    %v567 = vld [vmem:[%s2 + $0x278] sm:$0xff]
    %v568 = vld [vmem:[%s2 + $0x280] sm:$0x1]
    %v569 = vld [vmem:[%s2 + $0x288] sm:$0x1]
    %vm570 = vcmask 531456
    %v572 = vsel %vm570, %v487, 0
    %vm574 = vcmask 1040384
    %v576 = vsel %vm574, %v568, 0
    %v579 = vsel %vm574, %v569, 0
    %v581 = vand.u32 %v518, 4294901760
    %582 = vmatpush.msra.mxu0 %v581
    %v583 = vand.u32 %v516, 4294901760
    %584 = vmatpush.msra.mxu0 %v583
    %v585 = vand.u32 %v514, 4294901760
    %586 = vmatpush.msra.mxu0 %v585
    %v587 = vand.u32 %v512, 4294901760
    %588 = vmatpush.msra.mxu0 %v587
    %v589 = vand.u32 %v510, 4294901760
    %590 = vmatpush.msra.mxu0 %v589
    %v591 = vand.u32 %v508, 4294901760
    %592 = vmatpush.msra.mxu0 %v591
    %v593 = vand.u32 %v506, 4294901760
    %594 = vmatpush.msra.mxu0 %v593
    %v595 = vand.u32 %v504, 4294901760
    %596 = vmatpush.msra.mxu0 %v595
    %v597 = vand.u32 %v502, 4294901760
    %598 = vmatpush.msra.mxu0 %v597
    %v599 = vand.u32 %v500, 4294901760
    %600 = vmatpush.msra.mxu0 %v599
    %v601 = vand.u32 %v498, 4294901760
    %602 = vmatpush.msra.mxu0 %v601
    %v603 = vand.u32 %v496, 4294901760
    %604 = vmatpush.msra.mxu0 %v603
    %v605 = vand.u32 %v494, 4294901760
    %606 = vmatpush.msra.mxu0 %v605
    %v607 = vand.u32 %v492, 4294901760
    %608 = vmatpush.msra.mxu0 %v607
    %v609 = vand.u32 %v490, 4294901760
    %610 = vmatpush.msra.mxu0 %v609
    %v611 = vand.u32 %v488, 4294901760
    %612 = vmatpush.msra.mxu0 %v611
    %v613 = vand.u32 %v485, 4294901760
    %v614 = vsub.f32 %v485, %v613
    %v615 = vand.u32 %v614, 4294901760
    %v616 = vsub.f32 %v614, %v615
    %v617 = vand.u32 %v616, 4294901760
    %618 = vmatmul.f32.gmra.mxu0 %v617
    %v619 = vpop.f32.mrf.mxu0
    %v620 = vadd.f32 0.0, %v619
    %621 = vdwg.mxu0
    %v622 = vand.u32 %v518, 4294901760
    %v623 = vsub.f32 %v518, %v622
    %v624 = vand.u32 %v623, 4294901760
    %v625 = vsub.f32 %v623, %v624
    %v626 = vand.u32 %v625, 4294901760
    %627 = vmatpush.msra.mxu0 %v626
    %v628 = vand.u32 %v516, 4294901760
    %v629 = vsub.f32 %v516, %v628
    %v630 = vand.u32 %v629, 4294901760
    %v631 = vsub.f32 %v629, %v630
    %v632 = vand.u32 %v631, 4294901760
    %633 = vmatpush.msra.mxu0 %v632
    %v634 = vand.u32 %v514, 4294901760
    %v635 = vsub.f32 %v514, %v634
    %v636 = vand.u32 %v635, 4294901760
    %v637 = vsub.f32 %v635, %v636
    %v638 = vand.u32 %v637, 4294901760
    %639 = vmatpush.msra.mxu0 %v638
    %v640 = vand.u32 %v512, 4294901760
    %v641 = vsub.f32 %v512, %v640
    %v642 = vand.u32 %v641, 4294901760
    %v643 = vsub.f32 %v641, %v642
    %v644 = vand.u32 %v643, 4294901760
    %645 = vmatpush.msra.mxu0 %v644
    %v646 = vand.u32 %v510, 4294901760
    %v647 = vsub.f32 %v510, %v646
    %v648 = vand.u32 %v647, 4294901760
    %v649 = vsub.f32 %v647, %v648
    %v650 = vand.u32 %v649, 4294901760
    %651 = vmatpush.msra.mxu0 %v650
    %v652 = vand.u32 %v508, 4294901760
    %v653 = vsub.f32 %v508, %v652
    %v654 = vand.u32 %v653, 4294901760
    %v655 = vsub.f32 %v653, %v654
    %v656 = vand.u32 %v655, 4294901760
    %657 = vmatpush.msra.mxu0 %v656
    %v658 = vand.u32 %v506, 4294901760
    %v659 = vsub.f32 %v506, %v658
    %v660 = vand.u32 %v659, 4294901760
    %v661 = vsub.f32 %v659, %v660
    %v662 = vand.u32 %v661, 4294901760
    %663 = vmatpush.msra.mxu0 %v662
    %v664 = vand.u32 %v504, 4294901760
    %v665 = vsub.f32 %v504, %v664
    %v666 = vand.u32 %v665, 4294901760
    %v667 = vsub.f32 %v665, %v666
    %v668 = vand.u32 %v667, 4294901760
    %669 = vmatpush.msra.mxu0 %v668
    %v670 = vand.u32 %v502, 4294901760
    %v671 = vsub.f32 %v502, %v670
    %v672 = vand.u32 %v671, 4294901760
    %v673 = vsub.f32 %v671, %v672
    %v674 = vand.u32 %v673, 4294901760
    %675 = vmatpush.msra.mxu0 %v674
    %v676 = vand.u32 %v500, 4294901760
    %v677 = vsub.f32 %v500, %v676
    %v678 = vand.u32 %v677, 4294901760
    %v679 = vsub.f32 %v677, %v678
    %v680 = vand.u32 %v679, 4294901760
    %681 = vmatpush.msra.mxu0 %v680
    %v682 = vand.u32 %v498, 4294901760
    %v683 = vsub.f32 %v498, %v682
    %v684 = vand.u32 %v683, 4294901760
    %v685 = vsub.f32 %v683, %v684
    %v686 = vand.u32 %v685, 4294901760
    %687 = vmatpush.msra.mxu0 %v686
    %v688 = vand.u32 %v496, 4294901760
    %v689 = vsub.f32 %v496, %v688
    %v690 = vand.u32 %v689, 4294901760
    %v691 = vsub.f32 %v689, %v690
    %v692 = vand.u32 %v691, 4294901760
    %693 = vmatpush.msra.mxu0 %v692
    %v694 = vand.u32 %v494, 4294901760
    %v695 = vsub.f32 %v494, %v694
    %v696 = vand.u32 %v695, 4294901760
    %v697 = vsub.f32 %v695, %v696
    %v698 = vand.u32 %v697, 4294901760
    %699 = vmatpush.msra.mxu0 %v698
    %v700 = vand.u32 %v492, 4294901760
    %v701 = vsub.f32 %v492, %v700
    %v702 = vand.u32 %v701, 4294901760
    %v703 = vsub.f32 %v701, %v702
    %v704 = vand.u32 %v703, 4294901760
    %705 = vmatpush.msra.mxu0 %v704
    %v706 = vand.u32 %v490, 4294901760
    %v707 = vsub.f32 %v490, %v706
    %v708 = vand.u32 %v707, 4294901760
    %v709 = vsub.f32 %v707, %v708
    %v710 = vand.u32 %v709, 4294901760
    %711 = vmatpush.msra.mxu0 %v710
    %v712 = vand.u32 %v488, 4294901760
    %v713 = vsub.f32 %v488, %v712
    %v714 = vand.u32 %v713, 4294901760
    %v715 = vsub.f32 %v713, %v714
    %v716 = vand.u32 %v715, 4294901760
    %717 = vmatpush.msra.mxu0 %v716
    %v718 = vand.u32 %v485, 4294901760
    %719 = vmatmul.f32.gmra.mxu0 %v718
    %v720 = vpop.f32.mrf.mxu0
    %v721 = vadd.f32 %v620, %v720
    %722 = vdwg.mxu0
    %v723 = vand.u32 %v518, 4294901760
    %v724 = vsub.f32 %v518, %v723
    %725 = vmatpush.msra.mxu0 %v724
    %v726 = vand.u32 %v516, 4294901760
    %v727 = vsub.f32 %v516, %v726
    %728 = vmatpush.msra.mxu0 %v727
    %v729 = vand.u32 %v514, 4294901760
    %v730 = vsub.f32 %v514, %v729
    %731 = vmatpush.msra.mxu0 %v730
    %v732 = vand.u32 %v512, 4294901760
    %v733 = vsub.f32 %v512, %v732
    %734 = vmatpush.msra.mxu0 %v733
    %v735 = vand.u32 %v510, 4294901760
    %v736 = vsub.f32 %v510, %v735
    %737 = vmatpush.msra.mxu0 %v736
    %v738 = vand.u32 %v508, 4294901760
    %v739 = vsub.f32 %v508, %v738
    %740 = vmatpush.msra.mxu0 %v739
    %v741 = vand.u32 %v506, 4294901760
    %v742 = vsub.f32 %v506, %v741
    %743 = vmatpush.msra.mxu0 %v742
    %v744 = vand.u32 %v504, 4294901760
    %v745 = vsub.f32 %v504, %v744
    %746 = vmatpush.msra.mxu0 %v745
    %v747 = vand.u32 %v502, 4294901760
    %v748 = vsub.f32 %v502, %v747
    %749 = vmatpush.msra.mxu0 %v748
    %v750 = vand.u32 %v500, 4294901760
    %v751 = vsub.f32 %v500, %v750
    %752 = vmatpush.msra.mxu0 %v751
    %v753 = vand.u32 %v498, 4294901760
    %v754 = vsub.f32 %v498, %v753
    %755 = vmatpush.msra.mxu0 %v754
    %v756 = vand.u32 %v496, 4294901760
    %v757 = vsub.f32 %v496, %v756
    %758 = vmatpush.msra.mxu0 %v757
    %v759 = vand.u32 %v494, 4294901760
    %v760 = vsub.f32 %v494, %v759
    %761 = vmatpush.msra.mxu0 %v760
    %v762 = vand.u32 %v492, 4294901760
    %v763 = vsub.f32 %v492, %v762
    %764 = vmatpush.msra.mxu0 %v763
    %v765 = vand.u32 %v490, 4294901760
    %v766 = vsub.f32 %v490, %v765
    %767 = vmatpush.msra.mxu0 %v766
    %v768 = vand.u32 %v488, 4294901760
    %v769 = vsub.f32 %v488, %v768
    %770 = vmatpush.msra.mxu0 %v769
    %v771 = vand.u32 %v485, 4294901760
    %v772 = vsub.f32 %v485, %v771
    %773 = vmatmul.f32.gmra.mxu0 %v772
    %v774 = vpop.f32.mrf.mxu0
    %v775 = vadd.f32 %v721, %v774
    %776 = vdwg.mxu0
    %v777 = vand.u32 %v518, 4294901760
    %778 = vmatpush.msra.mxu0 %v777
    %v779 = vand.u32 %v516, 4294901760
    %780 = vmatpush.msra.mxu0 %v779
    %v781 = vand.u32 %v514, 4294901760
    %782 = vmatpush.msra.mxu0 %v781
    %v783 = vand.u32 %v512, 4294901760
    %784 = vmatpush.msra.mxu0 %v783
    %v785 = vand.u32 %v510, 4294901760
    %786 = vmatpush.msra.mxu0 %v785
    %v787 = vand.u32 %v508, 4294901760
    %788 = vmatpush.msra.mxu0 %v787
    %v789 = vand.u32 %v506, 4294901760
    %790 = vmatpush.msra.mxu0 %v789
    %v791 = vand.u32 %v504, 4294901760
    %792 = vmatpush.msra.mxu0 %v791
    %v793 = vand.u32 %v502, 4294901760
    %794 = vmatpush.msra.mxu0 %v793
    %v795 = vand.u32 %v500, 4294901760
    %796 = vmatpush.msra.mxu0 %v795
    %v797 = vand.u32 %v498, 4294901760
    %798 = vmatpush.msra.mxu0 %v797
    %v799 = vand.u32 %v496, 4294901760
    %800 = vmatpush.msra.mxu0 %v799
    %v801 = vand.u32 %v494, 4294901760
    %802 = vmatpush.msra.mxu0 %v801
    %v803 = vand.u32 %v492, 4294901760
    %804 = vmatpush.msra.mxu0 %v803
    %v805 = vand.u32 %v490, 4294901760
    %806 = vmatpush.msra.mxu0 %v805
    %v807 = vand.u32 %v488, 4294901760
    %808 = vmatpush.msra.mxu0 %v807
    %v809 = vand.u32 %v485, 4294901760
    %v810 = vsub.f32 %v485, %v809
    %v811 = vand.u32 %v810, 4294901760
    %812 = vmatmul.f32.gmra.mxu0 %v811
    %v813 = vpop.f32.mrf.mxu0
    %v814 = vadd.f32 %v775, %v813
    %815 = vdwg.mxu0
    %v816 = vand.u32 %v518, 4294901760
    %v817 = vsub.f32 %v518, %v816
    %v818 = vand.u32 %v817, 4294901760
    %819 = vmatpush.msra.mxu0 %v818
    %v820 = vand.u32 %v516, 4294901760
    %v821 = vsub.f32 %v516, %v820
    %v822 = vand.u32 %v821, 4294901760
    %823 = vmatpush.msra.mxu0 %v822
    %v824 = vand.u32 %v514, 4294901760
    %v825 = vsub.f32 %v514, %v824
    %v826 = vand.u32 %v825, 4294901760
    %827 = vmatpush.msra.mxu0 %v826
    %v828 = vand.u32 %v512, 4294901760
    %v829 = vsub.f32 %v512, %v828
    %v830 = vand.u32 %v829, 4294901760
    %831 = vmatpush.msra.mxu0 %v830
    %v832 = vand.u32 %v510, 4294901760
    %v833 = vsub.f32 %v510, %v832
    %v834 = vand.u32 %v833, 4294901760
    %835 = vmatpush.msra.mxu0 %v834
    %v836 = vand.u32 %v508, 4294901760
    %v837 = vsub.f32 %v508, %v836
    %v838 = vand.u32 %v837, 4294901760
    %839 = vmatpush.msra.mxu0 %v838
    %v840 = vand.u32 %v506, 4294901760
    %v841 = vsub.f32 %v506, %v840
    %v842 = vand.u32 %v841, 4294901760
    %843 = vmatpush.msra.mxu0 %v842
    %v844 = vand.u32 %v504, 4294901760
    %v845 = vsub.f32 %v504, %v844
    %v846 = vand.u32 %v845, 4294901760
    %847 = vmatpush.msra.mxu0 %v846
    %v848 = vand.u32 %v502, 4294901760
    %v849 = vsub.f32 %v502, %v848
    %v850 = vand.u32 %v849, 4294901760
    %851 = vmatpush.msra.mxu0 %v850
    %v852 = vand.u32 %v500, 4294901760
    %v853 = vsub.f32 %v500, %v852
    %v854 = vand.u32 %v853, 4294901760
    %855 = vmatpush.msra.mxu0 %v854
    %v856 = vand.u32 %v498, 4294901760
    %v857 = vsub.f32 %v498, %v856
    %v858 = vand.u32 %v857, 4294901760
    %859 = vmatpush.msra.mxu0 %v858
    %v860 = vand.u32 %v496, 4294901760
    %v861 = vsub.f32 %v496, %v860
    %v862 = vand.u32 %v861, 4294901760
    %863 = vmatpush.msra.mxu0 %v862
    %v864 = vand.u32 %v494, 4294901760
    %v865 = vsub.f32 %v494, %v864
    %v866 = vand.u32 %v865, 4294901760
    %867 = vmatpush.msra.mxu0 %v866
    %v868 = vand.u32 %v492, 4294901760
    %v869 = vsub.f32 %v492, %v868
    %v870 = vand.u32 %v869, 4294901760
    %871 = vmatpush.msra.mxu0 %v870
    %v872 = vand.u32 %v490, 4294901760
    %v873 = vsub.f32 %v490, %v872
    %v874 = vand.u32 %v873, 4294901760
    %875 = vmatpush.msra.mxu0 %v874
    %v876 = vand.u32 %v488, 4294901760
    %v877 = vsub.f32 %v488, %v876
    %v878 = vand.u32 %v877, 4294901760
    %879 = vmatpush.msra.mxu0 %v878
    %v880 = vand.u32 %v485, 4294901760
    %881 = vmatmul.f32.gmra.mxu0 %v880
    %v882 = vpop.f32.mrf.mxu0
    %v883 = vadd.f32 %v814, %v882
    %884 = vdwg.mxu0
    %v885 = vand.u32 %v518, 4294901760
    %886 = vmatpush.msra.mxu0 %v885
    %v887 = vand.u32 %v516, 4294901760
    %888 = vmatpush.msra.mxu0 %v887
    %v889 = vand.u32 %v514, 4294901760
    %890 = vmatpush.msra.mxu0 %v889
    %v891 = vand.u32 %v512, 4294901760
    %892 = vmatpush.msra.mxu0 %v891
    %v893 = vand.u32 %v510, 4294901760
    %894 = vmatpush.msra.mxu0 %v893
    %v895 = vand.u32 %v508, 4294901760
    %896 = vmatpush.msra.mxu0 %v895
    %v897 = vand.u32 %v506, 4294901760
    %898 = vmatpush.msra.mxu0 %v897
    %v899 = vand.u32 %v504, 4294901760
    %900 = vmatpush.msra.mxu0 %v899
    %v901 = vand.u32 %v502, 4294901760
    %902 = vmatpush.msra.mxu0 %v901
    %v903 = vand.u32 %v500, 4294901760
    %904 = vmatpush.msra.mxu0 %v903
    %v905 = vand.u32 %v498, 4294901760
    %906 = vmatpush.msra.mxu0 %v905
    %v907 = vand.u32 %v496, 4294901760
    %908 = vmatpush.msra.mxu0 %v907
    %v909 = vand.u32 %v494, 4294901760
    %910 = vmatpush.msra.mxu0 %v909
    %v911 = vand.u32 %v492, 4294901760
    %912 = vmatpush.msra.mxu0 %v911
    %v913 = vand.u32 %v490, 4294901760
    %914 = vmatpush.msra.mxu0 %v913
    %v915 = vand.u32 %v488, 4294901760
    %916 = vmatpush.msra.mxu0 %v915
    %v917 = vand.u32 %v485, 4294901760
    %918 = vmatmul.f32.gmra.mxu0 %v917
    %v919 = vpop.f32.mrf.mxu0
    %v920 = vadd.f32 %v883, %v919
    %921 = vdwg.mxu0
    %v922 = vand.u32 %v550, 4294901760
    %923 = vmatpush.msra.mxu0 %v922
    %v924 = vand.u32 %v548, 4294901760
    %925 = vmatpush.msra.mxu0 %v924
    %v926 = vand.u32 %v546, 4294901760
    %927 = vmatpush.msra.mxu0 %v926
    %v928 = vand.u32 %v544, 4294901760
    %929 = vmatpush.msra.mxu0 %v928
    %v930 = vand.u32 %v542, 4294901760
    %931 = vmatpush.msra.mxu0 %v930
    %v932 = vand.u32 %v540, 4294901760
    %933 = vmatpush.msra.mxu0 %v932
    %v934 = vand.u32 %v538, 4294901760
    %935 = vmatpush.msra.mxu0 %v934
    %v936 = vand.u32 %v536, 4294901760
    %937 = vmatpush.msra.mxu0 %v936
    %v938 = vand.u32 %v534, 4294901760
    %939 = vmatpush.msra.mxu0 %v938
    %v940 = vand.u32 %v532, 4294901760
    %941 = vmatpush.msra.mxu0 %v940
    %v942 = vand.u32 %v530, 4294901760
    %943 = vmatpush.msra.mxu0 %v942
    %v944 = vand.u32 %v528, 4294901760
    %945 = vmatpush.msra.mxu0 %v944
    %v946 = vand.u32 %v526, 4294901760
    %947 = vmatpush.msra.mxu0 %v946
    %v948 = vand.u32 %v524, 4294901760
    %949 = vmatpush.msra.mxu0 %v948
    %v950 = vand.u32 %v522, 4294901760
    %951 = vmatpush.msra.mxu0 %v950
    %v952 = vand.u32 %v520, 4294901760
    %953 = vmatpush.msra.mxu0 %v952
    %v954 = vand.u32 %v486, 4294901760
    %v955 = vsub.f32 %v486, %v954
    %v956 = vand.u32 %v955, 4294901760
    %v957 = vsub.f32 %v955, %v956
    %v958 = vand.u32 %v957, 4294901760
    %959 = vmatmul.f32.gmra.mxu0 %v958
    %v960 = vpop.f32.mrf.mxu0
    %v961 = vadd.f32 %v920, %v960
    %962 = vdwg.mxu0
    %v963 = vand.u32 %v550, 4294901760
    %v964 = vsub.f32 %v550, %v963
    %v965 = vand.u32 %v964, 4294901760
    %v966 = vsub.f32 %v964, %v965
    %v967 = vand.u32 %v966, 4294901760
    %968 = vmatpush.msra.mxu0 %v967
    %v969 = vand.u32 %v548, 4294901760
    %v970 = vsub.f32 %v548, %v969
    %v971 = vand.u32 %v970, 4294901760
    %v972 = vsub.f32 %v970, %v971
    %v973 = vand.u32 %v972, 4294901760
    %974 = vmatpush.msra.mxu0 %v973
    %v975 = vand.u32 %v546, 4294901760
    %v976 = vsub.f32 %v546, %v975
    %v977 = vand.u32 %v976, 4294901760
    %v978 = vsub.f32 %v976, %v977
    %v979 = vand.u32 %v978, 4294901760
    %980 = vmatpush.msra.mxu0 %v979
    %v981 = vand.u32 %v544, 4294901760
    %v982 = vsub.f32 %v544, %v981
    %v983 = vand.u32 %v982, 4294901760
    %v984 = vsub.f32 %v982, %v983
    %v985 = vand.u32 %v984, 4294901760
    %986 = vmatpush.msra.mxu0 %v985
    %v987 = vand.u32 %v542, 4294901760
    %v988 = vsub.f32 %v542, %v987
    %v989 = vand.u32 %v988, 4294901760
    %v990 = vsub.f32 %v988, %v989
    %v991 = vand.u32 %v990, 4294901760
    %992 = vmatpush.msra.mxu0 %v991
    %v993 = vand.u32 %v540, 4294901760
    %v994 = vsub.f32 %v540, %v993
    %v995 = vand.u32 %v994, 4294901760
    %v996 = vsub.f32 %v994, %v995
    %v997 = vand.u32 %v996, 4294901760
    %998 = vmatpush.msra.mxu0 %v997
    %v999 = vand.u32 %v538, 4294901760
    %v1000 = vsub.f32 %v538, %v999
    %v1001 = vand.u32 %v1000, 4294901760
    %v1002 = vsub.f32 %v1000, %v1001
    %v1003 = vand.u32 %v1002, 4294901760
    %1004 = vmatpush.msra.mxu0 %v1003
    %v1005 = vand.u32 %v536, 4294901760
    %v1006 = vsub.f32 %v536, %v1005
    %v1007 = vand.u32 %v1006, 4294901760
    %v1008 = vsub.f32 %v1006, %v1007
    %v1009 = vand.u32 %v1008, 4294901760
    %1010 = vmatpush.msra.mxu0 %v1009
    %v1011 = vand.u32 %v534, 4294901760
    %v1012 = vsub.f32 %v534, %v1011
    %v1013 = vand.u32 %v1012, 4294901760
    %v1014 = vsub.f32 %v1012, %v1013
    %v1015 = vand.u32 %v1014, 4294901760
    %1016 = vmatpush.msra.mxu0 %v1015
    %v1017 = vand.u32 %v532, 4294901760
    %v1018 = vsub.f32 %v532, %v1017
    %v1019 = vand.u32 %v1018, 4294901760
    %v1020 = vsub.f32 %v1018, %v1019
    %v1021 = vand.u32 %v1020, 4294901760
    %1022 = vmatpush.msra.mxu0 %v1021
    %v1023 = vand.u32 %v530, 4294901760
    %v1024 = vsub.f32 %v530, %v1023
    %v1025 = vand.u32 %v1024, 4294901760
    %v1026 = vsub.f32 %v1024, %v1025
    %v1027 = vand.u32 %v1026, 4294901760
    %1028 = vmatpush.msra.mxu0 %v1027
    %v1029 = vand.u32 %v528, 4294901760
    %v1030 = vsub.f32 %v528, %v1029
    %v1031 = vand.u32 %v1030, 4294901760
    %v1032 = vsub.f32 %v1030, %v1031
    %v1033 = vand.u32 %v1032, 4294901760
    %1034 = vmatpush.msra.mxu0 %v1033
    %v1035 = vand.u32 %v526, 4294901760
    %v1036 = vsub.f32 %v526, %v1035
    %v1037 = vand.u32 %v1036, 4294901760
    %v1038 = vsub.f32 %v1036, %v1037
    %v1039 = vand.u32 %v1038, 4294901760
    %1040 = vmatpush.msra.mxu0 %v1039
    %v1041 = vand.u32 %v524, 4294901760
    %v1042 = vsub.f32 %v524, %v1041
    %v1043 = vand.u32 %v1042, 4294901760
    %v1044 = vsub.f32 %v1042, %v1043
    %v1045 = vand.u32 %v1044, 4294901760
    %1046 = vmatpush.msra.mxu0 %v1045
    %v1047 = vand.u32 %v522, 4294901760
    %v1048 = vsub.f32 %v522, %v1047
    %v1049 = vand.u32 %v1048, 4294901760
    %v1050 = vsub.f32 %v1048, %v1049
    %v1051 = vand.u32 %v1050, 4294901760
    %1052 = vmatpush.msra.mxu0 %v1051
    %v1053 = vand.u32 %v520, 4294901760
    %v1054 = vsub.f32 %v520, %v1053
    %v1055 = vand.u32 %v1054, 4294901760
    %v1056 = vsub.f32 %v1054, %v1055
    %v1057 = vand.u32 %v1056, 4294901760
    %1058 = vmatpush.msra.mxu0 %v1057
    %v1059 = vand.u32 %v486, 4294901760
    %1060 = vmatmul.f32.gmra.mxu0 %v1059
    %v1061 = vpop.f32.mrf.mxu0
    %v1062 = vadd.f32 %v961, %v1061
    %1063 = vdwg.mxu0
    %v1064 = vand.u32 %v550, 4294901760
    %v1065 = vsub.f32 %v550, %v1064
    %1066 = vmatpush.msra.mxu0 %v1065
    %v1067 = vand.u32 %v548, 4294901760
    %v1068 = vsub.f32 %v548, %v1067
    %1069 = vmatpush.msra.mxu0 %v1068
    %v1070 = vand.u32 %v546, 4294901760
    %v1071 = vsub.f32 %v546, %v1070
    %1072 = vmatpush.msra.mxu0 %v1071
    %v1073 = vand.u32 %v544, 4294901760
    %v1074 = vsub.f32 %v544, %v1073
    %1075 = vmatpush.msra.mxu0 %v1074
    %v1076 = vand.u32 %v542, 4294901760
    %v1077 = vsub.f32 %v542, %v1076
    %1078 = vmatpush.msra.mxu0 %v1077
    %v1079 = vand.u32 %v540, 4294901760
    %v1080 = vsub.f32 %v540, %v1079
    %1081 = vmatpush.msra.mxu0 %v1080
    %v1082 = vand.u32 %v538, 4294901760
    %v1083 = vsub.f32 %v538, %v1082
    %1084 = vmatpush.msra.mxu0 %v1083
    %v1085 = vand.u32 %v536, 4294901760
    %v1086 = vsub.f32 %v536, %v1085
    %1087 = vmatpush.msra.mxu0 %v1086
    %v1088 = vand.u32 %v534, 4294901760
    %v1089 = vsub.f32 %v534, %v1088
    %1090 = vmatpush.msra.mxu0 %v1089
    %v1091 = vand.u32 %v532, 4294901760
    %v1092 = vsub.f32 %v532, %v1091
    %1093 = vmatpush.msra.mxu0 %v1092
    %v1094 = vand.u32 %v530, 4294901760
    %v1095 = vsub.f32 %v530, %v1094
    %1096 = vmatpush.msra.mxu0 %v1095
    %v1097 = vand.u32 %v528, 4294901760
    %v1098 = vsub.f32 %v528, %v1097
    %1099 = vmatpush.msra.mxu0 %v1098
    %v1100 = vand.u32 %v526, 4294901760
    %v1101 = vsub.f32 %v526, %v1100
    %1102 = vmatpush.msra.mxu0 %v1101
    %v1103 = vand.u32 %v524, 4294901760
    %v1104 = vsub.f32 %v524, %v1103
    %1105 = vmatpush.msra.mxu0 %v1104
    %v1106 = vand.u32 %v522, 4294901760
    %v1107 = vsub.f32 %v522, %v1106
    %1108 = vmatpush.msra.mxu0 %v1107
    %v1109 = vand.u32 %v520, 4294901760
    %v1110 = vsub.f32 %v520, %v1109
    %1111 = vmatpush.msra.mxu0 %v1110
    %v1112 = vand.u32 %v486, 4294901760
    %v1113 = vsub.f32 %v486, %v1112
    %1114 = vmatmul.f32.gmra.mxu0 %v1113
    %v1115 = vpop.f32.mrf.mxu0
    %v1116 = vadd.f32 %v1062, %v1115
    %1117 = vdwg.mxu0
    %v1118 = vand.u32 %v550, 4294901760
    %1119 = vmatpush.msra.mxu0 %v1118
    %v1120 = vand.u32 %v548, 4294901760
    %1121 = vmatpush.msra.mxu0 %v1120
    %v1122 = vand.u32 %v546, 4294901760
    %1123 = vmatpush.msra.mxu0 %v1122
    %v1124 = vand.u32 %v544, 4294901760
    %1125 = vmatpush.msra.mxu0 %v1124
    %v1126 = vand.u32 %v542, 4294901760
    %1127 = vmatpush.msra.mxu0 %v1126
    %v1128 = vand.u32 %v540, 4294901760
    %1129 = vmatpush.msra.mxu0 %v1128
    %v1130 = vand.u32 %v538, 4294901760
    %1131 = vmatpush.msra.mxu0 %v1130
    %v1132 = vand.u32 %v536, 4294901760
    %1133 = vmatpush.msra.mxu0 %v1132
    %v1134 = vand.u32 %v534, 4294901760
    %1135 = vmatpush.msra.mxu0 %v1134
    %v1136 = vand.u32 %v532, 4294901760
    %1137 = vmatpush.msra.mxu0 %v1136
    %v1138 = vand.u32 %v530, 4294901760
    %1139 = vmatpush.msra.mxu0 %v1138
    %v1140 = vand.u32 %v528, 4294901760
    %1141 = vmatpush.msra.mxu0 %v1140
    %v1142 = vand.u32 %v526, 4294901760
    %1143 = vmatpush.msra.mxu0 %v1142
    %v1144 = vand.u32 %v524, 4294901760
    %1145 = vmatpush.msra.mxu0 %v1144
    %v1146 = vand.u32 %v522, 4294901760
    %1147 = vmatpush.msra.mxu0 %v1146
    %v1148 = vand.u32 %v520, 4294901760
    %1149 = vmatpush.msra.mxu0 %v1148
    %v1150 = vand.u32 %v486, 4294901760
    %v1151 = vsub.f32 %v486, %v1150
    %v1152 = vand.u32 %v1151, 4294901760
    %1153 = vmatmul.f32.gmra.mxu0 %v1152
    %v1154 = vpop.f32.mrf.mxu0
    %v1155 = vadd.f32 %v1116, %v1154
    %1156 = vdwg.mxu0
    %v1157 = vand.u32 %v550, 4294901760
    %v1158 = vsub.f32 %v550, %v1157
    %v1159 = vand.u32 %v1158, 4294901760
    %1160 = vmatpush.msra.mxu0 %v1159
    %v1161 = vand.u32 %v548, 4294901760
    %v1162 = vsub.f32 %v548, %v1161
    %v1163 = vand.u32 %v1162, 4294901760
    %1164 = vmatpush.msra.mxu0 %v1163
    %v1165 = vand.u32 %v546, 4294901760
    %v1166 = vsub.f32 %v546, %v1165
    %v1167 = vand.u32 %v1166, 4294901760
    %1168 = vmatpush.msra.mxu0 %v1167
    %v1169 = vand.u32 %v544, 4294901760
    %v1170 = vsub.f32 %v544, %v1169
    %v1171 = vand.u32 %v1170, 4294901760
    %1172 = vmatpush.msra.mxu0 %v1171
    %v1173 = vand.u32 %v542, 4294901760
    %v1174 = vsub.f32 %v542, %v1173
    %v1175 = vand.u32 %v1174, 4294901760
    %1176 = vmatpush.msra.mxu0 %v1175
    %v1177 = vand.u32 %v540, 4294901760
    %v1178 = vsub.f32 %v540, %v1177
    %v1179 = vand.u32 %v1178, 4294901760
    %1180 = vmatpush.msra.mxu0 %v1179
    %v1181 = vand.u32 %v538, 4294901760
    %v1182 = vsub.f32 %v538, %v1181
    %v1183 = vand.u32 %v1182, 4294901760
    %1184 = vmatpush.msra.mxu0 %v1183
    %v1185 = vand.u32 %v536, 4294901760
    %v1186 = vsub.f32 %v536, %v1185
    %v1187 = vand.u32 %v1186, 4294901760
    %1188 = vmatpush.msra.mxu0 %v1187
    %v1189 = vand.u32 %v534, 4294901760
    %v1190 = vsub.f32 %v534, %v1189
    %v1191 = vand.u32 %v1190, 4294901760
    %1192 = vmatpush.msra.mxu0 %v1191
    %v1193 = vand.u32 %v532, 4294901760
    %v1194 = vsub.f32 %v532, %v1193
    %v1195 = vand.u32 %v1194, 4294901760
    %1196 = vmatpush.msra.mxu0 %v1195
    %v1197 = vand.u32 %v530, 4294901760
    %v1198 = vsub.f32 %v530, %v1197
    %v1199 = vand.u32 %v1198, 4294901760
    %1200 = vmatpush.msra.mxu0 %v1199
    %v1201 = vand.u32 %v528, 4294901760
    %v1202 = vsub.f32 %v528, %v1201
    %v1203 = vand.u32 %v1202, 4294901760
    %1204 = vmatpush.msra.mxu0 %v1203
    %v1205 = vand.u32 %v526, 4294901760
    %v1206 = vsub.f32 %v526, %v1205
    %v1207 = vand.u32 %v1206, 4294901760
    %1208 = vmatpush.msra.mxu0 %v1207
    %v1209 = vand.u32 %v524, 4294901760
    %v1210 = vsub.f32 %v524, %v1209
    %v1211 = vand.u32 %v1210, 4294901760
    %1212 = vmatpush.msra.mxu0 %v1211
    %v1213 = vand.u32 %v522, 4294901760
    %v1214 = vsub.f32 %v522, %v1213
    %v1215 = vand.u32 %v1214, 4294901760
    %1216 = vmatpush.msra.mxu0 %v1215
    %v1217 = vand.u32 %v520, 4294901760
    %v1218 = vsub.f32 %v520, %v1217
    %v1219 = vand.u32 %v1218, 4294901760
    %1220 = vmatpush.msra.mxu0 %v1219
    %v1221 = vand.u32 %v486, 4294901760
    %1222 = vmatmul.f32.gmra.mxu0 %v1221
    %v1223 = vpop.f32.mrf.mxu0
    %v1224 = vadd.f32 %v1155, %v1223
    %1225 = vdwg.mxu0
    %v1226 = vand.u32 %v550, 4294901760
    %1227 = vmatpush.msra.mxu0 %v1226
    %v1228 = vand.u32 %v548, 4294901760
    %1229 = vmatpush.msra.mxu0 %v1228
    %v1230 = vand.u32 %v546, 4294901760
    %1231 = vmatpush.msra.mxu0 %v1230
    %v1232 = vand.u32 %v544, 4294901760
    %1233 = vmatpush.msra.mxu0 %v1232
    %v1234 = vand.u32 %v542, 4294901760
    %1235 = vmatpush.msra.mxu0 %v1234
    %v1236 = vand.u32 %v540, 4294901760
    %1237 = vmatpush.msra.mxu0 %v1236
    %v1238 = vand.u32 %v538, 4294901760
    %1239 = vmatpush.msra.mxu0 %v1238
    %v1240 = vand.u32 %v536, 4294901760
    %1241 = vmatpush.msra.mxu0 %v1240
    %v1242 = vand.u32 %v534, 4294901760
    %1243 = vmatpush.msra.mxu0 %v1242
    %v1244 = vand.u32 %v532, 4294901760
    %1245 = vmatpush.msra.mxu0 %v1244
    %v1246 = vand.u32 %v530, 4294901760
    %1247 = vmatpush.msra.mxu0 %v1246
    %v1248 = vand.u32 %v528, 4294901760
    %1249 = vmatpush.msra.mxu0 %v1248
    %v1250 = vand.u32 %v526, 4294901760
    %1251 = vmatpush.msra.mxu0 %v1250
    %v1252 = vand.u32 %v524, 4294901760
    %1253 = vmatpush.msra.mxu0 %v1252
    %v1254 = vand.u32 %v522, 4294901760
    %1255 = vmatpush.msra.mxu0 %v1254
    %v1256 = vand.u32 %v520, 4294901760
    %1257 = vmatpush.msra.mxu0 %v1256
    %v1258 = vand.u32 %v486, 4294901760
    %1259 = vmatmul.f32.gmra.mxu0 %v1258
    %v1260 = vpop.f32.mrf.mxu0
    %v1261 = vadd.f32 %v1224, %v1260
    %1262 = vdwg.mxu0
    %1263 = vmatpush.msra.mxu0 0.0
    %1264 = vmatpush.msra.mxu0 0.0
    %1265 = vmatpush.msra.mxu0 0.0
    %1266 = vmatpush.msra.mxu0 0.0
    %1267 = vmatpush.msra.mxu0 0.0
    %1268 = vmatpush.msra.mxu0 0.0
    %1269 = vmatpush.msra.mxu0 0.0
    %v1270 = vand.u32 %v576, 4294901760
    %1271 = vmatpush.msra.mxu0 %v1270
    %v1272 = vand.u32 %v566, 4294901760
    %1273 = vmatpush.msra.mxu0 %v1272
    %v1274 = vand.u32 %v564, 4294901760
    %1275 = vmatpush.msra.mxu0 %v1274
    %v1276 = vand.u32 %v562, 4294901760
    %1277 = vmatpush.msra.mxu0 %v1276
    %v1278 = vand.u32 %v560, 4294901760
    %1279 = vmatpush.msra.mxu0 %v1278
    %v1280 = vand.u32 %v558, 4294901760
    %1281 = vmatpush.msra.mxu0 %v1280
    %v1282 = vand.u32 %v556, 4294901760
    %1283 = vmatpush.msra.mxu0 %v1282
    %v1284 = vand.u32 %v554, 4294901760
    %1285 = vmatpush.msra.mxu0 %v1284
    %v1286 = vand.u32 %v552, 4294901760
    %1287 = vmatpush.msra.mxu0 %v1286
    %v1288 = vand.u32 %v572, 4294901760
    %v1289 = vsub.f32 %v572, %v1288
    %v1290 = vand.u32 %v1289, 4294901760
    %v1291 = vsub.f32 %v1289, %v1290
    %v1292 = vand.u32 %v1291, 4294901760
    %1293 = vmatmul.f32.gmra.mxu0 %v1292
    %v1294 = vpop.f32.mrf.mxu0
    %v1295 = vadd.f32 %v1261, %v1294
    %1296 = vdwg.mxu0
    %1297 = vmatpush.msra.mxu0 0.0
    %1298 = vmatpush.msra.mxu0 0.0
    %1299 = vmatpush.msra.mxu0 0.0
    %1300 = vmatpush.msra.mxu0 0.0
    %1301 = vmatpush.msra.mxu0 0.0
    %1302 = vmatpush.msra.mxu0 0.0
    %1303 = vmatpush.msra.mxu0 0.0
    %v1304 = vand.u32 %v576, 4294901760
    %v1305 = vsub.f32 %v576, %v1304
    %v1306 = vand.u32 %v1305, 4294901760
    %v1307 = vsub.f32 %v1305, %v1306
    %v1308 = vand.u32 %v1307, 4294901760
    %1309 = vmatpush.msra.mxu0 %v1308
    %v1310 = vand.u32 %v566, 4294901760
    %v1311 = vsub.f32 %v566, %v1310
    %v1312 = vand.u32 %v1311, 4294901760
    %v1313 = vsub.f32 %v1311, %v1312
    %v1314 = vand.u32 %v1313, 4294901760
    %1315 = vmatpush.msra.mxu0 %v1314
    %v1316 = vand.u32 %v564, 4294901760
    %v1317 = vsub.f32 %v564, %v1316
    %v1318 = vand.u32 %v1317, 4294901760
    %v1319 = vsub.f32 %v1317, %v1318
    %v1320 = vand.u32 %v1319, 4294901760
    %1321 = vmatpush.msra.mxu0 %v1320
    %v1322 = vand.u32 %v562, 4294901760
    %v1323 = vsub.f32 %v562, %v1322
    %v1324 = vand.u32 %v1323, 4294901760
    %v1325 = vsub.f32 %v1323, %v1324
    %v1326 = vand.u32 %v1325, 4294901760
    %1327 = vmatpush.msra.mxu0 %v1326
    %v1328 = vand.u32 %v560, 4294901760
    %v1329 = vsub.f32 %v560, %v1328
    %v1330 = vand.u32 %v1329, 4294901760
    %v1331 = vsub.f32 %v1329, %v1330
    %v1332 = vand.u32 %v1331, 4294901760
    %1333 = vmatpush.msra.mxu0 %v1332
    %v1334 = vand.u32 %v558, 4294901760
    %v1335 = vsub.f32 %v558, %v1334
    %v1336 = vand.u32 %v1335, 4294901760
    %v1337 = vsub.f32 %v1335, %v1336
    %v1338 = vand.u32 %v1337, 4294901760
    %1339 = vmatpush.msra.mxu0 %v1338
    %v1340 = vand.u32 %v556, 4294901760
    %v1341 = vsub.f32 %v556, %v1340
    %v1342 = vand.u32 %v1341, 4294901760
    %v1343 = vsub.f32 %v1341, %v1342
    %v1344 = vand.u32 %v1343, 4294901760
    %1345 = vmatpush.msra.mxu0 %v1344
    %v1346 = vand.u32 %v554, 4294901760
    %v1347 = vsub.f32 %v554, %v1346
    %v1348 = vand.u32 %v1347, 4294901760
    %v1349 = vsub.f32 %v1347, %v1348
    %v1350 = vand.u32 %v1349, 4294901760
    %1351 = vmatpush.msra.mxu0 %v1350
    %v1352 = vand.u32 %v552, 4294901760
    %v1353 = vsub.f32 %v552, %v1352
    %v1354 = vand.u32 %v1353, 4294901760
    %v1355 = vsub.f32 %v1353, %v1354
    %v1356 = vand.u32 %v1355, 4294901760
    %1357 = vmatpush.msra.mxu0 %v1356
    %v1358 = vand.u32 %v572, 4294901760
    %1359 = vmatmul.f32.gmra.mxu0 %v1358
    %v1360 = vpop.f32.mrf.mxu0
    %v1361 = vadd.f32 %v1295, %v1360
    %1362 = vdwg.mxu0
    %1363 = vmatpush.msra.mxu0 0.0
    %1364 = vmatpush.msra.mxu0 0.0
    %1365 = vmatpush.msra.mxu0 0.0
    %1366 = vmatpush.msra.mxu0 0.0
    %1367 = vmatpush.msra.mxu0 0.0
    %1368 = vmatpush.msra.mxu0 0.0
    %1369 = vmatpush.msra.mxu0 0.0
    %v1370 = vand.u32 %v576, 4294901760
    %v1371 = vsub.f32 %v576, %v1370
    %1372 = vmatpush.msra.mxu0 %v1371
    %v1373 = vand.u32 %v566, 4294901760
    %v1374 = vsub.f32 %v566, %v1373
    %1375 = vmatpush.msra.mxu0 %v1374
    %v1376 = vand.u32 %v564, 4294901760
    %v1377 = vsub.f32 %v564, %v1376
    %1378 = vmatpush.msra.mxu0 %v1377
    %v1379 = vand.u32 %v562, 4294901760
    %v1380 = vsub.f32 %v562, %v1379
    %1381 = vmatpush.msra.mxu0 %v1380
    %v1382 = vand.u32 %v560, 4294901760
    %v1383 = vsub.f32 %v560, %v1382
    %1384 = vmatpush.msra.mxu0 %v1383
    %v1385 = vand.u32 %v558, 4294901760
    %v1386 = vsub.f32 %v558, %v1385
    %1387 = vmatpush.msra.mxu0 %v1386
    %v1388 = vand.u32 %v556, 4294901760
    %v1389 = vsub.f32 %v556, %v1388
    %1390 = vmatpush.msra.mxu0 %v1389
    %v1391 = vand.u32 %v554, 4294901760
    %v1392 = vsub.f32 %v554, %v1391
    %1393 = vmatpush.msra.mxu0 %v1392
    %v1394 = vand.u32 %v552, 4294901760
    %v1395 = vsub.f32 %v552, %v1394
    %1396 = vmatpush.msra.mxu0 %v1395
    %v1397 = vand.u32 %v572, 4294901760
    %v1398 = vsub.f32 %v572, %v1397
    %1399 = vmatmul.f32.gmra.mxu0 %v1398
    %v1400 = vpop.f32.mrf.mxu0
    %v1401 = vadd.f32 %v1361, %v1400
    %1402 = vdwg.mxu0
    %1403 = vmatpush.msra.mxu0 0.0
    %1404 = vmatpush.msra.mxu0 0.0
    %1405 = vmatpush.msra.mxu0 0.0
    %1406 = vmatpush.msra.mxu0 0.0
    %1407 = vmatpush.msra.mxu0 0.0
    %1408 = vmatpush.msra.mxu0 0.0
    %1409 = vmatpush.msra.mxu0 0.0
    %v1410 = vand.u32 %v576, 4294901760
    %1411 = vmatpush.msra.mxu0 %v1410
    %v1412 = vand.u32 %v566, 4294901760
    %1413 = vmatpush.msra.mxu0 %v1412
    %v1414 = vand.u32 %v564, 4294901760
    %1415 = vmatpush.msra.mxu0 %v1414
    %v1416 = vand.u32 %v562, 4294901760
    %1417 = vmatpush.msra.mxu0 %v1416
    %v1418 = vand.u32 %v560, 4294901760
    %1419 = vmatpush.msra.mxu0 %v1418
    %v1420 = vand.u32 %v558, 4294901760
    %1421 = vmatpush.msra.mxu0 %v1420
    %v1422 = vand.u32 %v556, 4294901760
    %1423 = vmatpush.msra.mxu0 %v1422
    %v1424 = vand.u32 %v554, 4294901760
    %1425 = vmatpush.msra.mxu0 %v1424
    %v1426 = vand.u32 %v552, 4294901760
    %1427 = vmatpush.msra.mxu0 %v1426
    %v1428 = vand.u32 %v572, 4294901760
    %v1429 = vsub.f32 %v572, %v1428
    %v1430 = vand.u32 %v1429, 4294901760
    %1431 = vmatmul.f32.gmra.mxu0 %v1430
    %v1432 = vpop.f32.mrf.mxu0
    %v1433 = vadd.f32 %v1401, %v1432
    %1434 = vdwg.mxu0
    %1435 = vmatpush.msra.mxu0 0.0
    %1436 = vmatpush.msra.mxu0 0.0
    %1437 = vmatpush.msra.mxu0 0.0
    %1438 = vmatpush.msra.mxu0 0.0
    %1439 = vmatpush.msra.mxu0 0.0
    %1440 = vmatpush.msra.mxu0 0.0
    %1441 = vmatpush.msra.mxu0 0.0
    %v1442 = vand.u32 %v576, 4294901760
    %v1443 = vsub.f32 %v576, %v1442
    %v1444 = vand.u32 %v1443, 4294901760
    %1445 = vmatpush.msra.mxu0 %v1444
    %v1446 = vand.u32 %v566, 4294901760
    %v1447 = vsub.f32 %v566, %v1446
    %v1448 = vand.u32 %v1447, 4294901760
    %1449 = vmatpush.msra.mxu0 %v1448
    %v1450 = vand.u32 %v564, 4294901760
    %v1451 = vsub.f32 %v564, %v1450
    %v1452 = vand.u32 %v1451, 4294901760
    %1453 = vmatpush.msra.mxu0 %v1452
    %v1454 = vand.u32 %v562, 4294901760
    %v1455 = vsub.f32 %v562, %v1454
    %v1456 = vand.u32 %v1455, 4294901760
    %1457 = vmatpush.msra.mxu0 %v1456
    %v1458 = vand.u32 %v560, 4294901760
    %v1459 = vsub.f32 %v560, %v1458
    %v1460 = vand.u32 %v1459, 4294901760
    %1461 = vmatpush.msra.mxu0 %v1460
    %v1462 = vand.u32 %v558, 4294901760
    %v1463 = vsub.f32 %v558, %v1462
    %v1464 = vand.u32 %v1463, 4294901760
    %1465 = vmatpush.msra.mxu0 %v1464
    %v1466 = vand.u32 %v556, 4294901760
    %v1467 = vsub.f32 %v556, %v1466
    %v1468 = vand.u32 %v1467, 4294901760
    %1469 = vmatpush.msra.mxu0 %v1468
    %v1470 = vand.u32 %v554, 4294901760
    %v1471 = vsub.f32 %v554, %v1470
    %v1472 = vand.u32 %v1471, 4294901760
    %1473 = vmatpush.msra.mxu0 %v1472
    %v1474 = vand.u32 %v552, 4294901760
    %v1475 = vsub.f32 %v552, %v1474
    %v1476 = vand.u32 %v1475, 4294901760
    %1477 = vmatpush.msra.mxu0 %v1476
    %v1478 = vand.u32 %v572, 4294901760
    %1479 = vmatmul.f32.gmra.mxu0 %v1478
    %v1480 = vpop.f32.mrf.mxu0
    %v1481 = vadd.f32 %v1433, %v1480
    %1482 = vdwg.mxu0
    %1483 = vmatpush.msra.mxu0 0.0
    %1484 = vmatpush.msra.mxu0 0.0
    %1485 = vmatpush.msra.mxu0 0.0
    %1486 = vmatpush.msra.mxu0 0.0
    %1487 = vmatpush.msra.mxu0 0.0
    %1488 = vmatpush.msra.mxu0 0.0
    %1489 = vmatpush.msra.mxu0 0.0
    %v1490 = vand.u32 %v576, 4294901760
    %1491 = vmatpush.msra.mxu0 %v1490
    %v1492 = vand.u32 %v566, 4294901760
    %1493 = vmatpush.msra.mxu0 %v1492
    %v1494 = vand.u32 %v564, 4294901760
    %1495 = vmatpush.msra.mxu0 %v1494
    %v1496 = vand.u32 %v562, 4294901760
    %1497 = vmatpush.msra.mxu0 %v1496
    %v1498 = vand.u32 %v560, 4294901760
    %1499 = vmatpush.msra.mxu0 %v1498
    %v1500 = vand.u32 %v558, 4294901760
    %1501 = vmatpush.msra.mxu0 %v1500
    %v1502 = vand.u32 %v556, 4294901760
    %1503 = vmatpush.msra.mxu0 %v1502
    %v1504 = vand.u32 %v554, 4294901760
    %1505 = vmatpush.msra.mxu0 %v1504
    %v1506 = vand.u32 %v552, 4294901760
    %1507 = vmatpush.msra.mxu0 %v1506
    %v1508 = vand.u32 %v572, 4294901760
    %1509 = vmatmul.f32.gmra.mxu0 %v1508
    %v1510 = vpop.f32.mrf.mxu0
    %v1511 = vadd.f32 %v1481, %v1510
    %1512 = vdwg.mxu0
    %v1513 = vand.u32 %v519, 4294901760
    %1514 = vmatpush.msra.mxu0 %v1513
    %v1515 = vand.u32 %v517, 4294901760
    %1516 = vmatpush.msra.mxu0 %v1515
    %v1517 = vand.u32 %v515, 4294901760
    %1518 = vmatpush.msra.mxu0 %v1517
    %v1519 = vand.u32 %v513, 4294901760
    %1520 = vmatpush.msra.mxu0 %v1519
    %v1521 = vand.u32 %v511, 4294901760
    %1522 = vmatpush.msra.mxu0 %v1521
    %v1523 = vand.u32 %v509, 4294901760
    %1524 = vmatpush.msra.mxu0 %v1523
    %v1525 = vand.u32 %v507, 4294901760
    %1526 = vmatpush.msra.mxu0 %v1525
    %v1527 = vand.u32 %v505, 4294901760
    %1528 = vmatpush.msra.mxu0 %v1527
    %v1529 = vand.u32 %v503, 4294901760
    %1530 = vmatpush.msra.mxu0 %v1529
    %v1531 = vand.u32 %v501, 4294901760
    %1532 = vmatpush.msra.mxu0 %v1531
    %v1533 = vand.u32 %v499, 4294901760
    %1534 = vmatpush.msra.mxu0 %v1533
    %v1535 = vand.u32 %v497, 4294901760
    %1536 = vmatpush.msra.mxu0 %v1535
    %v1537 = vand.u32 %v495, 4294901760
    %1538 = vmatpush.msra.mxu0 %v1537
    %v1539 = vand.u32 %v493, 4294901760
    %1540 = vmatpush.msra.mxu0 %v1539
    %v1541 = vand.u32 %v491, 4294901760
    %1542 = vmatpush.msra.mxu0 %v1541
    %v1543 = vand.u32 %v489, 4294901760
    %1544 = vmatpush.msra.mxu0 %v1543
    %v1545 = vand.u32 %v485, 4294901760
    %v1546 = vsub.f32 %v485, %v1545
    %v1547 = vand.u32 %v1546, 4294901760
    %v1548 = vsub.f32 %v1546, %v1547
    %v1549 = vand.u32 %v1548, 4294901760
    %1550 = vmatmul.f32.gmra.mxu0 %v1549
    %v1551 = vpop.f32.mrf.mxu0
    %v1552 = vadd.f32 0.0, %v1551
    %1553 = vdwg.mxu0
    %v1554 = vand.u32 %v519, 4294901760
    %v1555 = vsub.f32 %v519, %v1554
    %v1556 = vand.u32 %v1555, 4294901760
    %v1557 = vsub.f32 %v1555, %v1556
    %v1558 = vand.u32 %v1557, 4294901760
    %1559 = vmatpush.msra.mxu0 %v1558
    %v1560 = vand.u32 %v517, 4294901760
    %v1561 = vsub.f32 %v517, %v1560
    %v1562 = vand.u32 %v1561, 4294901760
    %v1563 = vsub.f32 %v1561, %v1562
    %v1564 = vand.u32 %v1563, 4294901760
    %1565 = vmatpush.msra.mxu0 %v1564
    %v1566 = vand.u32 %v515, 4294901760
    %v1567 = vsub.f32 %v515, %v1566
    %v1568 = vand.u32 %v1567, 4294901760
    %v1569 = vsub.f32 %v1567, %v1568
    %v1570 = vand.u32 %v1569, 4294901760
    %1571 = vmatpush.msra.mxu0 %v1570
    %v1572 = vand.u32 %v513, 4294901760
    %v1573 = vsub.f32 %v513, %v1572
    %v1574 = vand.u32 %v1573, 4294901760
    %v1575 = vsub.f32 %v1573, %v1574
    %v1576 = vand.u32 %v1575, 4294901760
    %1577 = vmatpush.msra.mxu0 %v1576
    %v1578 = vand.u32 %v511, 4294901760
    %v1579 = vsub.f32 %v511, %v1578
    %v1580 = vand.u32 %v1579, 4294901760
    %v1581 = vsub.f32 %v1579, %v1580
    %v1582 = vand.u32 %v1581, 4294901760
    %1583 = vmatpush.msra.mxu0 %v1582
    %v1584 = vand.u32 %v509, 4294901760
    %v1585 = vsub.f32 %v509, %v1584
    %v1586 = vand.u32 %v1585, 4294901760
    %v1587 = vsub.f32 %v1585, %v1586
    %v1588 = vand.u32 %v1587, 4294901760
    %1589 = vmatpush.msra.mxu0 %v1588
    %v1590 = vand.u32 %v507, 4294901760
    %v1591 = vsub.f32 %v507, %v1590
    %v1592 = vand.u32 %v1591, 4294901760
    %v1593 = vsub.f32 %v1591, %v1592
    %v1594 = vand.u32 %v1593, 4294901760
    %1595 = vmatpush.msra.mxu0 %v1594
    %v1596 = vand.u32 %v505, 4294901760
    %v1597 = vsub.f32 %v505, %v1596
    %v1598 = vand.u32 %v1597, 4294901760
    %v1599 = vsub.f32 %v1597, %v1598
    %v1600 = vand.u32 %v1599, 4294901760
    %1601 = vmatpush.msra.mxu0 %v1600
    %v1602 = vand.u32 %v503, 4294901760
    %v1603 = vsub.f32 %v503, %v1602
    %v1604 = vand.u32 %v1603, 4294901760
    %v1605 = vsub.f32 %v1603, %v1604
    %v1606 = vand.u32 %v1605, 4294901760
    %1607 = vmatpush.msra.mxu0 %v1606
    %v1608 = vand.u32 %v501, 4294901760
    %v1609 = vsub.f32 %v501, %v1608
    %v1610 = vand.u32 %v1609, 4294901760
    %v1611 = vsub.f32 %v1609, %v1610
    %v1612 = vand.u32 %v1611, 4294901760
    %1613 = vmatpush.msra.mxu0 %v1612
    %v1614 = vand.u32 %v499, 4294901760
    %v1615 = vsub.f32 %v499, %v1614
    %v1616 = vand.u32 %v1615, 4294901760
    %v1617 = vsub.f32 %v1615, %v1616
    %v1618 = vand.u32 %v1617, 4294901760
    %1619 = vmatpush.msra.mxu0 %v1618
    %v1620 = vand.u32 %v497, 4294901760
    %v1621 = vsub.f32 %v497, %v1620
    %v1622 = vand.u32 %v1621, 4294901760
    %v1623 = vsub.f32 %v1621, %v1622
    %v1624 = vand.u32 %v1623, 4294901760
    %1625 = vmatpush.msra.mxu0 %v1624
    %v1626 = vand.u32 %v495, 4294901760
    %v1627 = vsub.f32 %v495, %v1626
    %v1628 = vand.u32 %v1627, 4294901760
    %v1629 = vsub.f32 %v1627, %v1628
    %v1630 = vand.u32 %v1629, 4294901760
    %1631 = vmatpush.msra.mxu0 %v1630
    %v1632 = vand.u32 %v493, 4294901760
    %v1633 = vsub.f32 %v493, %v1632
    %v1634 = vand.u32 %v1633, 4294901760
    %v1635 = vsub.f32 %v1633, %v1634
    %v1636 = vand.u32 %v1635, 4294901760
    %1637 = vmatpush.msra.mxu0 %v1636
    %v1638 = vand.u32 %v491, 4294901760
    %v1639 = vsub.f32 %v491, %v1638
    %v1640 = vand.u32 %v1639, 4294901760
    %v1641 = vsub.f32 %v1639, %v1640
    %v1642 = vand.u32 %v1641, 4294901760
    %1643 = vmatpush.msra.mxu0 %v1642
    %v1644 = vand.u32 %v489, 4294901760
    %v1645 = vsub.f32 %v489, %v1644
    %v1646 = vand.u32 %v1645, 4294901760
    %v1647 = vsub.f32 %v1645, %v1646
    %v1648 = vand.u32 %v1647, 4294901760
    %1649 = vmatpush.msra.mxu0 %v1648
    %v1650 = vand.u32 %v485, 4294901760
    %1651 = vmatmul.f32.gmra.mxu0 %v1650
    %v1652 = vpop.f32.mrf.mxu0
    %v1653 = vadd.f32 %v1552, %v1652
    %1654 = vdwg.mxu0
    %v1655 = vand.u32 %v519, 4294901760
    %v1656 = vsub.f32 %v519, %v1655
    %1657 = vmatpush.msra.mxu0 %v1656
    %v1658 = vand.u32 %v517, 4294901760
    %v1659 = vsub.f32 %v517, %v1658
    %1660 = vmatpush.msra.mxu0 %v1659
    %v1661 = vand.u32 %v515, 4294901760
    %v1662 = vsub.f32 %v515, %v1661
    %1663 = vmatpush.msra.mxu0 %v1662
    %v1664 = vand.u32 %v513, 4294901760
    %v1665 = vsub.f32 %v513, %v1664
    %1666 = vmatpush.msra.mxu0 %v1665
    %v1667 = vand.u32 %v511, 4294901760
    %v1668 = vsub.f32 %v511, %v1667
    %1669 = vmatpush.msra.mxu0 %v1668
    %v1670 = vand.u32 %v509, 4294901760
    %v1671 = vsub.f32 %v509, %v1670
    %1672 = vmatpush.msra.mxu0 %v1671
    %v1673 = vand.u32 %v507, 4294901760
    %v1674 = vsub.f32 %v507, %v1673
    %1675 = vmatpush.msra.mxu0 %v1674
    %v1676 = vand.u32 %v505, 4294901760
    %v1677 = vsub.f32 %v505, %v1676
    %1678 = vmatpush.msra.mxu0 %v1677
    %v1679 = vand.u32 %v503, 4294901760
    %v1680 = vsub.f32 %v503, %v1679
    %1681 = vmatpush.msra.mxu0 %v1680
    %v1682 = vand.u32 %v501, 4294901760
    %v1683 = vsub.f32 %v501, %v1682
    %1684 = vmatpush.msra.mxu0 %v1683
    %v1685 = vand.u32 %v499, 4294901760
    %v1686 = vsub.f32 %v499, %v1685
    %1687 = vmatpush.msra.mxu0 %v1686
    %v1688 = vand.u32 %v497, 4294901760
    %v1689 = vsub.f32 %v497, %v1688
    %1690 = vmatpush.msra.mxu0 %v1689
    %v1691 = vand.u32 %v495, 4294901760
    %v1692 = vsub.f32 %v495, %v1691
    %1693 = vmatpush.msra.mxu0 %v1692
    %v1694 = vand.u32 %v493, 4294901760
    %v1695 = vsub.f32 %v493, %v1694
    %1696 = vmatpush.msra.mxu0 %v1695
    %v1697 = vand.u32 %v491, 4294901760
    %v1698 = vsub.f32 %v491, %v1697
    %1699 = vmatpush.msra.mxu0 %v1698
    %v1700 = vand.u32 %v489, 4294901760
    %v1701 = vsub.f32 %v489, %v1700
    %1702 = vmatpush.msra.mxu0 %v1701
    %v1703 = vand.u32 %v485, 4294901760
    %v1704 = vsub.f32 %v485, %v1703
    %1705 = vmatmul.f32.gmra.mxu0 %v1704
    %v1706 = vpop.f32.mrf.mxu0
    %v1707 = vadd.f32 %v1653, %v1706
    %1708 = vdwg.mxu0
    %v1709 = vand.u32 %v519, 4294901760
    %1710 = vmatpush.msra.mxu0 %v1709
    %v1711 = vand.u32 %v517, 4294901760
    %1712 = vmatpush.msra.mxu0 %v1711
    %v1713 = vand.u32 %v515, 4294901760
    %1714 = vmatpush.msra.mxu0 %v1713
    %v1715 = vand.u32 %v513, 4294901760
    %1716 = vmatpush.msra.mxu0 %v1715
    %v1717 = vand.u32 %v511, 4294901760
    %1718 = vmatpush.msra.mxu0 %v1717
    %v1719 = vand.u32 %v509, 4294901760
    %1720 = vmatpush.msra.mxu0 %v1719
    %v1721 = vand.u32 %v507, 4294901760
    %1722 = vmatpush.msra.mxu0 %v1721
    %v1723 = vand.u32 %v505, 4294901760
    %1724 = vmatpush.msra.mxu0 %v1723
    %v1725 = vand.u32 %v503, 4294901760
    %1726 = vmatpush.msra.mxu0 %v1725
    %v1727 = vand.u32 %v501, 4294901760
    %1728 = vmatpush.msra.mxu0 %v1727
    %v1729 = vand.u32 %v499, 4294901760
    %1730 = vmatpush.msra.mxu0 %v1729
    %v1731 = vand.u32 %v497, 4294901760
    %1732 = vmatpush.msra.mxu0 %v1731
    %v1733 = vand.u32 %v495, 4294901760
    %1734 = vmatpush.msra.mxu0 %v1733
    %v1735 = vand.u32 %v493, 4294901760
    %1736 = vmatpush.msra.mxu0 %v1735
    %v1737 = vand.u32 %v491, 4294901760
    %1738 = vmatpush.msra.mxu0 %v1737
    %v1739 = vand.u32 %v489, 4294901760
    %1740 = vmatpush.msra.mxu0 %v1739
    %v1741 = vand.u32 %v485, 4294901760
    %v1742 = vsub.f32 %v485, %v1741
    %v1743 = vand.u32 %v1742, 4294901760
    %1744 = vmatmul.f32.gmra.mxu0 %v1743
    %v1745 = vpop.f32.mrf.mxu0
    %v1746 = vadd.f32 %v1707, %v1745
    %1747 = vdwg.mxu0
    %v1748 = vand.u32 %v519, 4294901760
    %v1749 = vsub.f32 %v519, %v1748
    %v1750 = vand.u32 %v1749, 4294901760
    %1751 = vmatpush.msra.mxu0 %v1750
    %v1752 = vand.u32 %v517, 4294901760
    %v1753 = vsub.f32 %v517, %v1752
    %v1754 = vand.u32 %v1753, 4294901760
    %1755 = vmatpush.msra.mxu0 %v1754
    %v1756 = vand.u32 %v515, 4294901760
    %v1757 = vsub.f32 %v515, %v1756
    %v1758 = vand.u32 %v1757, 4294901760
    %1759 = vmatpush.msra.mxu0 %v1758
    %v1760 = vand.u32 %v513, 4294901760
    %v1761 = vsub.f32 %v513, %v1760
    %v1762 = vand.u32 %v1761, 4294901760
    %1763 = vmatpush.msra.mxu0 %v1762
    %v1764 = vand.u32 %v511, 4294901760
    %v1765 = vsub.f32 %v511, %v1764
    %v1766 = vand.u32 %v1765, 4294901760
    %1767 = vmatpush.msra.mxu0 %v1766
    %v1768 = vand.u32 %v509, 4294901760
    %v1769 = vsub.f32 %v509, %v1768
    %v1770 = vand.u32 %v1769, 4294901760
    %1771 = vmatpush.msra.mxu0 %v1770
    %v1772 = vand.u32 %v507, 4294901760
    %v1773 = vsub.f32 %v507, %v1772
    %v1774 = vand.u32 %v1773, 4294901760
    %1775 = vmatpush.msra.mxu0 %v1774
    %v1776 = vand.u32 %v505, 4294901760
    %v1777 = vsub.f32 %v505, %v1776
    %v1778 = vand.u32 %v1777, 4294901760
    %1779 = vmatpush.msra.mxu0 %v1778
    %v1780 = vand.u32 %v503, 4294901760
    %v1781 = vsub.f32 %v503, %v1780
    %v1782 = vand.u32 %v1781, 4294901760
    %1783 = vmatpush.msra.mxu0 %v1782
    %v1784 = vand.u32 %v501, 4294901760
    %v1785 = vsub.f32 %v501, %v1784
    %v1786 = vand.u32 %v1785, 4294901760
    %1787 = vmatpush.msra.mxu0 %v1786
    %v1788 = vand.u32 %v499, 4294901760
    %v1789 = vsub.f32 %v499, %v1788
    %v1790 = vand.u32 %v1789, 4294901760
    %1791 = vmatpush.msra.mxu0 %v1790
    %v1792 = vand.u32 %v497, 4294901760
    %v1793 = vsub.f32 %v497, %v1792
    %v1794 = vand.u32 %v1793, 4294901760
    %1795 = vmatpush.msra.mxu0 %v1794
    %v1796 = vand.u32 %v495, 4294901760
    %v1797 = vsub.f32 %v495, %v1796
    %v1798 = vand.u32 %v1797, 4294901760
    %1799 = vmatpush.msra.mxu0 %v1798
    %v1800 = vand.u32 %v493, 4294901760
    %v1801 = vsub.f32 %v493, %v1800
    %v1802 = vand.u32 %v1801, 4294901760
    %1803 = vmatpush.msra.mxu0 %v1802
    %v1804 = vand.u32 %v491, 4294901760
    %v1805 = vsub.f32 %v491, %v1804
    %v1806 = vand.u32 %v1805, 4294901760
    %1807 = vmatpush.msra.mxu0 %v1806
    %v1808 = vand.u32 %v489, 4294901760
    %v1809 = vsub.f32 %v489, %v1808
    %v1810 = vand.u32 %v1809, 4294901760
    %1811 = vmatpush.msra.mxu0 %v1810
    %v1812 = vand.u32 %v485, 4294901760
    %1813 = vmatmul.f32.gmra.mxu0 %v1812
    %v1814 = vpop.f32.mrf.mxu0
    %v1815 = vadd.f32 %v1746, %v1814
    %1816 = vdwg.mxu0
    %v1817 = vand.u32 %v519, 4294901760
    %1818 = vmatpush.msra.mxu0 %v1817
    %v1819 = vand.u32 %v517, 4294901760
    %1820 = vmatpush.msra.mxu0 %v1819
    %v1821 = vand.u32 %v515, 4294901760
    %1822 = vmatpush.msra.mxu0 %v1821
    %v1823 = vand.u32 %v513, 4294901760
    %1824 = vmatpush.msra.mxu0 %v1823
    %v1825 = vand.u32 %v511, 4294901760
    %1826 = vmatpush.msra.mxu0 %v1825
    %v1827 = vand.u32 %v509, 4294901760
    %1828 = vmatpush.msra.mxu0 %v1827
    %v1829 = vand.u32 %v507, 4294901760
    %1830 = vmatpush.msra.mxu0 %v1829
    %v1831 = vand.u32 %v505, 4294901760
    %1832 = vmatpush.msra.mxu0 %v1831
    %v1833 = vand.u32 %v503, 4294901760
    %1834 = vmatpush.msra.mxu0 %v1833
    %v1835 = vand.u32 %v501, 4294901760
    %1836 = vmatpush.msra.mxu0 %v1835
    %v1837 = vand.u32 %v499, 4294901760
    %1838 = vmatpush.msra.mxu0 %v1837
    %v1839 = vand.u32 %v497, 4294901760
    %1840 = vmatpush.msra.mxu0 %v1839
    %v1841 = vand.u32 %v495, 4294901760
    %1842 = vmatpush.msra.mxu0 %v1841
    %v1843 = vand.u32 %v493, 4294901760
    %1844 = vmatpush.msra.mxu0 %v1843
    %v1845 = vand.u32 %v491, 4294901760
    %1846 = vmatpush.msra.mxu0 %v1845
    %v1847 = vand.u32 %v489, 4294901760
    %1848 = vmatpush.msra.mxu0 %v1847
    %v1849 = vand.u32 %v485, 4294901760
    %1850 = vmatmul.f32.gmra.mxu0 %v1849
    %v1851 = vpop.f32.mrf.mxu0
    %v1852 = vadd.f32 %v1815, %v1851
    %1853 = vdwg.mxu0
    %v1854 = vand.u32 %v551, 4294901760
    %1855 = vmatpush.msra.mxu0 %v1854
    %v1856 = vand.u32 %v549, 4294901760
    %1857 = vmatpush.msra.mxu0 %v1856
    %v1858 = vand.u32 %v547, 4294901760
    %1859 = vmatpush.msra.mxu0 %v1858
    %v1860 = vand.u32 %v545, 4294901760
    %1861 = vmatpush.msra.mxu0 %v1860
    %v1862 = vand.u32 %v543, 4294901760
    %1863 = vmatpush.msra.mxu0 %v1862
    %v1864 = vand.u32 %v541, 4294901760
    %1865 = vmatpush.msra.mxu0 %v1864
    %v1866 = vand.u32 %v539, 4294901760
    %1867 = vmatpush.msra.mxu0 %v1866
    %v1868 = vand.u32 %v537, 4294901760
    %1869 = vmatpush.msra.mxu0 %v1868
    %v1870 = vand.u32 %v535, 4294901760
    %1871 = vmatpush.msra.mxu0 %v1870
    %v1872 = vand.u32 %v533, 4294901760
    %1873 = vmatpush.msra.mxu0 %v1872
    %v1874 = vand.u32 %v531, 4294901760
    %1875 = vmatpush.msra.mxu0 %v1874
    %v1876 = vand.u32 %v529, 4294901760
    %1877 = vmatpush.msra.mxu0 %v1876
    %v1878 = vand.u32 %v527, 4294901760
    %1879 = vmatpush.msra.mxu0 %v1878
    %v1880 = vand.u32 %v525, 4294901760
    %1881 = vmatpush.msra.mxu0 %v1880
    %v1882 = vand.u32 %v523, 4294901760
    %1883 = vmatpush.msra.mxu0 %v1882
    %v1884 = vand.u32 %v521, 4294901760
    %1885 = vmatpush.msra.mxu0 %v1884
    %v1886 = vand.u32 %v486, 4294901760
    %v1887 = vsub.f32 %v486, %v1886
    %v1888 = vand.u32 %v1887, 4294901760
    %v1889 = vsub.f32 %v1887, %v1888
    %v1890 = vand.u32 %v1889, 4294901760
    %1891 = vmatmul.f32.gmra.mxu0 %v1890
    %v1892 = vpop.f32.mrf.mxu0
    %v1893 = vadd.f32 %v1852, %v1892
    %1894 = vdwg.mxu0
    %v1895 = vand.u32 %v551, 4294901760
    %v1896 = vsub.f32 %v551, %v1895
    %v1897 = vand.u32 %v1896, 4294901760
    %v1898 = vsub.f32 %v1896, %v1897
    %v1899 = vand.u32 %v1898, 4294901760
    %1900 = vmatpush.msra.mxu0 %v1899
    %v1901 = vand.u32 %v549, 4294901760
    %v1902 = vsub.f32 %v549, %v1901
    %v1903 = vand.u32 %v1902, 4294901760
    %v1904 = vsub.f32 %v1902, %v1903
    %v1905 = vand.u32 %v1904, 4294901760
    %1906 = vmatpush.msra.mxu0 %v1905
    %v1907 = vand.u32 %v547, 4294901760
    %v1908 = vsub.f32 %v547, %v1907
    %v1909 = vand.u32 %v1908, 4294901760
    %v1910 = vsub.f32 %v1908, %v1909
    %v1911 = vand.u32 %v1910, 4294901760
    %1912 = vmatpush.msra.mxu0 %v1911
    %v1913 = vand.u32 %v545, 4294901760
    %v1914 = vsub.f32 %v545, %v1913
    %v1915 = vand.u32 %v1914, 4294901760
    %v1916 = vsub.f32 %v1914, %v1915
    %v1917 = vand.u32 %v1916, 4294901760
    %1918 = vmatpush.msra.mxu0 %v1917
    %v1919 = vand.u32 %v543, 4294901760
    %v1920 = vsub.f32 %v543, %v1919
    %v1921 = vand.u32 %v1920, 4294901760
    %v1922 = vsub.f32 %v1920, %v1921
    %v1923 = vand.u32 %v1922, 4294901760
    %1924 = vmatpush.msra.mxu0 %v1923
    %v1925 = vand.u32 %v541, 4294901760
    %v1926 = vsub.f32 %v541, %v1925
    %v1927 = vand.u32 %v1926, 4294901760
    %v1928 = vsub.f32 %v1926, %v1927
    %v1929 = vand.u32 %v1928, 4294901760
    %1930 = vmatpush.msra.mxu0 %v1929
    %v1931 = vand.u32 %v539, 4294901760
    %v1932 = vsub.f32 %v539, %v1931
    %v1933 = vand.u32 %v1932, 4294901760
    %v1934 = vsub.f32 %v1932, %v1933
    %v1935 = vand.u32 %v1934, 4294901760
    %1936 = vmatpush.msra.mxu0 %v1935
    %v1937 = vand.u32 %v537, 4294901760
    %v1938 = vsub.f32 %v537, %v1937
    %v1939 = vand.u32 %v1938, 4294901760
    %v1940 = vsub.f32 %v1938, %v1939
    %v1941 = vand.u32 %v1940, 4294901760
    %1942 = vmatpush.msra.mxu0 %v1941
    %v1943 = vand.u32 %v535, 4294901760
    %v1944 = vsub.f32 %v535, %v1943
    %v1945 = vand.u32 %v1944, 4294901760
    %v1946 = vsub.f32 %v1944, %v1945
    %v1947 = vand.u32 %v1946, 4294901760
    %1948 = vmatpush.msra.mxu0 %v1947
    %v1949 = vand.u32 %v533, 4294901760
    %v1950 = vsub.f32 %v533, %v1949
    %v1951 = vand.u32 %v1950, 4294901760
    %v1952 = vsub.f32 %v1950, %v1951
    %v1953 = vand.u32 %v1952, 4294901760
    %1954 = vmatpush.msra.mxu0 %v1953
    %v1955 = vand.u32 %v531, 4294901760
    %v1956 = vsub.f32 %v531, %v1955
    %v1957 = vand.u32 %v1956, 4294901760
    %v1958 = vsub.f32 %v1956, %v1957
    %v1959 = vand.u32 %v1958, 4294901760
    %1960 = vmatpush.msra.mxu0 %v1959
    %v1961 = vand.u32 %v529, 4294901760
    %v1962 = vsub.f32 %v529, %v1961
    %v1963 = vand.u32 %v1962, 4294901760
    %v1964 = vsub.f32 %v1962, %v1963
    %v1965 = vand.u32 %v1964, 4294901760
    %1966 = vmatpush.msra.mxu0 %v1965
    %v1967 = vand.u32 %v527, 4294901760
    %v1968 = vsub.f32 %v527, %v1967
    %v1969 = vand.u32 %v1968, 4294901760
    %v1970 = vsub.f32 %v1968, %v1969
    %v1971 = vand.u32 %v1970, 4294901760
    %1972 = vmatpush.msra.mxu0 %v1971
    %v1973 = vand.u32 %v525, 4294901760
    %v1974 = vsub.f32 %v525, %v1973
    %v1975 = vand.u32 %v1974, 4294901760
    %v1976 = vsub.f32 %v1974, %v1975
    %v1977 = vand.u32 %v1976, 4294901760
    %1978 = vmatpush.msra.mxu0 %v1977
    %v1979 = vand.u32 %v523, 4294901760
    %v1980 = vsub.f32 %v523, %v1979
    %v1981 = vand.u32 %v1980, 4294901760
    %v1982 = vsub.f32 %v1980, %v1981
    %v1983 = vand.u32 %v1982, 4294901760
    %1984 = vmatpush.msra.mxu0 %v1983
    %v1985 = vand.u32 %v521, 4294901760
    %v1986 = vsub.f32 %v521, %v1985
    %v1987 = vand.u32 %v1986, 4294901760
    %v1988 = vsub.f32 %v1986, %v1987
    %v1989 = vand.u32 %v1988, 4294901760
    %1990 = vmatpush.msra.mxu0 %v1989
    %v1991 = vand.u32 %v486, 4294901760
    %1992 = vmatmul.f32.gmra.mxu0 %v1991
    %v1993 = vpop.f32.mrf.mxu0
    %v1994 = vadd.f32 %v1893, %v1993
    %1995 = vdwg.mxu0
    %v1996 = vand.u32 %v551, 4294901760
    %v1997 = vsub.f32 %v551, %v1996
    %1998 = vmatpush.msra.mxu0 %v1997
    %v1999 = vand.u32 %v549, 4294901760
    %v2000 = vsub.f32 %v549, %v1999
    %2001 = vmatpush.msra.mxu0 %v2000
    %v2002 = vand.u32 %v547, 4294901760
    %v2003 = vsub.f32 %v547, %v2002
    %2004 = vmatpush.msra.mxu0 %v2003
    %v2005 = vand.u32 %v545, 4294901760
    %v2006 = vsub.f32 %v545, %v2005
    %2007 = vmatpush.msra.mxu0 %v2006
    %v2008 = vand.u32 %v543, 4294901760
    %v2009 = vsub.f32 %v543, %v2008
    %2010 = vmatpush.msra.mxu0 %v2009
    %v2011 = vand.u32 %v541, 4294901760
    %v2012 = vsub.f32 %v541, %v2011
    %2013 = vmatpush.msra.mxu0 %v2012
    %v2014 = vand.u32 %v539, 4294901760
    %v2015 = vsub.f32 %v539, %v2014
    %2016 = vmatpush.msra.mxu0 %v2015
    %v2017 = vand.u32 %v537, 4294901760
    %v2018 = vsub.f32 %v537, %v2017
    %2019 = vmatpush.msra.mxu0 %v2018
    %v2020 = vand.u32 %v535, 4294901760
    %v2021 = vsub.f32 %v535, %v2020
    %2022 = vmatpush.msra.mxu0 %v2021
    %v2023 = vand.u32 %v533, 4294901760
    %v2024 = vsub.f32 %v533, %v2023
    %2025 = vmatpush.msra.mxu0 %v2024
    %v2026 = vand.u32 %v531, 4294901760
    %v2027 = vsub.f32 %v531, %v2026
    %2028 = vmatpush.msra.mxu0 %v2027
    %v2029 = vand.u32 %v529, 4294901760
    %v2030 = vsub.f32 %v529, %v2029
    %2031 = vmatpush.msra.mxu0 %v2030
    %v2032 = vand.u32 %v527, 4294901760
    %v2033 = vsub.f32 %v527, %v2032
    %2034 = vmatpush.msra.mxu0 %v2033
    %v2035 = vand.u32 %v525, 4294901760
    %v2036 = vsub.f32 %v525, %v2035
    %2037 = vmatpush.msra.mxu0 %v2036
    %v2038 = vand.u32 %v523, 4294901760
    %v2039 = vsub.f32 %v523, %v2038
    %2040 = vmatpush.msra.mxu0 %v2039
    %v2041 = vand.u32 %v521, 4294901760
    %v2042 = vsub.f32 %v521, %v2041
    %2043 = vmatpush.msra.mxu0 %v2042
    %v2044 = vand.u32 %v486, 4294901760
    %v2045 = vsub.f32 %v486, %v2044
    %2046 = vmatmul.f32.gmra.mxu0 %v2045
    %v2047 = vpop.f32.mrf.mxu0
    %v2048 = vadd.f32 %v1994, %v2047
    %2049 = vdwg.mxu0
    %v2050 = vand.u32 %v551, 4294901760
    %2051 = vmatpush.msra.mxu0 %v2050
    %v2052 = vand.u32 %v549, 4294901760
    %2053 = vmatpush.msra.mxu0 %v2052
    %v2054 = vand.u32 %v547, 4294901760
    %2055 = vmatpush.msra.mxu0 %v2054
    %v2056 = vand.u32 %v545, 4294901760
    %2057 = vmatpush.msra.mxu0 %v2056
    %v2058 = vand.u32 %v543, 4294901760
    %2059 = vmatpush.msra.mxu0 %v2058
    %v2060 = vand.u32 %v541, 4294901760
    %2061 = vmatpush.msra.mxu0 %v2060
    %v2062 = vand.u32 %v539, 4294901760
    %2063 = vmatpush.msra.mxu0 %v2062
    %v2064 = vand.u32 %v537, 4294901760
    %2065 = vmatpush.msra.mxu0 %v2064
    %v2066 = vand.u32 %v535, 4294901760
    %2067 = vmatpush.msra.mxu0 %v2066
    %v2068 = vand.u32 %v533, 4294901760
    %2069 = vmatpush.msra.mxu0 %v2068
    %v2070 = vand.u32 %v531, 4294901760
    %2071 = vmatpush.msra.mxu0 %v2070
    %v2072 = vand.u32 %v529, 4294901760
    %2073 = vmatpush.msra.mxu0 %v2072
    %v2074 = vand.u32 %v527, 4294901760
    %2075 = vmatpush.msra.mxu0 %v2074
    %v2076 = vand.u32 %v525, 4294901760
    %2077 = vmatpush.msra.mxu0 %v2076
    %v2078 = vand.u32 %v523, 4294901760
    %2079 = vmatpush.msra.mxu0 %v2078
    %v2080 = vand.u32 %v521, 4294901760
    %2081 = vmatpush.msra.mxu0 %v2080
    %v2082 = vand.u32 %v486, 4294901760
    %v2083 = vsub.f32 %v486, %v2082
    %v2084 = vand.u32 %v2083, 4294901760
    %2085 = vmatmul.f32.gmra.mxu0 %v2084
    %v2086 = vpop.f32.mrf.mxu0
    %v2087 = vadd.f32 %v2048, %v2086
    %2088 = vdwg.mxu0
    %v2089 = vand.u32 %v551, 4294901760
    %v2090 = vsub.f32 %v551, %v2089
    %v2091 = vand.u32 %v2090, 4294901760
    %2092 = vmatpush.msra.mxu0 %v2091
    %v2093 = vand.u32 %v549, 4294901760
    %v2094 = vsub.f32 %v549, %v2093
    %v2095 = vand.u32 %v2094, 4294901760
    %2096 = vmatpush.msra.mxu0 %v2095
    %v2097 = vand.u32 %v547, 4294901760
    %v2098 = vsub.f32 %v547, %v2097
    %v2099 = vand.u32 %v2098, 4294901760
    %2100 = vmatpush.msra.mxu0 %v2099
    %v2101 = vand.u32 %v545, 4294901760
    %v2102 = vsub.f32 %v545, %v2101
    %v2103 = vand.u32 %v2102, 4294901760
    %2104 = vmatpush.msra.mxu0 %v2103
    %v2105 = vand.u32 %v543, 4294901760
    %v2106 = vsub.f32 %v543, %v2105
    %v2107 = vand.u32 %v2106, 4294901760
    %2108 = vmatpush.msra.mxu0 %v2107
    %v2109 = vand.u32 %v541, 4294901760
    %v2110 = vsub.f32 %v541, %v2109
    %v2111 = vand.u32 %v2110, 4294901760
    %2112 = vmatpush.msra.mxu0 %v2111
    %v2113 = vand.u32 %v539, 4294901760
    %v2114 = vsub.f32 %v539, %v2113
    %v2115 = vand.u32 %v2114, 4294901760
    %2116 = vmatpush.msra.mxu0 %v2115
    %v2117 = vand.u32 %v537, 4294901760
    %v2118 = vsub.f32 %v537, %v2117
    %v2119 = vand.u32 %v2118, 4294901760
    %2120 = vmatpush.msra.mxu0 %v2119
    %v2121 = vand.u32 %v535, 4294901760
    %v2122 = vsub.f32 %v535, %v2121
    %v2123 = vand.u32 %v2122, 4294901760
    %2124 = vmatpush.msra.mxu0 %v2123
    %v2125 = vand.u32 %v533, 4294901760
    %v2126 = vsub.f32 %v533, %v2125
    %v2127 = vand.u32 %v2126, 4294901760
    %2128 = vmatpush.msra.mxu0 %v2127
    %v2129 = vand.u32 %v531, 4294901760
    %v2130 = vsub.f32 %v531, %v2129
    %v2131 = vand.u32 %v2130, 4294901760
    %2132 = vmatpush.msra.mxu0 %v2131
    %v2133 = vand.u32 %v529, 4294901760
    %v2134 = vsub.f32 %v529, %v2133
    %v2135 = vand.u32 %v2134, 4294901760
    %2136 = vmatpush.msra.mxu0 %v2135
    %v2137 = vand.u32 %v527, 4294901760
    %v2138 = vsub.f32 %v527, %v2137
    %v2139 = vand.u32 %v2138, 4294901760
    %2140 = vmatpush.msra.mxu0 %v2139
    %v2141 = vand.u32 %v525, 4294901760
    %v2142 = vsub.f32 %v525, %v2141
    %v2143 = vand.u32 %v2142, 4294901760
    %2144 = vmatpush.msra.mxu0 %v2143
    %v2145 = vand.u32 %v523, 4294901760
    %v2146 = vsub.f32 %v523, %v2145
    %v2147 = vand.u32 %v2146, 4294901760
    %2148 = vmatpush.msra.mxu0 %v2147
    %v2149 = vand.u32 %v521, 4294901760
    %v2150 = vsub.f32 %v521, %v2149
    %v2151 = vand.u32 %v2150, 4294901760
    %2152 = vmatpush.msra.mxu0 %v2151
    %v2153 = vand.u32 %v486, 4294901760
    %2154 = vmatmul.f32.gmra.mxu0 %v2153
    %v2155 = vpop.f32.mrf.mxu0
    %v2156 = vadd.f32 %v2087, %v2155
    %2157 = vdwg.mxu0
    %v2158 = vand.u32 %v551, 4294901760
    %2159 = vmatpush.msra.mxu0 %v2158
    %v2160 = vand.u32 %v549, 4294901760
    %2161 = vmatpush.msra.mxu0 %v2160
    %v2162 = vand.u32 %v547, 4294901760
    %2163 = vmatpush.msra.mxu0 %v2162
    %v2164 = vand.u32 %v545, 4294901760
    %2165 = vmatpush.msra.mxu0 %v2164
    %v2166 = vand.u32 %v543, 4294901760
    %2167 = vmatpush.msra.mxu0 %v2166
    %v2168 = vand.u32 %v541, 4294901760
    %2169 = vmatpush.msra.mxu0 %v2168
    %v2170 = vand.u32 %v539, 4294901760
    %2171 = vmatpush.msra.mxu0 %v2170
    %v2172 = vand.u32 %v537, 4294901760
    %2173 = vmatpush.msra.mxu0 %v2172
    %v2174 = vand.u32 %v535, 4294901760
    %2175 = vmatpush.msra.mxu0 %v2174
    %v2176 = vand.u32 %v533, 4294901760
    %2177 = vmatpush.msra.mxu0 %v2176
    %v2178 = vand.u32 %v531, 4294901760
    %2179 = vmatpush.msra.mxu0 %v2178
    %v2180 = vand.u32 %v529, 4294901760
    %2181 = vmatpush.msra.mxu0 %v2180
    %v2182 = vand.u32 %v527, 4294901760
    %2183 = vmatpush.msra.mxu0 %v2182
    %v2184 = vand.u32 %v525, 4294901760
    %2185 = vmatpush.msra.mxu0 %v2184
    %v2186 = vand.u32 %v523, 4294901760
    %2187 = vmatpush.msra.mxu0 %v2186
    %v2188 = vand.u32 %v521, 4294901760
    %2189 = vmatpush.msra.mxu0 %v2188
    %v2190 = vand.u32 %v486, 4294901760
    %2191 = vmatmul.f32.gmra.mxu0 %v2190
    %v2192 = vpop.f32.mrf.mxu0
    %v2193 = vadd.f32 %v2156, %v2192
    %2194 = vdwg.mxu0
    %2195 = vmatpush.msra.mxu0 0.0
    %2196 = vmatpush.msra.mxu0 0.0
    %2197 = vmatpush.msra.mxu0 0.0
    %2198 = vmatpush.msra.mxu0 0.0
    %2199 = vmatpush.msra.mxu0 0.0
    %2200 = vmatpush.msra.mxu0 0.0
    %2201 = vmatpush.msra.mxu0 0.0
    %v2202 = vand.u32 %v579, 4294901760
    %2203 = vmatpush.msra.mxu0 %v2202
    %v2204 = vand.u32 %v567, 4294901760
    %2205 = vmatpush.msra.mxu0 %v2204
    %v2206 = vand.u32 %v565, 4294901760
    %2207 = vmatpush.msra.mxu0 %v2206
    %v2208 = vand.u32 %v563, 4294901760
    %2209 = vmatpush.msra.mxu0 %v2208
    %v2210 = vand.u32 %v561, 4294901760
    %2211 = vmatpush.msra.mxu0 %v2210
    %v2212 = vand.u32 %v559, 4294901760
    %2213 = vmatpush.msra.mxu0 %v2212
    %v2214 = vand.u32 %v557, 4294901760
    %2215 = vmatpush.msra.mxu0 %v2214
    %v2216 = vand.u32 %v555, 4294901760
    %2217 = vmatpush.msra.mxu0 %v2216
    %v2218 = vand.u32 %v553, 4294901760
    %2219 = vmatpush.msra.mxu0 %v2218
    %v2220 = vand.u32 %v572, 4294901760
    %v2221 = vsub.f32 %v572, %v2220
    %v2222 = vand.u32 %v2221, 4294901760
    %v2223 = vsub.f32 %v2221, %v2222
    %v2224 = vand.u32 %v2223, 4294901760
    %2225 = vmatmul.f32.gmra.mxu0 %v2224
    %v2226 = vpop.f32.mrf.mxu0
    %v2227 = vadd.f32 %v2193, %v2226
    %2228 = vdwg.mxu0
    %2229 = vmatpush.msra.mxu0 0.0
    %2230 = vmatpush.msra.mxu0 0.0
    %2231 = vmatpush.msra.mxu0 0.0
    %2232 = vmatpush.msra.mxu0 0.0
    %2233 = vmatpush.msra.mxu0 0.0
    %2234 = vmatpush.msra.mxu0 0.0
    %2235 = vmatpush.msra.mxu0 0.0
    %v2236 = vand.u32 %v579, 4294901760
    %v2237 = vsub.f32 %v579, %v2236
    %v2238 = vand.u32 %v2237, 4294901760
    %v2239 = vsub.f32 %v2237, %v2238
    %v2240 = vand.u32 %v2239, 4294901760
    %2241 = vmatpush.msra.mxu0 %v2240
    %v2242 = vand.u32 %v567, 4294901760
    %v2243 = vsub.f32 %v567, %v2242
    %v2244 = vand.u32 %v2243, 4294901760
    %v2245 = vsub.f32 %v2243, %v2244
    %v2246 = vand.u32 %v2245, 4294901760
    %2247 = vmatpush.msra.mxu0 %v2246
    %v2248 = vand.u32 %v565, 4294901760
    %v2249 = vsub.f32 %v565, %v2248
    %v2250 = vand.u32 %v2249, 4294901760
    %v2251 = vsub.f32 %v2249, %v2250
    %v2252 = vand.u32 %v2251, 4294901760
    %2253 = vmatpush.msra.mxu0 %v2252
    %v2254 = vand.u32 %v563, 4294901760
    %v2255 = vsub.f32 %v563, %v2254
    %v2256 = vand.u32 %v2255, 4294901760
    %v2257 = vsub.f32 %v2255, %v2256
    %v2258 = vand.u32 %v2257, 4294901760
    %2259 = vmatpush.msra.mxu0 %v2258
    %v2260 = vand.u32 %v561, 4294901760
    %v2261 = vsub.f32 %v561, %v2260
    %v2262 = vand.u32 %v2261, 4294901760
    %v2263 = vsub.f32 %v2261, %v2262
    %v2264 = vand.u32 %v2263, 4294901760
    %2265 = vmatpush.msra.mxu0 %v2264
    %v2266 = vand.u32 %v559, 4294901760
    %v2267 = vsub.f32 %v559, %v2266
    %v2268 = vand.u32 %v2267, 4294901760
    %v2269 = vsub.f32 %v2267, %v2268
    %v2270 = vand.u32 %v2269, 4294901760
    %2271 = vmatpush.msra.mxu0 %v2270
    %v2272 = vand.u32 %v557, 4294901760
    %v2273 = vsub.f32 %v557, %v2272
    %v2274 = vand.u32 %v2273, 4294901760
    %v2275 = vsub.f32 %v2273, %v2274
    %v2276 = vand.u32 %v2275, 4294901760
    %2277 = vmatpush.msra.mxu0 %v2276
    %v2278 = vand.u32 %v555, 4294901760
    %v2279 = vsub.f32 %v555, %v2278
    %v2280 = vand.u32 %v2279, 4294901760
    %v2281 = vsub.f32 %v2279, %v2280
    %v2282 = vand.u32 %v2281, 4294901760
    %2283 = vmatpush.msra.mxu0 %v2282
    %v2284 = vand.u32 %v553, 4294901760
    %v2285 = vsub.f32 %v553, %v2284
    %v2286 = vand.u32 %v2285, 4294901760
    %v2287 = vsub.f32 %v2285, %v2286
    %v2288 = vand.u32 %v2287, 4294901760
    %2289 = vmatpush.msra.mxu0 %v2288
    %v2290 = vand.u32 %v572, 4294901760
    %2291 = vmatmul.f32.gmra.mxu0 %v2290
    %v2292 = vpop.f32.mrf.mxu0
    %v2293 = vadd.f32 %v2227, %v2292
    %2294 = vdwg.mxu0
    %2295 = vmatpush.msra.mxu0 0.0
    %2296 = vmatpush.msra.mxu0 0.0
    %2297 = vmatpush.msra.mxu0 0.0
    %2298 = vmatpush.msra.mxu0 0.0
    %2299 = vmatpush.msra.mxu0 0.0
    %2300 = vmatpush.msra.mxu0 0.0
    %2301 = vmatpush.msra.mxu0 0.0
    %v2302 = vand.u32 %v579, 4294901760
    %v2303 = vsub.f32 %v579, %v2302
    %2304 = vmatpush.msra.mxu0 %v2303
    %v2305 = vand.u32 %v567, 4294901760
    %v2306 = vsub.f32 %v567, %v2305
    %2307 = vmatpush.msra.mxu0 %v2306
    %v2308 = vand.u32 %v565, 4294901760
    %v2309 = vsub.f32 %v565, %v2308
    %2310 = vmatpush.msra.mxu0 %v2309
    %v2311 = vand.u32 %v563, 4294901760
    %v2312 = vsub.f32 %v563, %v2311
    %2313 = vmatpush.msra.mxu0 %v2312
    %v2314 = vand.u32 %v561, 4294901760
    %v2315 = vsub.f32 %v561, %v2314
    %2316 = vmatpush.msra.mxu0 %v2315
    %v2317 = vand.u32 %v559, 4294901760
    %v2318 = vsub.f32 %v559, %v2317
    %2319 = vmatpush.msra.mxu0 %v2318
    %v2320 = vand.u32 %v557, 4294901760
    %v2321 = vsub.f32 %v557, %v2320
    %2322 = vmatpush.msra.mxu0 %v2321
    %v2323 = vand.u32 %v555, 4294901760
    %v2324 = vsub.f32 %v555, %v2323
    %2325 = vmatpush.msra.mxu0 %v2324
    %v2326 = vand.u32 %v553, 4294901760
    %v2327 = vsub.f32 %v553, %v2326
    %2328 = vmatpush.msra.mxu0 %v2327
    %v2329 = vand.u32 %v572, 4294901760
    %v2330 = vsub.f32 %v572, %v2329
    %2331 = vmatmul.f32.gmra.mxu0 %v2330
    %v2332 = vpop.f32.mrf.mxu0
    %v2333 = vadd.f32 %v2293, %v2332
    %2334 = vdwg.mxu0
    %2335 = vmatpush.msra.mxu0 0.0
    %2336 = vmatpush.msra.mxu0 0.0
    %2337 = vmatpush.msra.mxu0 0.0
    %2338 = vmatpush.msra.mxu0 0.0
    %2339 = vmatpush.msra.mxu0 0.0
    %2340 = vmatpush.msra.mxu0 0.0
    %2341 = vmatpush.msra.mxu0 0.0
    %v2342 = vand.u32 %v579, 4294901760
    %2343 = vmatpush.msra.mxu0 %v2342
    %v2344 = vand.u32 %v567, 4294901760
    %2345 = vmatpush.msra.mxu0 %v2344
    %v2346 = vand.u32 %v565, 4294901760
    %2347 = vmatpush.msra.mxu0 %v2346
    %v2348 = vand.u32 %v563, 4294901760
    %2349 = vmatpush.msra.mxu0 %v2348
    %v2350 = vand.u32 %v561, 4294901760
    %2351 = vmatpush.msra.mxu0 %v2350
    %v2352 = vand.u32 %v559, 4294901760
    %2353 = vmatpush.msra.mxu0 %v2352
    %v2354 = vand.u32 %v557, 4294901760
    %2355 = vmatpush.msra.mxu0 %v2354
    %v2356 = vand.u32 %v555, 4294901760
    %2357 = vmatpush.msra.mxu0 %v2356
    %v2358 = vand.u32 %v553, 4294901760
    %2359 = vmatpush.msra.mxu0 %v2358
    %v2360 = vand.u32 %v572, 4294901760
    %v2361 = vsub.f32 %v572, %v2360
    %v2362 = vand.u32 %v2361, 4294901760
    %2363 = vmatmul.f32.gmra.mxu0 %v2362
    %v2364 = vpop.f32.mrf.mxu0
    %v2365 = vadd.f32 %v2333, %v2364
    %2366 = vdwg.mxu0
    %2367 = vmatpush.msra.mxu0 0.0
    %2368 = vmatpush.msra.mxu0 0.0
    %2369 = vmatpush.msra.mxu0 0.0
    %2370 = vmatpush.msra.mxu0 0.0
    %2371 = vmatpush.msra.mxu0 0.0
    %2372 = vmatpush.msra.mxu0 0.0
    %2373 = vmatpush.msra.mxu0 0.0
    %v2374 = vand.u32 %v579, 4294901760
    %v2375 = vsub.f32 %v579, %v2374
    %v2376 = vand.u32 %v2375, 4294901760
    %2377 = vmatpush.msra.mxu0 %v2376
    %v2378 = vand.u32 %v567, 4294901760
    %v2379 = vsub.f32 %v567, %v2378
    %v2380 = vand.u32 %v2379, 4294901760
    %2381 = vmatpush.msra.mxu0 %v2380
    %v2382 = vand.u32 %v565, 4294901760
    %v2383 = vsub.f32 %v565, %v2382
    %v2384 = vand.u32 %v2383, 4294901760
    %2385 = vmatpush.msra.mxu0 %v2384
    %v2386 = vand.u32 %v563, 4294901760
    %v2387 = vsub.f32 %v563, %v2386
    %v2388 = vand.u32 %v2387, 4294901760
    %2389 = vmatpush.msra.mxu0 %v2388
    %v2390 = vand.u32 %v561, 4294901760
    %v2391 = vsub.f32 %v561, %v2390
    %v2392 = vand.u32 %v2391, 4294901760
    %2393 = vmatpush.msra.mxu0 %v2392
    %v2394 = vand.u32 %v559, 4294901760
    %v2395 = vsub.f32 %v559, %v2394
    %v2396 = vand.u32 %v2395, 4294901760
    %2397 = vmatpush.msra.mxu0 %v2396
    %v2398 = vand.u32 %v557, 4294901760
    %v2399 = vsub.f32 %v557, %v2398
    %v2400 = vand.u32 %v2399, 4294901760
    %2401 = vmatpush.msra.mxu0 %v2400
    %v2402 = vand.u32 %v555, 4294901760
    %v2403 = vsub.f32 %v555, %v2402
    %v2404 = vand.u32 %v2403, 4294901760
    %2405 = vmatpush.msra.mxu0 %v2404
    %v2406 = vand.u32 %v553, 4294901760
    %v2407 = vsub.f32 %v553, %v2406
    %v2408 = vand.u32 %v2407, 4294901760
    %2409 = vmatpush.msra.mxu0 %v2408
    %v2410 = vand.u32 %v572, 4294901760
    %2411 = vmatmul.f32.gmra.mxu0 %v2410
    %v2412 = vpop.f32.mrf.mxu0
    %v2413 = vadd.f32 %v2365, %v2412
    %2414 = vdwg.mxu0
    %2415 = vmatpush.msra.mxu0 0.0
    %2416 = vmatpush.msra.mxu0 0.0
    %2417 = vmatpush.msra.mxu0 0.0
    %2418 = vmatpush.msra.mxu0 0.0
    %2419 = vmatpush.msra.mxu0 0.0
    %2420 = vmatpush.msra.mxu0 0.0
    %2421 = vmatpush.msra.mxu0 0.0
    %v2422 = vand.u32 %v579, 4294901760
    %2423 = vmatpush.msra.mxu0 %v2422
    %v2424 = vand.u32 %v567, 4294901760
    %2425 = vmatpush.msra.mxu0 %v2424
    %v2426 = vand.u32 %v565, 4294901760
    %2427 = vmatpush.msra.mxu0 %v2426
    %v2428 = vand.u32 %v563, 4294901760
    %2429 = vmatpush.msra.mxu0 %v2428
    %v2430 = vand.u32 %v561, 4294901760
    %2431 = vmatpush.msra.mxu0 %v2430
    %v2432 = vand.u32 %v559, 4294901760
    %2433 = vmatpush.msra.mxu0 %v2432
    %v2434 = vand.u32 %v557, 4294901760
    %2435 = vmatpush.msra.mxu0 %v2434
    %v2436 = vand.u32 %v555, 4294901760
    %2437 = vmatpush.msra.mxu0 %v2436
    %v2438 = vand.u32 %v553, 4294901760
    %2439 = vmatpush.msra.mxu0 %v2438
    %v2440 = vand.u32 %v572, 4294901760
    %2441 = vmatmul.f32.gmra.mxu0 %v2440
    %v2442 = vpop.f32.mrf.mxu0
    %v2443 = vadd.f32 %v2413, %v2442
    %2444 = vdwg.mxu0
    %v2445 = vmax.f32 %v1511, 0.0
    %v2446 = vmax.f32 %v2443, 0.0
    %v2447 = vld [vmem:[%s3] sm:$0xff]
    %v2448 = vld [vmem:[%s3 + $0x8] sm:$0xff]
    %v2449 = vld [vmem:[%s3 + $0x10] sm:$0xff]
    %v2450 = vld [vmem:[%s3 + $0x18] sm:$0xff]
    %v2451 = vld [vmem:[%s3 + $0x20] sm:$0xff]
    %v2452 = vld [vmem:[%s3 + $0x28] sm:$0xff]
    %v2453 = vld [vmem:[%s3 + $0x30] sm:$0xff]
    %v2454 = vld [vmem:[%s3 + $0x38] sm:$0xff]
    %v2455 = vld [vmem:[%s3 + $0x40] sm:$0xff]
    %v2456 = vld [vmem:[%s3 + $0x48] sm:$0xff]
    %v2457 = vld [vmem:[%s3 + $0x50] sm:$0xff]
    %v2458 = vld [vmem:[%s3 + $0x58] sm:$0xff]
    %v2459 = vld [vmem:[%s3 + $0x60] sm:$0xff]
    %v2460 = vld [vmem:[%s3 + $0x68] sm:$0xff]
    %v2461 = vld [vmem:[%s3 + $0x70] sm:$0xff]
    %v2462 = vld [vmem:[%s3 + $0x78] sm:$0xff]
    %v2463 = vld [vmem:[%s3 + $0x80] sm:$0xff]
    %v2464 = vld [vmem:[%s3 + $0x88] sm:$0xff]
    %v2465 = vld [vmem:[%s3 + $0x90] sm:$0xff]
    %v2466 = vld [vmem:[%s3 + $0x98] sm:$0xff]
    %v2467 = vld [vmem:[%s3 + $0xa0] sm:$0xff]
    %v2468 = vld [vmem:[%s3 + $0xa8] sm:$0xff]
    %v2469 = vld [vmem:[%s3 + $0xb0] sm:$0xff]
    %v2470 = vld [vmem:[%s3 + $0xb8] sm:$0xff]
    %v2471 = vld [vmem:[%s3 + $0xc0] sm:$0xff]
    %v2472 = vld [vmem:[%s3 + $0xc8] sm:$0xff]
    %v2473 = vld [vmem:[%s3 + $0xd0] sm:$0xff]
    %v2474 = vld [vmem:[%s3 + $0xd8] sm:$0xff]
    %v2475 = vld [vmem:[%s3 + $0xe0] sm:$0xff]
    %v2476 = vld [vmem:[%s3 + $0xe8] sm:$0xff]
    %v2477 = vld [vmem:[%s3 + $0xf0] sm:$0xff]
    %v2478 = vld [vmem:[%s3 + $0xf8] sm:$0xff]
    %v2479 = vld [vmem:[%s3 + $0x100] sm:$0xff]
    %v2480 = vld [vmem:[%s3 + $0x108] sm:$0xff]
    %v2481 = vld [vmem:[%s3 + $0x110] sm:$0xff]
    %v2482 = vld [vmem:[%s3 + $0x118] sm:$0xff]
    %v2483 = vld [vmem:[%s3 + $0x120] sm:$0xff]
    %v2484 = vld [vmem:[%s3 + $0x128] sm:$0xff]
    %v2485 = vld [vmem:[%s3 + $0x130] sm:$0xff]
    %v2486 = vld [vmem:[%s3 + $0x138] sm:$0xff]
    %v2487 = vld [vmem:[%s3 + $0x140] sm:$0x1]
    %v2488 = vld [vmem:[%s3 + $0x148] sm:$0x1]
    %vm2489 = vcmask 269312
    %v2491 = vsel %vm2489, %v2446, 0
    %v2494 = vsel %vm574, %v2487, 0
    %v2497 = vsel %vm574, %v2488, 0
    %v2499 = vand.u32 %v2477, 4294901760
    %2500 = vmatpush.msra.mxu0 %v2499
    %v2501 = vand.u32 %v2475, 4294901760
    %2502 = vmatpush.msra.mxu0 %v2501
    %v2503 = vand.u32 %v2473, 4294901760
    %2504 = vmatpush.msra.mxu0 %v2503
    %v2505 = vand.u32 %v2471, 4294901760
    %2506 = vmatpush.msra.mxu0 %v2505
    %v2507 = vand.u32 %v2469, 4294901760
    %2508 = vmatpush.msra.mxu0 %v2507
    %v2509 = vand.u32 %v2467, 4294901760
    %2510 = vmatpush.msra.mxu0 %v2509
    %v2511 = vand.u32 %v2465, 4294901760
    %2512 = vmatpush.msra.mxu0 %v2511
    %v2513 = vand.u32 %v2463, 4294901760
    %2514 = vmatpush.msra.mxu0 %v2513
    %v2515 = vand.u32 %v2461, 4294901760
    %2516 = vmatpush.msra.mxu0 %v2515
    %v2517 = vand.u32 %v2459, 4294901760
    %2518 = vmatpush.msra.mxu0 %v2517
    %v2519 = vand.u32 %v2457, 4294901760
    %2520 = vmatpush.msra.mxu0 %v2519
    %v2521 = vand.u32 %v2455, 4294901760
    %2522 = vmatpush.msra.mxu0 %v2521
    %v2523 = vand.u32 %v2453, 4294901760
    %2524 = vmatpush.msra.mxu0 %v2523
    %v2525 = vand.u32 %v2451, 4294901760
    %2526 = vmatpush.msra.mxu0 %v2525
    %v2527 = vand.u32 %v2449, 4294901760
    %2528 = vmatpush.msra.mxu0 %v2527
    %v2529 = vand.u32 %v2447, 4294901760
    %2530 = vmatpush.msra.mxu0 %v2529
    %v2531 = vand.u32 %v2445, 4294901760
    %v2532 = vsub.f32 %v2445, %v2531
    %v2533 = vand.u32 %v2532, 4294901760
    %v2534 = vsub.f32 %v2532, %v2533
    %v2535 = vand.u32 %v2534, 4294901760
    %2536 = vmatmul.f32.gmra.mxu0 %v2535
    %v2537 = vpop.f32.mrf.mxu0
    %v2538 = vadd.f32 0.0, %v2537
    %2539 = vdwg.mxu0
    %v2540 = vand.u32 %v2477, 4294901760
    %v2541 = vsub.f32 %v2477, %v2540
    %v2542 = vand.u32 %v2541, 4294901760
    %v2543 = vsub.f32 %v2541, %v2542
    %v2544 = vand.u32 %v2543, 4294901760
    %2545 = vmatpush.msra.mxu0 %v2544
    %v2546 = vand.u32 %v2475, 4294901760
    %v2547 = vsub.f32 %v2475, %v2546
    %v2548 = vand.u32 %v2547, 4294901760
    %v2549 = vsub.f32 %v2547, %v2548
    %v2550 = vand.u32 %v2549, 4294901760
    %2551 = vmatpush.msra.mxu0 %v2550
    %v2552 = vand.u32 %v2473, 4294901760
    %v2553 = vsub.f32 %v2473, %v2552
    %v2554 = vand.u32 %v2553, 4294901760
    %v2555 = vsub.f32 %v2553, %v2554
    %v2556 = vand.u32 %v2555, 4294901760
    %2557 = vmatpush.msra.mxu0 %v2556
    %v2558 = vand.u32 %v2471, 4294901760
    %v2559 = vsub.f32 %v2471, %v2558
    %v2560 = vand.u32 %v2559, 4294901760
    %v2561 = vsub.f32 %v2559, %v2560
    %v2562 = vand.u32 %v2561, 4294901760
    %2563 = vmatpush.msra.mxu0 %v2562
    %v2564 = vand.u32 %v2469, 4294901760
    %v2565 = vsub.f32 %v2469, %v2564
    %v2566 = vand.u32 %v2565, 4294901760
    %v2567 = vsub.f32 %v2565, %v2566
    %v2568 = vand.u32 %v2567, 4294901760
    %2569 = vmatpush.msra.mxu0 %v2568
    %v2570 = vand.u32 %v2467, 4294901760
    %v2571 = vsub.f32 %v2467, %v2570
    %v2572 = vand.u32 %v2571, 4294901760
    %v2573 = vsub.f32 %v2571, %v2572
    %v2574 = vand.u32 %v2573, 4294901760
    %2575 = vmatpush.msra.mxu0 %v2574
    %v2576 = vand.u32 %v2465, 4294901760
    %v2577 = vsub.f32 %v2465, %v2576
    %v2578 = vand.u32 %v2577, 4294901760
    %v2579 = vsub.f32 %v2577, %v2578
    %v2580 = vand.u32 %v2579, 4294901760
    %2581 = vmatpush.msra.mxu0 %v2580
    %v2582 = vand.u32 %v2463, 4294901760
    %v2583 = vsub.f32 %v2463, %v2582
    %v2584 = vand.u32 %v2583, 4294901760
    %v2585 = vsub.f32 %v2583, %v2584
    %v2586 = vand.u32 %v2585, 4294901760
    %2587 = vmatpush.msra.mxu0 %v2586
    %v2588 = vand.u32 %v2461, 4294901760
    %v2589 = vsub.f32 %v2461, %v2588
    %v2590 = vand.u32 %v2589, 4294901760
    %v2591 = vsub.f32 %v2589, %v2590
    %v2592 = vand.u32 %v2591, 4294901760
    %2593 = vmatpush.msra.mxu0 %v2592
    %v2594 = vand.u32 %v2459, 4294901760
    %v2595 = vsub.f32 %v2459, %v2594
    %v2596 = vand.u32 %v2595, 4294901760
    %v2597 = vsub.f32 %v2595, %v2596
    %v2598 = vand.u32 %v2597, 4294901760
    %2599 = vmatpush.msra.mxu0 %v2598
    %v2600 = vand.u32 %v2457, 4294901760
    %v2601 = vsub.f32 %v2457, %v2600
    %v2602 = vand.u32 %v2601, 4294901760
    %v2603 = vsub.f32 %v2601, %v2602
    %v2604 = vand.u32 %v2603, 4294901760
    %2605 = vmatpush.msra.mxu0 %v2604
    %v2606 = vand.u32 %v2455, 4294901760
    %v2607 = vsub.f32 %v2455, %v2606
    %v2608 = vand.u32 %v2607, 4294901760
    %v2609 = vsub.f32 %v2607, %v2608
    %v2610 = vand.u32 %v2609, 4294901760
    %2611 = vmatpush.msra.mxu0 %v2610
    %v2612 = vand.u32 %v2453, 4294901760
    %v2613 = vsub.f32 %v2453, %v2612
    %v2614 = vand.u32 %v2613, 4294901760
    %v2615 = vsub.f32 %v2613, %v2614
    %v2616 = vand.u32 %v2615, 4294901760
    %2617 = vmatpush.msra.mxu0 %v2616
    %v2618 = vand.u32 %v2451, 4294901760
    %v2619 = vsub.f32 %v2451, %v2618
    %v2620 = vand.u32 %v2619, 4294901760
    %v2621 = vsub.f32 %v2619, %v2620
    %v2622 = vand.u32 %v2621, 4294901760
    %2623 = vmatpush.msra.mxu0 %v2622
    %v2624 = vand.u32 %v2449, 4294901760
    %v2625 = vsub.f32 %v2449, %v2624
    %v2626 = vand.u32 %v2625, 4294901760
    %v2627 = vsub.f32 %v2625, %v2626
    %v2628 = vand.u32 %v2627, 4294901760
    %2629 = vmatpush.msra.mxu0 %v2628
    %v2630 = vand.u32 %v2447, 4294901760
    %v2631 = vsub.f32 %v2447, %v2630
    %v2632 = vand.u32 %v2631, 4294901760
    %v2633 = vsub.f32 %v2631, %v2632
    %v2634 = vand.u32 %v2633, 4294901760
    %2635 = vmatpush.msra.mxu0 %v2634
    %v2636 = vand.u32 %v2445, 4294901760
    %2637 = vmatmul.f32.gmra.mxu0 %v2636
    %v2638 = vpop.f32.mrf.mxu0
    %v2639 = vadd.f32 %v2538, %v2638
    %2640 = vdwg.mxu0
    %v2641 = vand.u32 %v2477, 4294901760
    %v2642 = vsub.f32 %v2477, %v2641
    %2643 = vmatpush.msra.mxu0 %v2642
    %v2644 = vand.u32 %v2475, 4294901760
    %v2645 = vsub.f32 %v2475, %v2644
    %2646 = vmatpush.msra.mxu0 %v2645
    %v2647 = vand.u32 %v2473, 4294901760
    %v2648 = vsub.f32 %v2473, %v2647
    %2649 = vmatpush.msra.mxu0 %v2648
    %v2650 = vand.u32 %v2471, 4294901760
    %v2651 = vsub.f32 %v2471, %v2650
    %2652 = vmatpush.msra.mxu0 %v2651
    %v2653 = vand.u32 %v2469, 4294901760
    %v2654 = vsub.f32 %v2469, %v2653
    %2655 = vmatpush.msra.mxu0 %v2654
    %v2656 = vand.u32 %v2467, 4294901760
    %v2657 = vsub.f32 %v2467, %v2656
    %2658 = vmatpush.msra.mxu0 %v2657
    %v2659 = vand.u32 %v2465, 4294901760
    %v2660 = vsub.f32 %v2465, %v2659
    %2661 = vmatpush.msra.mxu0 %v2660
    %v2662 = vand.u32 %v2463, 4294901760
    %v2663 = vsub.f32 %v2463, %v2662
    %2664 = vmatpush.msra.mxu0 %v2663
    %v2665 = vand.u32 %v2461, 4294901760
    %v2666 = vsub.f32 %v2461, %v2665
    %2667 = vmatpush.msra.mxu0 %v2666
    %v2668 = vand.u32 %v2459, 4294901760
    %v2669 = vsub.f32 %v2459, %v2668
    %2670 = vmatpush.msra.mxu0 %v2669
    %v2671 = vand.u32 %v2457, 4294901760
    %v2672 = vsub.f32 %v2457, %v2671
    %2673 = vmatpush.msra.mxu0 %v2672
    %v2674 = vand.u32 %v2455, 4294901760
    %v2675 = vsub.f32 %v2455, %v2674
    %2676 = vmatpush.msra.mxu0 %v2675
    %v2677 = vand.u32 %v2453, 4294901760
    %v2678 = vsub.f32 %v2453, %v2677
    %2679 = vmatpush.msra.mxu0 %v2678
    %v2680 = vand.u32 %v2451, 4294901760
    %v2681 = vsub.f32 %v2451, %v2680
    %2682 = vmatpush.msra.mxu0 %v2681
    %v2683 = vand.u32 %v2449, 4294901760
    %v2684 = vsub.f32 %v2449, %v2683
    %2685 = vmatpush.msra.mxu0 %v2684
    %v2686 = vand.u32 %v2447, 4294901760
    %v2687 = vsub.f32 %v2447, %v2686
    %2688 = vmatpush.msra.mxu0 %v2687
    %v2689 = vand.u32 %v2445, 4294901760
    %v2690 = vsub.f32 %v2445, %v2689
    %2691 = vmatmul.f32.gmra.mxu0 %v2690
    %v2692 = vpop.f32.mrf.mxu0
    %v2693 = vadd.f32 %v2639, %v2692
    %2694 = vdwg.mxu0
    %v2695 = vand.u32 %v2477, 4294901760
    %2696 = vmatpush.msra.mxu0 %v2695
    %v2697 = vand.u32 %v2475, 4294901760
    %2698 = vmatpush.msra.mxu0 %v2697
    %v2699 = vand.u32 %v2473, 4294901760
    %2700 = vmatpush.msra.mxu0 %v2699
    %v2701 = vand.u32 %v2471, 4294901760
    %2702 = vmatpush.msra.mxu0 %v2701
    %v2703 = vand.u32 %v2469, 4294901760
    %2704 = vmatpush.msra.mxu0 %v2703
    %v2705 = vand.u32 %v2467, 4294901760
    %2706 = vmatpush.msra.mxu0 %v2705
    %v2707 = vand.u32 %v2465, 4294901760
    %2708 = vmatpush.msra.mxu0 %v2707
    %v2709 = vand.u32 %v2463, 4294901760
    %2710 = vmatpush.msra.mxu0 %v2709
    %v2711 = vand.u32 %v2461, 4294901760
    %2712 = vmatpush.msra.mxu0 %v2711
    %v2713 = vand.u32 %v2459, 4294901760
    %2714 = vmatpush.msra.mxu0 %v2713
    %v2715 = vand.u32 %v2457, 4294901760
    %2716 = vmatpush.msra.mxu0 %v2715
    %v2717 = vand.u32 %v2455, 4294901760
    %2718 = vmatpush.msra.mxu0 %v2717
    %v2719 = vand.u32 %v2453, 4294901760
    %2720 = vmatpush.msra.mxu0 %v2719
    %v2721 = vand.u32 %v2451, 4294901760
    %2722 = vmatpush.msra.mxu0 %v2721
    %v2723 = vand.u32 %v2449, 4294901760
    %2724 = vmatpush.msra.mxu0 %v2723
    %v2725 = vand.u32 %v2447, 4294901760
    %2726 = vmatpush.msra.mxu0 %v2725
    %v2727 = vand.u32 %v2445, 4294901760
    %v2728 = vsub.f32 %v2445, %v2727
    %v2729 = vand.u32 %v2728, 4294901760
    %2730 = vmatmul.f32.gmra.mxu0 %v2729
    %v2731 = vpop.f32.mrf.mxu0
    %v2732 = vadd.f32 %v2693, %v2731
    %2733 = vdwg.mxu0
    %v2734 = vand.u32 %v2477, 4294901760
    %v2735 = vsub.f32 %v2477, %v2734
    %v2736 = vand.u32 %v2735, 4294901760
    %2737 = vmatpush.msra.mxu0 %v2736
    %v2738 = vand.u32 %v2475, 4294901760
    %v2739 = vsub.f32 %v2475, %v2738
    %v2740 = vand.u32 %v2739, 4294901760
    %2741 = vmatpush.msra.mxu0 %v2740
    %v2742 = vand.u32 %v2473, 4294901760
    %v2743 = vsub.f32 %v2473, %v2742
    %v2744 = vand.u32 %v2743, 4294901760
    %2745 = vmatpush.msra.mxu0 %v2744
    %v2746 = vand.u32 %v2471, 4294901760
    %v2747 = vsub.f32 %v2471, %v2746
    %v2748 = vand.u32 %v2747, 4294901760
    %2749 = vmatpush.msra.mxu0 %v2748
    %v2750 = vand.u32 %v2469, 4294901760
    %v2751 = vsub.f32 %v2469, %v2750
    %v2752 = vand.u32 %v2751, 4294901760
    %2753 = vmatpush.msra.mxu0 %v2752
    %v2754 = vand.u32 %v2467, 4294901760
    %v2755 = vsub.f32 %v2467, %v2754
    %v2756 = vand.u32 %v2755, 4294901760
    %2757 = vmatpush.msra.mxu0 %v2756
    %v2758 = vand.u32 %v2465, 4294901760
    %v2759 = vsub.f32 %v2465, %v2758
    %v2760 = vand.u32 %v2759, 4294901760
    %2761 = vmatpush.msra.mxu0 %v2760
    %v2762 = vand.u32 %v2463, 4294901760
    %v2763 = vsub.f32 %v2463, %v2762
    %v2764 = vand.u32 %v2763, 4294901760
    %2765 = vmatpush.msra.mxu0 %v2764
    %v2766 = vand.u32 %v2461, 4294901760
    %v2767 = vsub.f32 %v2461, %v2766
    %v2768 = vand.u32 %v2767, 4294901760
    %2769 = vmatpush.msra.mxu0 %v2768
    %v2770 = vand.u32 %v2459, 4294901760
    %v2771 = vsub.f32 %v2459, %v2770
    %v2772 = vand.u32 %v2771, 4294901760
    %2773 = vmatpush.msra.mxu0 %v2772
    %v2774 = vand.u32 %v2457, 4294901760
    %v2775 = vsub.f32 %v2457, %v2774
    %v2776 = vand.u32 %v2775, 4294901760
    %2777 = vmatpush.msra.mxu0 %v2776
    %v2778 = vand.u32 %v2455, 4294901760
    %v2779 = vsub.f32 %v2455, %v2778
    %v2780 = vand.u32 %v2779, 4294901760
    %2781 = vmatpush.msra.mxu0 %v2780
    %v2782 = vand.u32 %v2453, 4294901760
    %v2783 = vsub.f32 %v2453, %v2782
    %v2784 = vand.u32 %v2783, 4294901760
    %2785 = vmatpush.msra.mxu0 %v2784
    %v2786 = vand.u32 %v2451, 4294901760
    %v2787 = vsub.f32 %v2451, %v2786
    %v2788 = vand.u32 %v2787, 4294901760
    %2789 = vmatpush.msra.mxu0 %v2788
    %v2790 = vand.u32 %v2449, 4294901760
    %v2791 = vsub.f32 %v2449, %v2790
    %v2792 = vand.u32 %v2791, 4294901760
    %2793 = vmatpush.msra.mxu0 %v2792
    %v2794 = vand.u32 %v2447, 4294901760
    %v2795 = vsub.f32 %v2447, %v2794
    %v2796 = vand.u32 %v2795, 4294901760
    %2797 = vmatpush.msra.mxu0 %v2796
    %v2798 = vand.u32 %v2445, 4294901760
    %2799 = vmatmul.f32.gmra.mxu0 %v2798
    %v2800 = vpop.f32.mrf.mxu0
    %v2801 = vadd.f32 %v2732, %v2800
    %2802 = vdwg.mxu0
    %v2803 = vand.u32 %v2477, 4294901760
    %2804 = vmatpush.msra.mxu0 %v2803
    %v2805 = vand.u32 %v2475, 4294901760
    %2806 = vmatpush.msra.mxu0 %v2805
    %v2807 = vand.u32 %v2473, 4294901760
    %2808 = vmatpush.msra.mxu0 %v2807
    %v2809 = vand.u32 %v2471, 4294901760
    %2810 = vmatpush.msra.mxu0 %v2809
    %v2811 = vand.u32 %v2469, 4294901760
    %2812 = vmatpush.msra.mxu0 %v2811
    %v2813 = vand.u32 %v2467, 4294901760
    %2814 = vmatpush.msra.mxu0 %v2813
    %v2815 = vand.u32 %v2465, 4294901760
    %2816 = vmatpush.msra.mxu0 %v2815
    %v2817 = vand.u32 %v2463, 4294901760
    %2818 = vmatpush.msra.mxu0 %v2817
    %v2819 = vand.u32 %v2461, 4294901760
    %2820 = vmatpush.msra.mxu0 %v2819
    %v2821 = vand.u32 %v2459, 4294901760
    %2822 = vmatpush.msra.mxu0 %v2821
    %v2823 = vand.u32 %v2457, 4294901760
    %2824 = vmatpush.msra.mxu0 %v2823
    %v2825 = vand.u32 %v2455, 4294901760
    %2826 = vmatpush.msra.mxu0 %v2825
    %v2827 = vand.u32 %v2453, 4294901760
    %2828 = vmatpush.msra.mxu0 %v2827
    %v2829 = vand.u32 %v2451, 4294901760
    %2830 = vmatpush.msra.mxu0 %v2829
    %v2831 = vand.u32 %v2449, 4294901760
    %2832 = vmatpush.msra.mxu0 %v2831
    %v2833 = vand.u32 %v2447, 4294901760
    %2834 = vmatpush.msra.mxu0 %v2833
    %v2835 = vand.u32 %v2445, 4294901760
    %2836 = vmatmul.f32.gmra.mxu0 %v2835
    %v2837 = vpop.f32.mrf.mxu0
    %v2838 = vadd.f32 %v2801, %v2837
    %2839 = vdwg.mxu0
    %2840 = vmatpush.msra.mxu0 0.0
    %2841 = vmatpush.msra.mxu0 0.0
    %2842 = vmatpush.msra.mxu0 0.0
    %2843 = vmatpush.msra.mxu0 0.0
    %2844 = vmatpush.msra.mxu0 0.0
    %2845 = vmatpush.msra.mxu0 0.0
    %2846 = vmatpush.msra.mxu0 0.0
    %2847 = vmatpush.msra.mxu0 0.0
    %2848 = vmatpush.msra.mxu0 0.0
    %2849 = vmatpush.msra.mxu0 0.0
    %2850 = vmatpush.msra.mxu0 0.0
    %v2851 = vand.u32 %v2494, 4294901760
    %2852 = vmatpush.msra.mxu0 %v2851
    %v2853 = vand.u32 %v2485, 4294901760
    %2854 = vmatpush.msra.mxu0 %v2853
    %v2855 = vand.u32 %v2483, 4294901760
    %2856 = vmatpush.msra.mxu0 %v2855
    %v2857 = vand.u32 %v2481, 4294901760
    %2858 = vmatpush.msra.mxu0 %v2857
    %v2859 = vand.u32 %v2479, 4294901760
    %2860 = vmatpush.msra.mxu0 %v2859
    %v2861 = vand.u32 %v2491, 4294901760
    %v2862 = vsub.f32 %v2491, %v2861
    %v2863 = vand.u32 %v2862, 4294901760
    %v2864 = vsub.f32 %v2862, %v2863
    %v2865 = vand.u32 %v2864, 4294901760
    %2866 = vmatmul.f32.gmra.mxu0 %v2865
    %v2867 = vpop.f32.mrf.mxu0
    %v2868 = vadd.f32 %v2838, %v2867
    %2869 = vdwg.mxu0
    %2870 = vmatpush.msra.mxu0 0.0
    %2871 = vmatpush.msra.mxu0 0.0
    %2872 = vmatpush.msra.mxu0 0.0
    %2873 = vmatpush.msra.mxu0 0.0
    %2874 = vmatpush.msra.mxu0 0.0
    %2875 = vmatpush.msra.mxu0 0.0
    %2876 = vmatpush.msra.mxu0 0.0
    %2877 = vmatpush.msra.mxu0 0.0
    %2878 = vmatpush.msra.mxu0 0.0
    %2879 = vmatpush.msra.mxu0 0.0
    %2880 = vmatpush.msra.mxu0 0.0
    %v2881 = vand.u32 %v2494, 4294901760
    %v2882 = vsub.f32 %v2494, %v2881
    %v2883 = vand.u32 %v2882, 4294901760
    %v2884 = vsub.f32 %v2882, %v2883
    %v2885 = vand.u32 %v2884, 4294901760
    %2886 = vmatpush.msra.mxu0 %v2885
    %v2887 = vand.u32 %v2485, 4294901760
    %v2888 = vsub.f32 %v2485, %v2887
    %v2889 = vand.u32 %v2888, 4294901760
    %v2890 = vsub.f32 %v2888, %v2889
    %v2891 = vand.u32 %v2890, 4294901760
    %2892 = vmatpush.msra.mxu0 %v2891
    %v2893 = vand.u32 %v2483, 4294901760
    %v2894 = vsub.f32 %v2483, %v2893
    %v2895 = vand.u32 %v2894, 4294901760
    %v2896 = vsub.f32 %v2894, %v2895
    %v2897 = vand.u32 %v2896, 4294901760
    %2898 = vmatpush.msra.mxu0 %v2897
    %v2899 = vand.u32 %v2481, 4294901760
    %v2900 = vsub.f32 %v2481, %v2899
    %v2901 = vand.u32 %v2900, 4294901760
    %v2902 = vsub.f32 %v2900, %v2901
    %v2903 = vand.u32 %v2902, 4294901760
    %2904 = vmatpush.msra.mxu0 %v2903
    %v2905 = vand.u32 %v2479, 4294901760
    %v2906 = vsub.f32 %v2479, %v2905
    %v2907 = vand.u32 %v2906, 4294901760
    %v2908 = vsub.f32 %v2906, %v2907
    %v2909 = vand.u32 %v2908, 4294901760
    %2910 = vmatpush.msra.mxu0 %v2909
    %v2911 = vand.u32 %v2491, 4294901760
    %2912 = vmatmul.f32.gmra.mxu0 %v2911
    %v2913 = vpop.f32.mrf.mxu0
    %v2914 = vadd.f32 %v2868, %v2913
    %2915 = vdwg.mxu0
    %2916 = vmatpush.msra.mxu0 0.0
    %2917 = vmatpush.msra.mxu0 0.0
    %2918 = vmatpush.msra.mxu0 0.0
    %2919 = vmatpush.msra.mxu0 0.0
    %2920 = vmatpush.msra.mxu0 0.0
    %2921 = vmatpush.msra.mxu0 0.0
    %2922 = vmatpush.msra.mxu0 0.0
    %2923 = vmatpush.msra.mxu0 0.0
    %2924 = vmatpush.msra.mxu0 0.0
    %2925 = vmatpush.msra.mxu0 0.0
    %2926 = vmatpush.msra.mxu0 0.0
    %v2927 = vand.u32 %v2494, 4294901760
    %v2928 = vsub.f32 %v2494, %v2927
    %2929 = vmatpush.msra.mxu0 %v2928
    %v2930 = vand.u32 %v2485, 4294901760
    %v2931 = vsub.f32 %v2485, %v2930
    %2932 = vmatpush.msra.mxu0 %v2931
    %v2933 = vand.u32 %v2483, 4294901760
    %v2934 = vsub.f32 %v2483, %v2933
    %2935 = vmatpush.msra.mxu0 %v2934
    %v2936 = vand.u32 %v2481, 4294901760
    %v2937 = vsub.f32 %v2481, %v2936
    %2938 = vmatpush.msra.mxu0 %v2937
    %v2939 = vand.u32 %v2479, 4294901760
    %v2940 = vsub.f32 %v2479, %v2939
    %2941 = vmatpush.msra.mxu0 %v2940
    %v2942 = vand.u32 %v2491, 4294901760
    %v2943 = vsub.f32 %v2491, %v2942
    %2944 = vmatmul.f32.gmra.mxu0 %v2943
    %v2945 = vpop.f32.mrf.mxu0
    %v2946 = vadd.f32 %v2914, %v2945
    %2947 = vdwg.mxu0
    %2948 = vmatpush.msra.mxu0 0.0
    %2949 = vmatpush.msra.mxu0 0.0
    %2950 = vmatpush.msra.mxu0 0.0
    %2951 = vmatpush.msra.mxu0 0.0
    %2952 = vmatpush.msra.mxu0 0.0
    %2953 = vmatpush.msra.mxu0 0.0
    %2954 = vmatpush.msra.mxu0 0.0
    %2955 = vmatpush.msra.mxu0 0.0
    %2956 = vmatpush.msra.mxu0 0.0
    %2957 = vmatpush.msra.mxu0 0.0
    %2958 = vmatpush.msra.mxu0 0.0
    %v2959 = vand.u32 %v2494, 4294901760
    %2960 = vmatpush.msra.mxu0 %v2959
    %v2961 = vand.u32 %v2485, 4294901760
    %2962 = vmatpush.msra.mxu0 %v2961
    %v2963 = vand.u32 %v2483, 4294901760
    %2964 = vmatpush.msra.mxu0 %v2963
    %v2965 = vand.u32 %v2481, 4294901760
    %2966 = vmatpush.msra.mxu0 %v2965
    %v2967 = vand.u32 %v2479, 4294901760
    %2968 = vmatpush.msra.mxu0 %v2967
    %v2969 = vand.u32 %v2491, 4294901760
    %v2970 = vsub.f32 %v2491, %v2969
    %v2971 = vand.u32 %v2970, 4294901760
    %2972 = vmatmul.f32.gmra.mxu0 %v2971
    %v2973 = vpop.f32.mrf.mxu0
    %v2974 = vadd.f32 %v2946, %v2973
    %2975 = vdwg.mxu0
    %2976 = vmatpush.msra.mxu0 0.0
    %2977 = vmatpush.msra.mxu0 0.0
    %2978 = vmatpush.msra.mxu0 0.0
    %2979 = vmatpush.msra.mxu0 0.0
    %2980 = vmatpush.msra.mxu0 0.0
    %2981 = vmatpush.msra.mxu0 0.0
    %2982 = vmatpush.msra.mxu0 0.0
    %2983 = vmatpush.msra.mxu0 0.0
    %2984 = vmatpush.msra.mxu0 0.0
    %2985 = vmatpush.msra.mxu0 0.0
    %2986 = vmatpush.msra.mxu0 0.0
    %v2987 = vand.u32 %v2494, 4294901760
    %v2988 = vsub.f32 %v2494, %v2987
    %v2989 = vand.u32 %v2988, 4294901760
    %2990 = vmatpush.msra.mxu0 %v2989
    %v2991 = vand.u32 %v2485, 4294901760
    %v2992 = vsub.f32 %v2485, %v2991
    %v2993 = vand.u32 %v2992, 4294901760
    %2994 = vmatpush.msra.mxu0 %v2993
    %v2995 = vand.u32 %v2483, 4294901760
    %v2996 = vsub.f32 %v2483, %v2995
    %v2997 = vand.u32 %v2996, 4294901760
    %2998 = vmatpush.msra.mxu0 %v2997
    %v2999 = vand.u32 %v2481, 4294901760
    %v3000 = vsub.f32 %v2481, %v2999
    %v3001 = vand.u32 %v3000, 4294901760
    %3002 = vmatpush.msra.mxu0 %v3001
    %v3003 = vand.u32 %v2479, 4294901760
    %v3004 = vsub.f32 %v2479, %v3003
    %v3005 = vand.u32 %v3004, 4294901760
    %3006 = vmatpush.msra.mxu0 %v3005
    %v3007 = vand.u32 %v2491, 4294901760
    %3008 = vmatmul.f32.gmra.mxu0 %v3007
    %v3009 = vpop.f32.mrf.mxu0
    %v3010 = vadd.f32 %v2974, %v3009
    %3011 = vdwg.mxu0
    %3012 = vmatpush.msra.mxu0 0.0
    %3013 = vmatpush.msra.mxu0 0.0
    %3014 = vmatpush.msra.mxu0 0.0
    %3015 = vmatpush.msra.mxu0 0.0
    %3016 = vmatpush.msra.mxu0 0.0
    %3017 = vmatpush.msra.mxu0 0.0
    %3018 = vmatpush.msra.mxu0 0.0
    %3019 = vmatpush.msra.mxu0 0.0
    %3020 = vmatpush.msra.mxu0 0.0
    %3021 = vmatpush.msra.mxu0 0.0
    %3022 = vmatpush.msra.mxu0 0.0
    %v3023 = vand.u32 %v2494, 4294901760
    %3024 = vmatpush.msra.mxu0 %v3023
    %v3025 = vand.u32 %v2485, 4294901760
    %3026 = vmatpush.msra.mxu0 %v3025
    %v3027 = vand.u32 %v2483, 4294901760
    %3028 = vmatpush.msra.mxu0 %v3027
    %v3029 = vand.u32 %v2481, 4294901760
    %3030 = vmatpush.msra.mxu0 %v3029
    %v3031 = vand.u32 %v2479, 4294901760
    %3032 = vmatpush.msra.mxu0 %v3031
    %v3033 = vand.u32 %v2491, 4294901760
    %3034 = vmatmul.f32.gmra.mxu0 %v3033
    %v3035 = vpop.f32.mrf.mxu0
    %v3036 = vadd.f32 %v3010, %v3035
    %3037 = vdwg.mxu0
    %v3038 = vand.u32 %v2478, 4294901760
    %3039 = vmatpush.msra.mxu0 %v3038
    %v3040 = vand.u32 %v2476, 4294901760
    %3041 = vmatpush.msra.mxu0 %v3040
    %v3042 = vand.u32 %v2474, 4294901760
    %3043 = vmatpush.msra.mxu0 %v3042
    %v3044 = vand.u32 %v2472, 4294901760
    %3045 = vmatpush.msra.mxu0 %v3044
    %v3046 = vand.u32 %v2470, 4294901760
    %3047 = vmatpush.msra.mxu0 %v3046
    %v3048 = vand.u32 %v2468, 4294901760
    %3049 = vmatpush.msra.mxu0 %v3048
    %v3050 = vand.u32 %v2466, 4294901760
    %3051 = vmatpush.msra.mxu0 %v3050
    %v3052 = vand.u32 %v2464, 4294901760
    %3053 = vmatpush.msra.mxu0 %v3052
    %v3054 = vand.u32 %v2462, 4294901760
    %3055 = vmatpush.msra.mxu0 %v3054
    %v3056 = vand.u32 %v2460, 4294901760
    %3057 = vmatpush.msra.mxu0 %v3056
    %v3058 = vand.u32 %v2458, 4294901760
    %3059 = vmatpush.msra.mxu0 %v3058
    %v3060 = vand.u32 %v2456, 4294901760
    %3061 = vmatpush.msra.mxu0 %v3060
    %v3062 = vand.u32 %v2454, 4294901760
    %3063 = vmatpush.msra.mxu0 %v3062
    %v3064 = vand.u32 %v2452, 4294901760
    %3065 = vmatpush.msra.mxu0 %v3064
    %v3066 = vand.u32 %v2450, 4294901760
    %3067 = vmatpush.msra.mxu0 %v3066
    %v3068 = vand.u32 %v2448, 4294901760
    %3069 = vmatpush.msra.mxu0 %v3068
    %v3070 = vand.u32 %v2445, 4294901760
    %v3071 = vsub.f32 %v2445, %v3070
    %v3072 = vand.u32 %v3071, 4294901760
    %v3073 = vsub.f32 %v3071, %v3072
    %v3074 = vand.u32 %v3073, 4294901760
    %3075 = vmatmul.f32.gmra.mxu0 %v3074
    %v3076 = vpop.f32.mrf.mxu0
    %v3077 = vadd.f32 0.0, %v3076
    %3078 = vdwg.mxu0
    %v3079 = vand.u32 %v2478, 4294901760
    %v3080 = vsub.f32 %v2478, %v3079
    %v3081 = vand.u32 %v3080, 4294901760
    %v3082 = vsub.f32 %v3080, %v3081
    %v3083 = vand.u32 %v3082, 4294901760
    %3084 = vmatpush.msra.mxu0 %v3083
    %v3085 = vand.u32 %v2476, 4294901760
    %v3086 = vsub.f32 %v2476, %v3085
    %v3087 = vand.u32 %v3086, 4294901760
    %v3088 = vsub.f32 %v3086, %v3087
    %v3089 = vand.u32 %v3088, 4294901760
    %3090 = vmatpush.msra.mxu0 %v3089
    %v3091 = vand.u32 %v2474, 4294901760
    %v3092 = vsub.f32 %v2474, %v3091
    %v3093 = vand.u32 %v3092, 4294901760
    %v3094 = vsub.f32 %v3092, %v3093
    %v3095 = vand.u32 %v3094, 4294901760
    %3096 = vmatpush.msra.mxu0 %v3095
    %v3097 = vand.u32 %v2472, 4294901760
    %v3098 = vsub.f32 %v2472, %v3097
    %v3099 = vand.u32 %v3098, 4294901760
    %v3100 = vsub.f32 %v3098, %v3099
    %v3101 = vand.u32 %v3100, 4294901760
    %3102 = vmatpush.msra.mxu0 %v3101
    %v3103 = vand.u32 %v2470, 4294901760
    %v3104 = vsub.f32 %v2470, %v3103
    %v3105 = vand.u32 %v3104, 4294901760
    %v3106 = vsub.f32 %v3104, %v3105
    %v3107 = vand.u32 %v3106, 4294901760
    %3108 = vmatpush.msra.mxu0 %v3107
    %v3109 = vand.u32 %v2468, 4294901760
    %v3110 = vsub.f32 %v2468, %v3109
    %v3111 = vand.u32 %v3110, 4294901760
    %v3112 = vsub.f32 %v3110, %v3111
    %v3113 = vand.u32 %v3112, 4294901760
    %3114 = vmatpush.msra.mxu0 %v3113
    %v3115 = vand.u32 %v2466, 4294901760
    %v3116 = vsub.f32 %v2466, %v3115
    %v3117 = vand.u32 %v3116, 4294901760
    %v3118 = vsub.f32 %v3116, %v3117
    %v3119 = vand.u32 %v3118, 4294901760
    %3120 = vmatpush.msra.mxu0 %v3119
    %v3121 = vand.u32 %v2464, 4294901760
    %v3122 = vsub.f32 %v2464, %v3121
    %v3123 = vand.u32 %v3122, 4294901760
    %v3124 = vsub.f32 %v3122, %v3123
    %v3125 = vand.u32 %v3124, 4294901760
    %3126 = vmatpush.msra.mxu0 %v3125
    %v3127 = vand.u32 %v2462, 4294901760
    %v3128 = vsub.f32 %v2462, %v3127
    %v3129 = vand.u32 %v3128, 4294901760
    %v3130 = vsub.f32 %v3128, %v3129
    %v3131 = vand.u32 %v3130, 4294901760
    %3132 = vmatpush.msra.mxu0 %v3131
    %v3133 = vand.u32 %v2460, 4294901760
    %v3134 = vsub.f32 %v2460, %v3133
    %v3135 = vand.u32 %v3134, 4294901760
    %v3136 = vsub.f32 %v3134, %v3135
    %v3137 = vand.u32 %v3136, 4294901760
    %3138 = vmatpush.msra.mxu0 %v3137
    %v3139 = vand.u32 %v2458, 4294901760
    %v3140 = vsub.f32 %v2458, %v3139
    %v3141 = vand.u32 %v3140, 4294901760
    %v3142 = vsub.f32 %v3140, %v3141
    %v3143 = vand.u32 %v3142, 4294901760
    %3144 = vmatpush.msra.mxu0 %v3143
    %v3145 = vand.u32 %v2456, 4294901760
    %v3146 = vsub.f32 %v2456, %v3145
    %v3147 = vand.u32 %v3146, 4294901760
    %v3148 = vsub.f32 %v3146, %v3147
    %v3149 = vand.u32 %v3148, 4294901760
    %3150 = vmatpush.msra.mxu0 %v3149
    %v3151 = vand.u32 %v2454, 4294901760
    %v3152 = vsub.f32 %v2454, %v3151
    %v3153 = vand.u32 %v3152, 4294901760
    %v3154 = vsub.f32 %v3152, %v3153
    %v3155 = vand.u32 %v3154, 4294901760
    %3156 = vmatpush.msra.mxu0 %v3155
    %v3157 = vand.u32 %v2452, 4294901760
    %v3158 = vsub.f32 %v2452, %v3157
    %v3159 = vand.u32 %v3158, 4294901760
    %v3160 = vsub.f32 %v3158, %v3159
    %v3161 = vand.u32 %v3160, 4294901760
    %3162 = vmatpush.msra.mxu0 %v3161
    %v3163 = vand.u32 %v2450, 4294901760
    %v3164 = vsub.f32 %v2450, %v3163
    %v3165 = vand.u32 %v3164, 4294901760
    %v3166 = vsub.f32 %v3164, %v3165
    %v3167 = vand.u32 %v3166, 4294901760
    %3168 = vmatpush.msra.mxu0 %v3167
    %v3169 = vand.u32 %v2448, 4294901760
    %v3170 = vsub.f32 %v2448, %v3169
    %v3171 = vand.u32 %v3170, 4294901760
    %v3172 = vsub.f32 %v3170, %v3171
    %v3173 = vand.u32 %v3172, 4294901760
    %3174 = vmatpush.msra.mxu0 %v3173
    %v3175 = vand.u32 %v2445, 4294901760
    %3176 = vmatmul.f32.gmra.mxu0 %v3175
    %v3177 = vpop.f32.mrf.mxu0
    %v3178 = vadd.f32 %v3077, %v3177
    %3179 = vdwg.mxu0
    %v3180 = vand.u32 %v2478, 4294901760
    %v3181 = vsub.f32 %v2478, %v3180
    %3182 = vmatpush.msra.mxu0 %v3181
    %v3183 = vand.u32 %v2476, 4294901760
    %v3184 = vsub.f32 %v2476, %v3183
    %3185 = vmatpush.msra.mxu0 %v3184
    %v3186 = vand.u32 %v2474, 4294901760
    %v3187 = vsub.f32 %v2474, %v3186
    %3188 = vmatpush.msra.mxu0 %v3187
    %v3189 = vand.u32 %v2472, 4294901760
    %v3190 = vsub.f32 %v2472, %v3189
    %3191 = vmatpush.msra.mxu0 %v3190
    %v3192 = vand.u32 %v2470, 4294901760
    %v3193 = vsub.f32 %v2470, %v3192
    %3194 = vmatpush.msra.mxu0 %v3193
    %v3195 = vand.u32 %v2468, 4294901760
    %v3196 = vsub.f32 %v2468, %v3195
    %3197 = vmatpush.msra.mxu0 %v3196
    %v3198 = vand.u32 %v2466, 4294901760
    %v3199 = vsub.f32 %v2466, %v3198
    %3200 = vmatpush.msra.mxu0 %v3199
    %v3201 = vand.u32 %v2464, 4294901760
    %v3202 = vsub.f32 %v2464, %v3201
    %3203 = vmatpush.msra.mxu0 %v3202
    %v3204 = vand.u32 %v2462, 4294901760
    %v3205 = vsub.f32 %v2462, %v3204
    %3206 = vmatpush.msra.mxu0 %v3205
    %v3207 = vand.u32 %v2460, 4294901760
    %v3208 = vsub.f32 %v2460, %v3207
    %3209 = vmatpush.msra.mxu0 %v3208
    %v3210 = vand.u32 %v2458, 4294901760
    %v3211 = vsub.f32 %v2458, %v3210
    %3212 = vmatpush.msra.mxu0 %v3211
    %v3213 = vand.u32 %v2456, 4294901760
    %v3214 = vsub.f32 %v2456, %v3213
    %3215 = vmatpush.msra.mxu0 %v3214
    %v3216 = vand.u32 %v2454, 4294901760
    %v3217 = vsub.f32 %v2454, %v3216
    %3218 = vmatpush.msra.mxu0 %v3217
    %v3219 = vand.u32 %v2452, 4294901760
    %v3220 = vsub.f32 %v2452, %v3219
    %3221 = vmatpush.msra.mxu0 %v3220
    %v3222 = vand.u32 %v2450, 4294901760
    %v3223 = vsub.f32 %v2450, %v3222
    %3224 = vmatpush.msra.mxu0 %v3223
    %v3225 = vand.u32 %v2448, 4294901760
    %v3226 = vsub.f32 %v2448, %v3225
    %3227 = vmatpush.msra.mxu0 %v3226
    %v3228 = vand.u32 %v2445, 4294901760
    %v3229 = vsub.f32 %v2445, %v3228
    %3230 = vmatmul.f32.gmra.mxu0 %v3229
    %v3231 = vpop.f32.mrf.mxu0
    %v3232 = vadd.f32 %v3178, %v3231
    %3233 = vdwg.mxu0
    %v3234 = vand.u32 %v2478, 4294901760
    %3235 = vmatpush.msra.mxu0 %v3234
    %v3236 = vand.u32 %v2476, 4294901760
    %3237 = vmatpush.msra.mxu0 %v3236
    %v3238 = vand.u32 %v2474, 4294901760
    %3239 = vmatpush.msra.mxu0 %v3238
    %v3240 = vand.u32 %v2472, 4294901760
    %3241 = vmatpush.msra.mxu0 %v3240
    %v3242 = vand.u32 %v2470, 4294901760
    %3243 = vmatpush.msra.mxu0 %v3242
    %v3244 = vand.u32 %v2468, 4294901760
    %3245 = vmatpush.msra.mxu0 %v3244
    %v3246 = vand.u32 %v2466, 4294901760
    %3247 = vmatpush.msra.mxu0 %v3246
    %v3248 = vand.u32 %v2464, 4294901760
    %3249 = vmatpush.msra.mxu0 %v3248
    %v3250 = vand.u32 %v2462, 4294901760
    %3251 = vmatpush.msra.mxu0 %v3250
    %v3252 = vand.u32 %v2460, 4294901760
    %3253 = vmatpush.msra.mxu0 %v3252
    %v3254 = vand.u32 %v2458, 4294901760
    %3255 = vmatpush.msra.mxu0 %v3254
    %v3256 = vand.u32 %v2456, 4294901760
    %3257 = vmatpush.msra.mxu0 %v3256
    %v3258 = vand.u32 %v2454, 4294901760
    %3259 = vmatpush.msra.mxu0 %v3258
    %v3260 = vand.u32 %v2452, 4294901760
    %3261 = vmatpush.msra.mxu0 %v3260
    %v3262 = vand.u32 %v2450, 4294901760
    %3263 = vmatpush.msra.mxu0 %v3262
    %v3264 = vand.u32 %v2448, 4294901760
    %3265 = vmatpush.msra.mxu0 %v3264
    %v3266 = vand.u32 %v2445, 4294901760
    %v3267 = vsub.f32 %v2445, %v3266
    %v3268 = vand.u32 %v3267, 4294901760
    %3269 = vmatmul.f32.gmra.mxu0 %v3268
    %v3270 = vpop.f32.mrf.mxu0
    %v3271 = vadd.f32 %v3232, %v3270
    %3272 = vdwg.mxu0
    %v3273 = vand.u32 %v2478, 4294901760
    %v3274 = vsub.f32 %v2478, %v3273
    %v3275 = vand.u32 %v3274, 4294901760
    %3276 = vmatpush.msra.mxu0 %v3275
    %v3277 = vand.u32 %v2476, 4294901760
    %v3278 = vsub.f32 %v2476, %v3277
    %v3279 = vand.u32 %v3278, 4294901760
    %3280 = vmatpush.msra.mxu0 %v3279
    %v3281 = vand.u32 %v2474, 4294901760
    %v3282 = vsub.f32 %v2474, %v3281
    %v3283 = vand.u32 %v3282, 4294901760
    %3284 = vmatpush.msra.mxu0 %v3283
    %v3285 = vand.u32 %v2472, 4294901760
    %v3286 = vsub.f32 %v2472, %v3285
    %v3287 = vand.u32 %v3286, 4294901760
    %3288 = vmatpush.msra.mxu0 %v3287
    %v3289 = vand.u32 %v2470, 4294901760
    %v3290 = vsub.f32 %v2470, %v3289
    %v3291 = vand.u32 %v3290, 4294901760
    %3292 = vmatpush.msra.mxu0 %v3291
    %v3293 = vand.u32 %v2468, 4294901760
    %v3294 = vsub.f32 %v2468, %v3293
    %v3295 = vand.u32 %v3294, 4294901760
    %3296 = vmatpush.msra.mxu0 %v3295
    %v3297 = vand.u32 %v2466, 4294901760
    %v3298 = vsub.f32 %v2466, %v3297
    %v3299 = vand.u32 %v3298, 4294901760
    %3300 = vmatpush.msra.mxu0 %v3299
    %v3301 = vand.u32 %v2464, 4294901760
    %v3302 = vsub.f32 %v2464, %v3301
    %v3303 = vand.u32 %v3302, 4294901760
    %3304 = vmatpush.msra.mxu0 %v3303
    %v3305 = vand.u32 %v2462, 4294901760
    %v3306 = vsub.f32 %v2462, %v3305
    %v3307 = vand.u32 %v3306, 4294901760
    %3308 = vmatpush.msra.mxu0 %v3307
    %v3309 = vand.u32 %v2460, 4294901760
    %v3310 = vsub.f32 %v2460, %v3309
    %v3311 = vand.u32 %v3310, 4294901760
    %3312 = vmatpush.msra.mxu0 %v3311
    %v3313 = vand.u32 %v2458, 4294901760
    %v3314 = vsub.f32 %v2458, %v3313
    %v3315 = vand.u32 %v3314, 4294901760
    %3316 = vmatpush.msra.mxu0 %v3315
    %v3317 = vand.u32 %v2456, 4294901760
    %v3318 = vsub.f32 %v2456, %v3317
    %v3319 = vand.u32 %v3318, 4294901760
    %3320 = vmatpush.msra.mxu0 %v3319
    %v3321 = vand.u32 %v2454, 4294901760
    %v3322 = vsub.f32 %v2454, %v3321
    %v3323 = vand.u32 %v3322, 4294901760
    %3324 = vmatpush.msra.mxu0 %v3323
    %v3325 = vand.u32 %v2452, 4294901760
    %v3326 = vsub.f32 %v2452, %v3325
    %v3327 = vand.u32 %v3326, 4294901760
    %3328 = vmatpush.msra.mxu0 %v3327
    %v3329 = vand.u32 %v2450, 4294901760
    %v3330 = vsub.f32 %v2450, %v3329
    %v3331 = vand.u32 %v3330, 4294901760
    %3332 = vmatpush.msra.mxu0 %v3331
    %v3333 = vand.u32 %v2448, 4294901760
    %v3334 = vsub.f32 %v2448, %v3333
    %v3335 = vand.u32 %v3334, 4294901760
    %3336 = vmatpush.msra.mxu0 %v3335
    %v3337 = vand.u32 %v2445, 4294901760
    %3338 = vmatmul.f32.gmra.mxu0 %v3337
    %v3339 = vpop.f32.mrf.mxu0
    %v3340 = vadd.f32 %v3271, %v3339
    %3341 = vdwg.mxu0
    %v3342 = vand.u32 %v2478, 4294901760
    %3343 = vmatpush.msra.mxu0 %v3342
    %v3344 = vand.u32 %v2476, 4294901760
    %3345 = vmatpush.msra.mxu0 %v3344
    %v3346 = vand.u32 %v2474, 4294901760
    %3347 = vmatpush.msra.mxu0 %v3346
    %v3348 = vand.u32 %v2472, 4294901760
    %3349 = vmatpush.msra.mxu0 %v3348
    %v3350 = vand.u32 %v2470, 4294901760
    %3351 = vmatpush.msra.mxu0 %v3350
    %v3352 = vand.u32 %v2468, 4294901760
    %3353 = vmatpush.msra.mxu0 %v3352
    %v3354 = vand.u32 %v2466, 4294901760
    %3355 = vmatpush.msra.mxu0 %v3354
    %v3356 = vand.u32 %v2464, 4294901760
    %3357 = vmatpush.msra.mxu0 %v3356
    %v3358 = vand.u32 %v2462, 4294901760
    %3359 = vmatpush.msra.mxu0 %v3358
    %v3360 = vand.u32 %v2460, 4294901760
    %3361 = vmatpush.msra.mxu0 %v3360
    %v3362 = vand.u32 %v2458, 4294901760
    %3363 = vmatpush.msra.mxu0 %v3362
    %v3364 = vand.u32 %v2456, 4294901760
    %3365 = vmatpush.msra.mxu0 %v3364
    %v3366 = vand.u32 %v2454, 4294901760
    %3367 = vmatpush.msra.mxu0 %v3366
    %v3368 = vand.u32 %v2452, 4294901760
    %3369 = vmatpush.msra.mxu0 %v3368
    %v3370 = vand.u32 %v2450, 4294901760
    %3371 = vmatpush.msra.mxu0 %v3370
    %v3372 = vand.u32 %v2448, 4294901760
    %3373 = vmatpush.msra.mxu0 %v3372
    %v3374 = vand.u32 %v2445, 4294901760
    %3375 = vmatmul.f32.gmra.mxu0 %v3374
    %v3376 = vpop.f32.mrf.mxu0
    %v3377 = vadd.f32 %v3340, %v3376
    %3378 = vdwg.mxu0
    %3379 = vmatpush.msra.mxu0 0.0
    %3380 = vmatpush.msra.mxu0 0.0
    %3381 = vmatpush.msra.mxu0 0.0
    %3382 = vmatpush.msra.mxu0 0.0
    %3383 = vmatpush.msra.mxu0 0.0
    %3384 = vmatpush.msra.mxu0 0.0
    %3385 = vmatpush.msra.mxu0 0.0
    %3386 = vmatpush.msra.mxu0 0.0
    %3387 = vmatpush.msra.mxu0 0.0
    %3388 = vmatpush.msra.mxu0 0.0
    %3389 = vmatpush.msra.mxu0 0.0
    %v3390 = vand.u32 %v2497, 4294901760
    %3391 = vmatpush.msra.mxu0 %v3390
    %v3392 = vand.u32 %v2486, 4294901760
    %3393 = vmatpush.msra.mxu0 %v3392
    %v3394 = vand.u32 %v2484, 4294901760
    %3395 = vmatpush.msra.mxu0 %v3394
    %v3396 = vand.u32 %v2482, 4294901760
    %3397 = vmatpush.msra.mxu0 %v3396
    %v3398 = vand.u32 %v2480, 4294901760
    %3399 = vmatpush.msra.mxu0 %v3398
    %v3400 = vand.u32 %v2491, 4294901760
    %v3401 = vsub.f32 %v2491, %v3400
    %v3402 = vand.u32 %v3401, 4294901760
    %v3403 = vsub.f32 %v3401, %v3402
    %v3404 = vand.u32 %v3403, 4294901760
    %3405 = vmatmul.f32.gmra.mxu0 %v3404
    %v3406 = vpop.f32.mrf.mxu0
    %v3407 = vadd.f32 %v3377, %v3406
    %3408 = vdwg.mxu0
    %3409 = vmatpush.msra.mxu0 0.0
    %3410 = vmatpush.msra.mxu0 0.0
    %3411 = vmatpush.msra.mxu0 0.0
    %3412 = vmatpush.msra.mxu0 0.0
    %3413 = vmatpush.msra.mxu0 0.0
    %3414 = vmatpush.msra.mxu0 0.0
    %3415 = vmatpush.msra.mxu0 0.0
    %3416 = vmatpush.msra.mxu0 0.0
    %3417 = vmatpush.msra.mxu0 0.0
    %3418 = vmatpush.msra.mxu0 0.0
    %3419 = vmatpush.msra.mxu0 0.0
    %v3420 = vand.u32 %v2497, 4294901760
    %v3421 = vsub.f32 %v2497, %v3420
    %v3422 = vand.u32 %v3421, 4294901760
    %v3423 = vsub.f32 %v3421, %v3422
    %v3424 = vand.u32 %v3423, 4294901760
    %3425 = vmatpush.msra.mxu0 %v3424
    %v3426 = vand.u32 %v2486, 4294901760
    %v3427 = vsub.f32 %v2486, %v3426
    %v3428 = vand.u32 %v3427, 4294901760
    %v3429 = vsub.f32 %v3427, %v3428
    %v3430 = vand.u32 %v3429, 4294901760
    %3431 = vmatpush.msra.mxu0 %v3430
    %v3432 = vand.u32 %v2484, 4294901760
    %v3433 = vsub.f32 %v2484, %v3432
    %v3434 = vand.u32 %v3433, 4294901760
    %v3435 = vsub.f32 %v3433, %v3434
    %v3436 = vand.u32 %v3435, 4294901760
    %3437 = vmatpush.msra.mxu0 %v3436
    %v3438 = vand.u32 %v2482, 4294901760
    %v3439 = vsub.f32 %v2482, %v3438
    %v3440 = vand.u32 %v3439, 4294901760
    %v3441 = vsub.f32 %v3439, %v3440
    %v3442 = vand.u32 %v3441, 4294901760
    %3443 = vmatpush.msra.mxu0 %v3442
    %v3444 = vand.u32 %v2480, 4294901760
    %v3445 = vsub.f32 %v2480, %v3444
    %v3446 = vand.u32 %v3445, 4294901760
    %v3447 = vsub.f32 %v3445, %v3446
    %v3448 = vand.u32 %v3447, 4294901760
    %3449 = vmatpush.msra.mxu0 %v3448
    %v3450 = vand.u32 %v2491, 4294901760
    %3451 = vmatmul.f32.gmra.mxu0 %v3450
    %v3452 = vpop.f32.mrf.mxu0
    %v3453 = vadd.f32 %v3407, %v3452
    %3454 = vdwg.mxu0
    %3455 = vmatpush.msra.mxu0 0.0
    %3456 = vmatpush.msra.mxu0 0.0
    %3457 = vmatpush.msra.mxu0 0.0
    %3458 = vmatpush.msra.mxu0 0.0
    %3459 = vmatpush.msra.mxu0 0.0
    %3460 = vmatpush.msra.mxu0 0.0
    %3461 = vmatpush.msra.mxu0 0.0
    %3462 = vmatpush.msra.mxu0 0.0
    %3463 = vmatpush.msra.mxu0 0.0
    %3464 = vmatpush.msra.mxu0 0.0
    %3465 = vmatpush.msra.mxu0 0.0
    %v3466 = vand.u32 %v2497, 4294901760
    %v3467 = vsub.f32 %v2497, %v3466
    %3468 = vmatpush.msra.mxu0 %v3467
    %v3469 = vand.u32 %v2486, 4294901760
    %v3470 = vsub.f32 %v2486, %v3469
    %3471 = vmatpush.msra.mxu0 %v3470
    %v3472 = vand.u32 %v2484, 4294901760
    %v3473 = vsub.f32 %v2484, %v3472
    %3474 = vmatpush.msra.mxu0 %v3473
    %v3475 = vand.u32 %v2482, 4294901760
    %v3476 = vsub.f32 %v2482, %v3475
    %3477 = vmatpush.msra.mxu0 %v3476
    %v3478 = vand.u32 %v2480, 4294901760
    %v3479 = vsub.f32 %v2480, %v3478
    %3480 = vmatpush.msra.mxu0 %v3479
    %v3481 = vand.u32 %v2491, 4294901760
    %v3482 = vsub.f32 %v2491, %v3481
    %3483 = vmatmul.f32.gmra.mxu0 %v3482
    %v3484 = vpop.f32.mrf.mxu0
    %v3485 = vadd.f32 %v3453, %v3484
    %3486 = vdwg.mxu0
    %3487 = vmatpush.msra.mxu0 0.0
    %3488 = vmatpush.msra.mxu0 0.0
    %3489 = vmatpush.msra.mxu0 0.0
    %3490 = vmatpush.msra.mxu0 0.0
    %3491 = vmatpush.msra.mxu0 0.0
    %3492 = vmatpush.msra.mxu0 0.0
    %3493 = vmatpush.msra.mxu0 0.0
    %3494 = vmatpush.msra.mxu0 0.0
    %3495 = vmatpush.msra.mxu0 0.0
    %3496 = vmatpush.msra.mxu0 0.0
    %3497 = vmatpush.msra.mxu0 0.0
    %v3498 = vand.u32 %v2497, 4294901760
    %3499 = vmatpush.msra.mxu0 %v3498
    %v3500 = vand.u32 %v2486, 4294901760
    %3501 = vmatpush.msra.mxu0 %v3500
    %v3502 = vand.u32 %v2484, 4294901760
    %3503 = vmatpush.msra.mxu0 %v3502
    %v3504 = vand.u32 %v2482, 4294901760
    %3505 = vmatpush.msra.mxu0 %v3504
    %v3506 = vand.u32 %v2480, 4294901760
    %3507 = vmatpush.msra.mxu0 %v3506
    %v3508 = vand.u32 %v2491, 4294901760
    %v3509 = vsub.f32 %v2491, %v3508
    %v3510 = vand.u32 %v3509, 4294901760
    %3511 = vmatmul.f32.gmra.mxu0 %v3510
    %v3512 = vpop.f32.mrf.mxu0
    %v3513 = vadd.f32 %v3485, %v3512
    %3514 = vdwg.mxu0
    %3515 = vmatpush.msra.mxu0 0.0
    %3516 = vmatpush.msra.mxu0 0.0
    %3517 = vmatpush.msra.mxu0 0.0
    %3518 = vmatpush.msra.mxu0 0.0
    %3519 = vmatpush.msra.mxu0 0.0
    %3520 = vmatpush.msra.mxu0 0.0
    %3521 = vmatpush.msra.mxu0 0.0
    %3522 = vmatpush.msra.mxu0 0.0
    %3523 = vmatpush.msra.mxu0 0.0
    %3524 = vmatpush.msra.mxu0 0.0
    %3525 = vmatpush.msra.mxu0 0.0
    %v3526 = vand.u32 %v2497, 4294901760
    %v3527 = vsub.f32 %v2497, %v3526
    %v3528 = vand.u32 %v3527, 4294901760
    %3529 = vmatpush.msra.mxu0 %v3528
    %v3530 = vand.u32 %v2486, 4294901760
    %v3531 = vsub.f32 %v2486, %v3530
    %v3532 = vand.u32 %v3531, 4294901760
    %3533 = vmatpush.msra.mxu0 %v3532
    %v3534 = vand.u32 %v2484, 4294901760
    %v3535 = vsub.f32 %v2484, %v3534
    %v3536 = vand.u32 %v3535, 4294901760
    %3537 = vmatpush.msra.mxu0 %v3536
    %v3538 = vand.u32 %v2482, 4294901760
    %v3539 = vsub.f32 %v2482, %v3538
    %v3540 = vand.u32 %v3539, 4294901760
    %3541 = vmatpush.msra.mxu0 %v3540
    %v3542 = vand.u32 %v2480, 4294901760
    %v3543 = vsub.f32 %v2480, %v3542
    %v3544 = vand.u32 %v3543, 4294901760
    %3545 = vmatpush.msra.mxu0 %v3544
    %v3546 = vand.u32 %v2491, 4294901760
    %3547 = vmatmul.f32.gmra.mxu0 %v3546
    %v3548 = vpop.f32.mrf.mxu0
    %v3549 = vadd.f32 %v3513, %v3548
    %3550 = vdwg.mxu0
    %3551 = vmatpush.msra.mxu0 0.0
    %3552 = vmatpush.msra.mxu0 0.0
    %3553 = vmatpush.msra.mxu0 0.0
    %3554 = vmatpush.msra.mxu0 0.0
    %3555 = vmatpush.msra.mxu0 0.0
    %3556 = vmatpush.msra.mxu0 0.0
    %3557 = vmatpush.msra.mxu0 0.0
    %3558 = vmatpush.msra.mxu0 0.0
    %3559 = vmatpush.msra.mxu0 0.0
    %3560 = vmatpush.msra.mxu0 0.0
    %3561 = vmatpush.msra.mxu0 0.0
    %v3562 = vand.u32 %v2497, 4294901760
    %3563 = vmatpush.msra.mxu0 %v3562
    %v3564 = vand.u32 %v2486, 4294901760
    %3565 = vmatpush.msra.mxu0 %v3564
    %v3566 = vand.u32 %v2484, 4294901760
    %3567 = vmatpush.msra.mxu0 %v3566
    %v3568 = vand.u32 %v2482, 4294901760
    %3569 = vmatpush.msra.mxu0 %v3568
    %v3570 = vand.u32 %v2480, 4294901760
    %3571 = vmatpush.msra.mxu0 %v3570
    %v3572 = vand.u32 %v2491, 4294901760
    %3573 = vmatmul.f32.gmra.mxu0 %v3572
    %v3574 = vpop.f32.mrf.mxu0
    %v3575 = vadd.f32 %v3549, %v3574
    %3576 = vdwg.mxu0
    %v3577 = vmax.f32 %v3036, 0.0
    %v3578 = vmax.f32 %v3575, 0.0
    %v3579 = vld [vmem:[%s4] sm:$0xff]
    %v3580 = vld [vmem:[%s4 + $0x8] sm:$0xff]
    %v3581 = vld [vmem:[%s4 + $0x10] sm:$0xff]
    %v3582 = vld [vmem:[%s4 + $0x18] sm:$0xff]
    %v3583 = vld [vmem:[%s4 + $0x20] sm:$0xff]
    %v3584 = vld [vmem:[%s4 + $0x28] sm:$0xff]
    %v3585 = vld [vmem:[%s4 + $0x30] sm:$0xff]
    %v3586 = vld [vmem:[%s4 + $0x38] sm:$0xff]
    %v3587 = vld [vmem:[%s4 + $0x40] sm:$0xff]
    %v3588 = vld [vmem:[%s4 + $0x48] sm:$0xff]
    %v3589 = vld [vmem:[%s4 + $0x50] sm:$0xff]
    %v3590 = vld [vmem:[%s4 + $0x58] sm:$0xff]
    %v3591 = vld [vmem:[%s4 + $0x60] sm:$0xff]
    %v3592 = vld [vmem:[%s4 + $0x68] sm:$0xff]
    %v3593 = vld [vmem:[%s4 + $0x70] sm:$0xff]
    %v3594 = vld [vmem:[%s4 + $0x78] sm:$0xff]
    %v3595 = vld [vmem:[%s4 + $0x80] sm:$0xff]
    %v3596 = vld [vmem:[%s4 + $0x88] sm:$0xff]
    %v3597 = vld [vmem:[%s4 + $0x90] sm:$0xff]
    %v3598 = vld [vmem:[%s4 + $0x98] sm:$0xff]
    %v3599 = vld [vmem:[%s4 + $0xa0] sm:$0x1]
    %v3601 = vsel %vm2489, %v3578, 0
    %v3604 = vsel %vm574, %v3599, 0
    %v3606 = vand.u32 %v3594, 4294901760
    %3607 = vmatpush.msra.mxu0 %v3606
    %v3608 = vand.u32 %v3593, 4294901760
    %3609 = vmatpush.msra.mxu0 %v3608
    %v3610 = vand.u32 %v3592, 4294901760
    %3611 = vmatpush.msra.mxu0 %v3610
    %v3612 = vand.u32 %v3591, 4294901760
    %3613 = vmatpush.msra.mxu0 %v3612
    %v3614 = vand.u32 %v3590, 4294901760
    %3615 = vmatpush.msra.mxu0 %v3614
    %v3616 = vand.u32 %v3589, 4294901760
    %3617 = vmatpush.msra.mxu0 %v3616
    %v3618 = vand.u32 %v3588, 4294901760
    %3619 = vmatpush.msra.mxu0 %v3618
    %v3620 = vand.u32 %v3587, 4294901760
    %3621 = vmatpush.msra.mxu0 %v3620
    %v3622 = vand.u32 %v3586, 4294901760
    %3623 = vmatpush.msra.mxu0 %v3622
    %v3624 = vand.u32 %v3585, 4294901760
    %3625 = vmatpush.msra.mxu0 %v3624
    %v3626 = vand.u32 %v3584, 4294901760
    %3627 = vmatpush.msra.mxu0 %v3626
    %v3628 = vand.u32 %v3583, 4294901760
    %3629 = vmatpush.msra.mxu0 %v3628
    %v3630 = vand.u32 %v3582, 4294901760
    %3631 = vmatpush.msra.mxu0 %v3630
    %v3632 = vand.u32 %v3581, 4294901760
    %3633 = vmatpush.msra.mxu0 %v3632
    %v3634 = vand.u32 %v3580, 4294901760
    %3635 = vmatpush.msra.mxu0 %v3634
    %v3636 = vand.u32 %v3579, 4294901760
    %3637 = vmatpush.msra.mxu0 %v3636
    %v3638 = vand.u32 %v3577, 4294901760
    %v3639 = vsub.f32 %v3577, %v3638
    %v3640 = vand.u32 %v3639, 4294901760
    %v3641 = vsub.f32 %v3639, %v3640
    %v3642 = vand.u32 %v3641, 4294901760
    %3643 = vmatmul.f32.gmra.mxu0 %v3642
    %v3644 = vpop.f32.mrf.mxu0
    %v3645 = vadd.f32 0.0, %v3644
    %3646 = vdwg.mxu0
    %v3647 = vand.u32 %v3594, 4294901760
    %v3648 = vsub.f32 %v3594, %v3647
    %v3649 = vand.u32 %v3648, 4294901760
    %v3650 = vsub.f32 %v3648, %v3649
    %v3651 = vand.u32 %v3650, 4294901760
    %3652 = vmatpush.msra.mxu0 %v3651
    %v3653 = vand.u32 %v3593, 4294901760
    %v3654 = vsub.f32 %v3593, %v3653
    %v3655 = vand.u32 %v3654, 4294901760
    %v3656 = vsub.f32 %v3654, %v3655
    %v3657 = vand.u32 %v3656, 4294901760
    %3658 = vmatpush.msra.mxu0 %v3657
    %v3659 = vand.u32 %v3592, 4294901760
    %v3660 = vsub.f32 %v3592, %v3659
    %v3661 = vand.u32 %v3660, 4294901760
    %v3662 = vsub.f32 %v3660, %v3661
    %v3663 = vand.u32 %v3662, 4294901760
    %3664 = vmatpush.msra.mxu0 %v3663
    %v3665 = vand.u32 %v3591, 4294901760
    %v3666 = vsub.f32 %v3591, %v3665
    %v3667 = vand.u32 %v3666, 4294901760
    %v3668 = vsub.f32 %v3666, %v3667
    %v3669 = vand.u32 %v3668, 4294901760
    %3670 = vmatpush.msra.mxu0 %v3669
    %v3671 = vand.u32 %v3590, 4294901760
    %v3672 = vsub.f32 %v3590, %v3671
    %v3673 = vand.u32 %v3672, 4294901760
    %v3674 = vsub.f32 %v3672, %v3673
    %v3675 = vand.u32 %v3674, 4294901760
    %3676 = vmatpush.msra.mxu0 %v3675
    %v3677 = vand.u32 %v3589, 4294901760
    %v3678 = vsub.f32 %v3589, %v3677
    %v3679 = vand.u32 %v3678, 4294901760
    %v3680 = vsub.f32 %v3678, %v3679
    %v3681 = vand.u32 %v3680, 4294901760
    %3682 = vmatpush.msra.mxu0 %v3681
    %v3683 = vand.u32 %v3588, 4294901760
    %v3684 = vsub.f32 %v3588, %v3683
    %v3685 = vand.u32 %v3684, 4294901760
    %v3686 = vsub.f32 %v3684, %v3685
    %v3687 = vand.u32 %v3686, 4294901760
    %3688 = vmatpush.msra.mxu0 %v3687
    %v3689 = vand.u32 %v3587, 4294901760
    %v3690 = vsub.f32 %v3587, %v3689
    %v3691 = vand.u32 %v3690, 4294901760
    %v3692 = vsub.f32 %v3690, %v3691
    %v3693 = vand.u32 %v3692, 4294901760
    %3694 = vmatpush.msra.mxu0 %v3693
    %v3695 = vand.u32 %v3586, 4294901760
    %v3696 = vsub.f32 %v3586, %v3695
    %v3697 = vand.u32 %v3696, 4294901760
    %v3698 = vsub.f32 %v3696, %v3697
    %v3699 = vand.u32 %v3698, 4294901760
    %3700 = vmatpush.msra.mxu0 %v3699
    %v3701 = vand.u32 %v3585, 4294901760
    %v3702 = vsub.f32 %v3585, %v3701
    %v3703 = vand.u32 %v3702, 4294901760
    %v3704 = vsub.f32 %v3702, %v3703
    %v3705 = vand.u32 %v3704, 4294901760
    %3706 = vmatpush.msra.mxu0 %v3705
    %v3707 = vand.u32 %v3584, 4294901760
    %v3708 = vsub.f32 %v3584, %v3707
    %v3709 = vand.u32 %v3708, 4294901760
    %v3710 = vsub.f32 %v3708, %v3709
    %v3711 = vand.u32 %v3710, 4294901760
    %3712 = vmatpush.msra.mxu0 %v3711
    %v3713 = vand.u32 %v3583, 4294901760
    %v3714 = vsub.f32 %v3583, %v3713
    %v3715 = vand.u32 %v3714, 4294901760
    %v3716 = vsub.f32 %v3714, %v3715
    %v3717 = vand.u32 %v3716, 4294901760
    %3718 = vmatpush.msra.mxu0 %v3717
    %v3719 = vand.u32 %v3582, 4294901760
    %v3720 = vsub.f32 %v3582, %v3719
    %v3721 = vand.u32 %v3720, 4294901760
    %v3722 = vsub.f32 %v3720, %v3721
    %v3723 = vand.u32 %v3722, 4294901760
    %3724 = vmatpush.msra.mxu0 %v3723
    %v3725 = vand.u32 %v3581, 4294901760
    %v3726 = vsub.f32 %v3581, %v3725
    %v3727 = vand.u32 %v3726, 4294901760
    %v3728 = vsub.f32 %v3726, %v3727
    %v3729 = vand.u32 %v3728, 4294901760
    %3730 = vmatpush.msra.mxu0 %v3729
    %v3731 = vand.u32 %v3580, 4294901760
    %v3732 = vsub.f32 %v3580, %v3731
    %v3733 = vand.u32 %v3732, 4294901760
    %v3734 = vsub.f32 %v3732, %v3733
    %v3735 = vand.u32 %v3734, 4294901760
    %3736 = vmatpush.msra.mxu0 %v3735
    %v3737 = vand.u32 %v3579, 4294901760
    %v3738 = vsub.f32 %v3579, %v3737
    %v3739 = vand.u32 %v3738, 4294901760
    %v3740 = vsub.f32 %v3738, %v3739
    %v3741 = vand.u32 %v3740, 4294901760
    %3742 = vmatpush.msra.mxu0 %v3741
    %v3743 = vand.u32 %v3577, 4294901760
    %3744 = vmatmul.f32.gmra.mxu0 %v3743
    %v3745 = vpop.f32.mrf.mxu0
    %v3746 = vadd.f32 %v3645, %v3745
    %3747 = vdwg.mxu0
    %v3748 = vand.u32 %v3594, 4294901760
    %v3749 = vsub.f32 %v3594, %v3748
    %3750 = vmatpush.msra.mxu0 %v3749
    %v3751 = vand.u32 %v3593, 4294901760
    %v3752 = vsub.f32 %v3593, %v3751
    %3753 = vmatpush.msra.mxu0 %v3752
    %v3754 = vand.u32 %v3592, 4294901760
    %v3755 = vsub.f32 %v3592, %v3754
    %3756 = vmatpush.msra.mxu0 %v3755
    %v3757 = vand.u32 %v3591, 4294901760
    %v3758 = vsub.f32 %v3591, %v3757
    %3759 = vmatpush.msra.mxu0 %v3758
    %v3760 = vand.u32 %v3590, 4294901760
    %v3761 = vsub.f32 %v3590, %v3760
    %3762 = vmatpush.msra.mxu0 %v3761
    %v3763 = vand.u32 %v3589, 4294901760
    %v3764 = vsub.f32 %v3589, %v3763
    %3765 = vmatpush.msra.mxu0 %v3764
    %v3766 = vand.u32 %v3588, 4294901760
    %v3767 = vsub.f32 %v3588, %v3766
    %3768 = vmatpush.msra.mxu0 %v3767
    %v3769 = vand.u32 %v3587, 4294901760
    %v3770 = vsub.f32 %v3587, %v3769
    %3771 = vmatpush.msra.mxu0 %v3770
    %v3772 = vand.u32 %v3586, 4294901760
    %v3773 = vsub.f32 %v3586, %v3772
    %3774 = vmatpush.msra.mxu0 %v3773
    %v3775 = vand.u32 %v3585, 4294901760
    %v3776 = vsub.f32 %v3585, %v3775
    %3777 = vmatpush.msra.mxu0 %v3776
    %v3778 = vand.u32 %v3584, 4294901760
    %v3779 = vsub.f32 %v3584, %v3778
    %3780 = vmatpush.msra.mxu0 %v3779
    %v3781 = vand.u32 %v3583, 4294901760
    %v3782 = vsub.f32 %v3583, %v3781
    %3783 = vmatpush.msra.mxu0 %v3782
    %v3784 = vand.u32 %v3582, 4294901760
    %v3785 = vsub.f32 %v3582, %v3784
    %3786 = vmatpush.msra.mxu0 %v3785
    %v3787 = vand.u32 %v3581, 4294901760
    %v3788 = vsub.f32 %v3581, %v3787
    %3789 = vmatpush.msra.mxu0 %v3788
    %v3790 = vand.u32 %v3580, 4294901760
    %v3791 = vsub.f32 %v3580, %v3790
    %3792 = vmatpush.msra.mxu0 %v3791
    %v3793 = vand.u32 %v3579, 4294901760
    %v3794 = vsub.f32 %v3579, %v3793
    %3795 = vmatpush.msra.mxu0 %v3794
    %v3796 = vand.u32 %v3577, 4294901760
    %v3797 = vsub.f32 %v3577, %v3796
    %3798 = vmatmul.f32.gmra.mxu0 %v3797
    %v3799 = vpop.f32.mrf.mxu0
    %v3800 = vadd.f32 %v3746, %v3799
    %3801 = vdwg.mxu0
    %v3802 = vand.u32 %v3594, 4294901760
    %3803 = vmatpush.msra.mxu0 %v3802
    %v3804 = vand.u32 %v3593, 4294901760
    %3805 = vmatpush.msra.mxu0 %v3804
    %v3806 = vand.u32 %v3592, 4294901760
    %3807 = vmatpush.msra.mxu0 %v3806
    %v3808 = vand.u32 %v3591, 4294901760
    %3809 = vmatpush.msra.mxu0 %v3808
    %v3810 = vand.u32 %v3590, 4294901760
    %3811 = vmatpush.msra.mxu0 %v3810
    %v3812 = vand.u32 %v3589, 4294901760
    %3813 = vmatpush.msra.mxu0 %v3812
    %v3814 = vand.u32 %v3588, 4294901760
    %3815 = vmatpush.msra.mxu0 %v3814
    %v3816 = vand.u32 %v3587, 4294901760
    %3817 = vmatpush.msra.mxu0 %v3816
    %v3818 = vand.u32 %v3586, 4294901760
    %3819 = vmatpush.msra.mxu0 %v3818
    %v3820 = vand.u32 %v3585, 4294901760
    %3821 = vmatpush.msra.mxu0 %v3820
    %v3822 = vand.u32 %v3584, 4294901760
    %3823 = vmatpush.msra.mxu0 %v3822
    %v3824 = vand.u32 %v3583, 4294901760
    %3825 = vmatpush.msra.mxu0 %v3824
    %v3826 = vand.u32 %v3582, 4294901760
    %3827 = vmatpush.msra.mxu0 %v3826
    %v3828 = vand.u32 %v3581, 4294901760
    %3829 = vmatpush.msra.mxu0 %v3828
    %v3830 = vand.u32 %v3580, 4294901760
    %3831 = vmatpush.msra.mxu0 %v3830
    %v3832 = vand.u32 %v3579, 4294901760
    %3833 = vmatpush.msra.mxu0 %v3832
    %v3834 = vand.u32 %v3577, 4294901760
    %v3835 = vsub.f32 %v3577, %v3834
    %v3836 = vand.u32 %v3835, 4294901760
    %3837 = vmatmul.f32.gmra.mxu0 %v3836
    %v3838 = vpop.f32.mrf.mxu0
    %v3839 = vadd.f32 %v3800, %v3838
    %3840 = vdwg.mxu0
    %v3841 = vand.u32 %v3594, 4294901760
    %v3842 = vsub.f32 %v3594, %v3841
    %v3843 = vand.u32 %v3842, 4294901760
    %3844 = vmatpush.msra.mxu0 %v3843
    %v3845 = vand.u32 %v3593, 4294901760
    %v3846 = vsub.f32 %v3593, %v3845
    %v3847 = vand.u32 %v3846, 4294901760
    %3848 = vmatpush.msra.mxu0 %v3847
    %v3849 = vand.u32 %v3592, 4294901760
    %v3850 = vsub.f32 %v3592, %v3849
    %v3851 = vand.u32 %v3850, 4294901760
    %3852 = vmatpush.msra.mxu0 %v3851
    %v3853 = vand.u32 %v3591, 4294901760
    %v3854 = vsub.f32 %v3591, %v3853
    %v3855 = vand.u32 %v3854, 4294901760
    %3856 = vmatpush.msra.mxu0 %v3855
    %v3857 = vand.u32 %v3590, 4294901760
    %v3858 = vsub.f32 %v3590, %v3857
    %v3859 = vand.u32 %v3858, 4294901760
    %3860 = vmatpush.msra.mxu0 %v3859
    %v3861 = vand.u32 %v3589, 4294901760
    %v3862 = vsub.f32 %v3589, %v3861
    %v3863 = vand.u32 %v3862, 4294901760
    %3864 = vmatpush.msra.mxu0 %v3863
    %v3865 = vand.u32 %v3588, 4294901760
    %v3866 = vsub.f32 %v3588, %v3865
    %v3867 = vand.u32 %v3866, 4294901760
    %3868 = vmatpush.msra.mxu0 %v3867
    %v3869 = vand.u32 %v3587, 4294901760
    %v3870 = vsub.f32 %v3587, %v3869
    %v3871 = vand.u32 %v3870, 4294901760
    %3872 = vmatpush.msra.mxu0 %v3871
    %v3873 = vand.u32 %v3586, 4294901760
    %v3874 = vsub.f32 %v3586, %v3873
    %v3875 = vand.u32 %v3874, 4294901760
    %3876 = vmatpush.msra.mxu0 %v3875
    %v3877 = vand.u32 %v3585, 4294901760
    %v3878 = vsub.f32 %v3585, %v3877
    %v3879 = vand.u32 %v3878, 4294901760
    %3880 = vmatpush.msra.mxu0 %v3879
    %v3881 = vand.u32 %v3584, 4294901760
    %v3882 = vsub.f32 %v3584, %v3881
    %v3883 = vand.u32 %v3882, 4294901760
    %3884 = vmatpush.msra.mxu0 %v3883
    %v3885 = vand.u32 %v3583, 4294901760
    %v3886 = vsub.f32 %v3583, %v3885
    %v3887 = vand.u32 %v3886, 4294901760
    %3888 = vmatpush.msra.mxu0 %v3887
    %v3889 = vand.u32 %v3582, 4294901760
    %v3890 = vsub.f32 %v3582, %v3889
    %v3891 = vand.u32 %v3890, 4294901760
    %3892 = vmatpush.msra.mxu0 %v3891
    %v3893 = vand.u32 %v3581, 4294901760
    %v3894 = vsub.f32 %v3581, %v3893
    %v3895 = vand.u32 %v3894, 4294901760
    %3896 = vmatpush.msra.mxu0 %v3895
    %v3897 = vand.u32 %v3580, 4294901760
    %v3898 = vsub.f32 %v3580, %v3897
    %v3899 = vand.u32 %v3898, 4294901760
    %3900 = vmatpush.msra.mxu0 %v3899
    %v3901 = vand.u32 %v3579, 4294901760
    %v3902 = vsub.f32 %v3579, %v3901
    %v3903 = vand.u32 %v3902, 4294901760
    %3904 = vmatpush.msra.mxu0 %v3903
    %v3905 = vand.u32 %v3577, 4294901760
    %3906 = vmatmul.f32.gmra.mxu0 %v3905
    %v3907 = vpop.f32.mrf.mxu0
    %v3908 = vadd.f32 %v3839, %v3907
    %3909 = vdwg.mxu0
    %v3910 = vand.u32 %v3594, 4294901760
    %3911 = vmatpush.msra.mxu0 %v3910
    %v3912 = vand.u32 %v3593, 4294901760
    %3913 = vmatpush.msra.mxu0 %v3912
    %v3914 = vand.u32 %v3592, 4294901760
    %3915 = vmatpush.msra.mxu0 %v3914
    %v3916 = vand.u32 %v3591, 4294901760
    %3917 = vmatpush.msra.mxu0 %v3916
    %v3918 = vand.u32 %v3590, 4294901760
    %3919 = vmatpush.msra.mxu0 %v3918
    %v3920 = vand.u32 %v3589, 4294901760
    %3921 = vmatpush.msra.mxu0 %v3920
    %v3922 = vand.u32 %v3588, 4294901760
    %3923 = vmatpush.msra.mxu0 %v3922
    %v3924 = vand.u32 %v3587, 4294901760
    %3925 = vmatpush.msra.mxu0 %v3924
    %v3926 = vand.u32 %v3586, 4294901760
    %3927 = vmatpush.msra.mxu0 %v3926
    %v3928 = vand.u32 %v3585, 4294901760
    %3929 = vmatpush.msra.mxu0 %v3928
    %v3930 = vand.u32 %v3584, 4294901760
    %3931 = vmatpush.msra.mxu0 %v3930
    %v3932 = vand.u32 %v3583, 4294901760
    %3933 = vmatpush.msra.mxu0 %v3932
    %v3934 = vand.u32 %v3582, 4294901760
    %3935 = vmatpush.msra.mxu0 %v3934
    %v3936 = vand.u32 %v3581, 4294901760
    %3937 = vmatpush.msra.mxu0 %v3936
    %v3938 = vand.u32 %v3580, 4294901760
    %3939 = vmatpush.msra.mxu0 %v3938
    %v3940 = vand.u32 %v3579, 4294901760
    %3941 = vmatpush.msra.mxu0 %v3940
    %v3942 = vand.u32 %v3577, 4294901760
    %3943 = vmatmul.f32.gmra.mxu0 %v3942
    %v3944 = vpop.f32.mrf.mxu0
    %v3945 = vadd.f32 %v3908, %v3944
    %3946 = vdwg.mxu0
    %3947 = vmatpush.msra.mxu0 0.0
    %3948 = vmatpush.msra.mxu0 0.0
    %3949 = vmatpush.msra.mxu0 0.0
    %3950 = vmatpush.msra.mxu0 0.0
    %3951 = vmatpush.msra.mxu0 0.0
    %3952 = vmatpush.msra.mxu0 0.0
    %3953 = vmatpush.msra.mxu0 0.0
    %3954 = vmatpush.msra.mxu0 0.0
    %3955 = vmatpush.msra.mxu0 0.0
    %3956 = vmatpush.msra.mxu0 0.0
    %3957 = vmatpush.msra.mxu0 0.0
    %v3958 = vand.u32 %v3604, 4294901760
    %3959 = vmatpush.msra.mxu0 %v3958
    %v3960 = vand.u32 %v3598, 4294901760
    %3961 = vmatpush.msra.mxu0 %v3960
    %v3962 = vand.u32 %v3597, 4294901760
    %3963 = vmatpush.msra.mxu0 %v3962
    %v3964 = vand.u32 %v3596, 4294901760
    %3965 = vmatpush.msra.mxu0 %v3964
    %v3966 = vand.u32 %v3595, 4294901760
    %3967 = vmatpush.msra.mxu0 %v3966
    %v3968 = vand.u32 %v3601, 4294901760
    %v3969 = vsub.f32 %v3601, %v3968
    %v3970 = vand.u32 %v3969, 4294901760
    %v3971 = vsub.f32 %v3969, %v3970
    %v3972 = vand.u32 %v3971, 4294901760
    %3973 = vmatmul.f32.gmra.mxu0 %v3972
    %v3974 = vpop.f32.mrf.mxu0
    %v3975 = vadd.f32 %v3945, %v3974
    %3976 = vdwg.mxu0
    %3977 = vmatpush.msra.mxu0 0.0
    %3978 = vmatpush.msra.mxu0 0.0
    %3979 = vmatpush.msra.mxu0 0.0
    %3980 = vmatpush.msra.mxu0 0.0
    %3981 = vmatpush.msra.mxu0 0.0
    %3982 = vmatpush.msra.mxu0 0.0
    %3983 = vmatpush.msra.mxu0 0.0
    %3984 = vmatpush.msra.mxu0 0.0
    %3985 = vmatpush.msra.mxu0 0.0
    %3986 = vmatpush.msra.mxu0 0.0
    %3987 = vmatpush.msra.mxu0 0.0
    %v3988 = vand.u32 %v3604, 4294901760
    %v3989 = vsub.f32 %v3604, %v3988
    %v3990 = vand.u32 %v3989, 4294901760
    %v3991 = vsub.f32 %v3989, %v3990
    %v3992 = vand.u32 %v3991, 4294901760
    %3993 = vmatpush.msra.mxu0 %v3992
    %v3994 = vand.u32 %v3598, 4294901760
    %v3995 = vsub.f32 %v3598, %v3994
    %v3996 = vand.u32 %v3995, 4294901760
    %v3997 = vsub.f32 %v3995, %v3996
    %v3998 = vand.u32 %v3997, 4294901760
    %3999 = vmatpush.msra.mxu0 %v3998
    %v4000 = vand.u32 %v3597, 4294901760
    %v4001 = vsub.f32 %v3597, %v4000
    %v4002 = vand.u32 %v4001, 4294901760
    %v4003 = vsub.f32 %v4001, %v4002
    %v4004 = vand.u32 %v4003, 4294901760
    %4005 = vmatpush.msra.mxu0 %v4004
    %v4006 = vand.u32 %v3596, 4294901760
    %v4007 = vsub.f32 %v3596, %v4006
    %v4008 = vand.u32 %v4007, 4294901760
    %v4009 = vsub.f32 %v4007, %v4008
    %v4010 = vand.u32 %v4009, 4294901760
    %4011 = vmatpush.msra.mxu0 %v4010
    %v4012 = vand.u32 %v3595, 4294901760
    %v4013 = vsub.f32 %v3595, %v4012
    %v4014 = vand.u32 %v4013, 4294901760
    %v4015 = vsub.f32 %v4013, %v4014
    %v4016 = vand.u32 %v4015, 4294901760
    %4017 = vmatpush.msra.mxu0 %v4016
    %v4018 = vand.u32 %v3601, 4294901760
    %4019 = vmatmul.f32.gmra.mxu0 %v4018
    %v4020 = vpop.f32.mrf.mxu0
    %v4021 = vadd.f32 %v3975, %v4020
    %4022 = vdwg.mxu0
    %4023 = vmatpush.msra.mxu0 0.0
    %4024 = vmatpush.msra.mxu0 0.0
    %4025 = vmatpush.msra.mxu0 0.0
    %4026 = vmatpush.msra.mxu0 0.0
    %4027 = vmatpush.msra.mxu0 0.0
    %4028 = vmatpush.msra.mxu0 0.0
    %4029 = vmatpush.msra.mxu0 0.0
    %4030 = vmatpush.msra.mxu0 0.0
    %4031 = vmatpush.msra.mxu0 0.0
    %4032 = vmatpush.msra.mxu0 0.0
    %4033 = vmatpush.msra.mxu0 0.0
    %v4034 = vand.u32 %v3604, 4294901760
    %v4035 = vsub.f32 %v3604, %v4034
    %4036 = vmatpush.msra.mxu0 %v4035
    %v4037 = vand.u32 %v3598, 4294901760
    %v4038 = vsub.f32 %v3598, %v4037
    %4039 = vmatpush.msra.mxu0 %v4038
    %v4040 = vand.u32 %v3597, 4294901760
    %v4041 = vsub.f32 %v3597, %v4040
    %4042 = vmatpush.msra.mxu0 %v4041
    %v4043 = vand.u32 %v3596, 4294901760
    %v4044 = vsub.f32 %v3596, %v4043
    %4045 = vmatpush.msra.mxu0 %v4044
    %v4046 = vand.u32 %v3595, 4294901760
    %v4047 = vsub.f32 %v3595, %v4046
    %4048 = vmatpush.msra.mxu0 %v4047
    %v4049 = vand.u32 %v3601, 4294901760
    %v4050 = vsub.f32 %v3601, %v4049
    %4051 = vmatmul.f32.gmra.mxu0 %v4050
    %v4052 = vpop.f32.mrf.mxu0
    %v4053 = vadd.f32 %v4021, %v4052
    %4054 = vdwg.mxu0
    %4055 = vmatpush.msra.mxu0 0.0
    %4056 = vmatpush.msra.mxu0 0.0
    %4057 = vmatpush.msra.mxu0 0.0
    %4058 = vmatpush.msra.mxu0 0.0
    %4059 = vmatpush.msra.mxu0 0.0
    %4060 = vmatpush.msra.mxu0 0.0
    %4061 = vmatpush.msra.mxu0 0.0
    %4062 = vmatpush.msra.mxu0 0.0
    %4063 = vmatpush.msra.mxu0 0.0
    %4064 = vmatpush.msra.mxu0 0.0
    %4065 = vmatpush.msra.mxu0 0.0
    %v4066 = vand.u32 %v3604, 4294901760
    %4067 = vmatpush.msra.mxu0 %v4066
    %v4068 = vand.u32 %v3598, 4294901760
    %4069 = vmatpush.msra.mxu0 %v4068
    %v4070 = vand.u32 %v3597, 4294901760
    %4071 = vmatpush.msra.mxu0 %v4070
    %v4072 = vand.u32 %v3596, 4294901760
    %4073 = vmatpush.msra.mxu0 %v4072
    %v4074 = vand.u32 %v3595, 4294901760
    %4075 = vmatpush.msra.mxu0 %v4074
    %v4076 = vand.u32 %v3601, 4294901760
    %v4077 = vsub.f32 %v3601, %v4076
    %v4078 = vand.u32 %v4077, 4294901760
    %4079 = vmatmul.f32.gmra.mxu0 %v4078
    %v4080 = vpop.f32.mrf.mxu0
    %v4081 = vadd.f32 %v4053, %v4080
    %4082 = vdwg.mxu0
    %4083 = vmatpush.msra.mxu0 0.0
    %4084 = vmatpush.msra.mxu0 0.0
    %4085 = vmatpush.msra.mxu0 0.0
    %4086 = vmatpush.msra.mxu0 0.0
    %4087 = vmatpush.msra.mxu0 0.0
    %4088 = vmatpush.msra.mxu0 0.0
    %4089 = vmatpush.msra.mxu0 0.0
    %4090 = vmatpush.msra.mxu0 0.0
    %4091 = vmatpush.msra.mxu0 0.0
    %4092 = vmatpush.msra.mxu0 0.0
    %4093 = vmatpush.msra.mxu0 0.0
    %v4094 = vand.u32 %v3604, 4294901760
    %v4095 = vsub.f32 %v3604, %v4094
    %v4096 = vand.u32 %v4095, 4294901760
    %4097 = vmatpush.msra.mxu0 %v4096
    %v4098 = vand.u32 %v3598, 4294901760
    %v4099 = vsub.f32 %v3598, %v4098
    %v4100 = vand.u32 %v4099, 4294901760
    %4101 = vmatpush.msra.mxu0 %v4100
    %v4102 = vand.u32 %v3597, 4294901760
    %v4103 = vsub.f32 %v3597, %v4102
    %v4104 = vand.u32 %v4103, 4294901760
    %4105 = vmatpush.msra.mxu0 %v4104
    %v4106 = vand.u32 %v3596, 4294901760
    %v4107 = vsub.f32 %v3596, %v4106
    %v4108 = vand.u32 %v4107, 4294901760
    %4109 = vmatpush.msra.mxu0 %v4108
    %v4110 = vand.u32 %v3595, 4294901760
    %v4111 = vsub.f32 %v3595, %v4110
    %v4112 = vand.u32 %v4111, 4294901760
    %4113 = vmatpush.msra.mxu0 %v4112
    %v4114 = vand.u32 %v3601, 4294901760
    %4115 = vmatmul.f32.gmra.mxu0 %v4114
    %v4116 = vpop.f32.mrf.mxu0
    %v4117 = vadd.f32 %v4081, %v4116
    %4118 = vdwg.mxu0
    %4119 = vmatpush.msra.mxu0 0.0
    %4120 = vmatpush.msra.mxu0 0.0
    %4121 = vmatpush.msra.mxu0 0.0
    %4122 = vmatpush.msra.mxu0 0.0
    %4123 = vmatpush.msra.mxu0 0.0
    %4124 = vmatpush.msra.mxu0 0.0
    %4125 = vmatpush.msra.mxu0 0.0
    %4126 = vmatpush.msra.mxu0 0.0
    %4127 = vmatpush.msra.mxu0 0.0
    %4128 = vmatpush.msra.mxu0 0.0
    %4129 = vmatpush.msra.mxu0 0.0
    %v4130 = vand.u32 %v3604, 4294901760
    %4131 = vmatpush.msra.mxu0 %v4130
    %v4132 = vand.u32 %v3598, 4294901760
    %4133 = vmatpush.msra.mxu0 %v4132
    %v4134 = vand.u32 %v3597, 4294901760
    %4135 = vmatpush.msra.mxu0 %v4134
    %v4136 = vand.u32 %v3596, 4294901760
    %4137 = vmatpush.msra.mxu0 %v4136
    %v4138 = vand.u32 %v3595, 4294901760
    %4139 = vmatpush.msra.mxu0 %v4138
    %v4140 = vand.u32 %v3601, 4294901760
    %4141 = vmatmul.f32.gmra.mxu0 %v4140
    %v4142 = vpop.f32.mrf.mxu0
    %v4143 = vadd.f32 %v4117, %v4142
    %4144 = vdwg.mxu0
    %4145 = vst [vmem:[#allocation2] sm:$0xff] %v4143
    %v4146 = vlaneseq
    %v4147 = vand.u32 %v4146, 127
    %vm4148 = vcmp.lt.s32.totalorder %v4147, 5
    %vm4149 = vcmp.ge.s32.totalorder %v4147, 5
    %vm4150 = vcmp.lt.s32.totalorder %v4147, 10
    %vm4151 = vmand %vm4149, %vm4150
    %v4152 = vsel %vm4148, %v4143, 0.0
    %4153 = vadd.xlane.f32.xlu0 %v4152
    %v4154 = vpop.xlane.xlu0 %4153
    %v4155 = vrot.slane %v4154, 4
    %v4156 = vadd.f32 %v4154, %v4155
    %v4157 = vrot.slane %v4156, 2
    %v4158 = vadd.f32 %v4156, %v4157
    %v4159 = vrot.slane %v4158, 1
    %v4160 = vadd.f32 %v4158, %v4159
    %v4161 = vmul.f32 %v4160, 0.025
    %v4162 = vmul.f32 %v4143, 1.442695
    %v4163 = vpow.pop %v4162
    %v4164 = vsel %vm4151, %v4163, 0.0
    %v4165 = vmul.f32 %v4152, %v4152
    %v4166 = vadd.f32 %v4164, %v4165
    %4167 = vadd.xlane.f32.xlu0 %v4166
    %v4168 = vpop.xlane.xlu0 %4167
    %v4169 = vrot.slane %v4168, 4
    %v4170 = vadd.f32 %v4168, %v4169
    %v4171 = vrot.slane %v4170, 2
    %v4172 = vadd.f32 %v4170, %v4171
    %v4173 = vrot.slane %v4172, 1
    %v4174 = vadd.f32 %v4172, %v4173
    %v4175 = vmul.f32 %v4174, 0.025
    %vm4176 = vcmask 0
    %4177 = vst.msk [vmem:[#allocation4] sm:$0x1] %vm4176, %v4161
    %v4178 = vmul.f32 %v4161, %v4161
    %v4179 = vsub.f32 %v4175, %v4178
    %4180 = vst.msk [vmem:[#allocation6] sm:$0x1] %vm4176, %v4179
    // Predicated region
    $region22: #{tpu_custom_call.1} parent=1 // pred_check
      _
    $region23: #{tpu_custom_call.1} parent=1 // pred_check_branch
      %4182 = sbr.rel (0) target = $region25
    $region24: #{tpu_custom_call.1} parent=1 // pred_region
      %4184 = vsyncadd [#allocation3], 0
      %s4186 = sshll.u32 [#allocation2], 4
      %s4187 = int_to_ptr.vmem [resolvable:$true] %s4186
      %s4188 = sshll.u32 %s5, 4
      %s4189 = int_to_ptr.hbm [resolvable:$true] %s4188
      %4191 = dma.vmem_to_hbm [thread:$0]  %s4187, 128, %s4189, [#allocation3]
    $region25: #{tpu_custom_call.1} parent=1 // pred_fallthru
      _
    // Predicated region
    $region26: #{tpu_custom_call.1} parent=1 // pred_check
      _
    $region27: #{tpu_custom_call.1} parent=1 // pred_check_branch
      %4193 = sbr.rel (0) target = $region29
    $region28: #{tpu_custom_call.1} parent=1 // pred_region
      %4195 = vsyncadd [#allocation5], 0
      %s4197 = sshll.u32 [#allocation4], 4
      %s4198 = int_to_ptr.vmem [resolvable:$true] %s4197
      %s4199 = sshll.u32 %s6, 4
      %s4200 = int_to_ptr.hbm [resolvable:$true] %s4199
      %4202 = dma.vmem_to_hbm [thread:$0]  %s4198, 16, %s4200, [#allocation5]
    $region29: #{tpu_custom_call.1} parent=1 // pred_fallthru
      _
    // Predicated region
    $region30: #{tpu_custom_call.1} parent=1 // pred_check
      _
    $region31: #{tpu_custom_call.1} parent=1 // pred_check_branch
      %4204 = sbr.rel (0) target = $region33
    $region32: #{tpu_custom_call.1} parent=1 // pred_region
      %4206 = vsyncadd [#allocation5], 0
      %s4208 = sshll.u32 [#allocation6], 4
      %s4209 = int_to_ptr.vmem [resolvable:$true] %s4208
      %s4210 = sshll.u32 %s7, 4
      %s4211 = int_to_ptr.hbm [resolvable:$true] %s4210
      %4213 = dma.vmem_to_hbm [thread:$0]  %s4209, 16, %s4211, [#allocation5]
    $region33: #{tpu_custom_call.1} parent=1 // pred_fallthru
      _
    // Predicated region
    $region34: #{tpu_custom_call.1} parent=1 // pred_check
      _
    $region35: #{tpu_custom_call.1} parent=1 // pred_check_branch
      %4215 = sbr.rel (0) target = $region37
    $region36: #{tpu_custom_call.1} parent=1 // pred_region
      %4217 = dma.done [#allocation3], 128
    $region37: #{tpu_custom_call.1} parent=1 // pred_fallthru
      _
    // Predicated region
    $region38: #{tpu_custom_call.1} parent=1 // pred_check
      _
    $region39: #{tpu_custom_call.1} parent=1 // pred_check_branch
      %4219 = sbr.rel (0) target = $region41
    $region40: #{tpu_custom_call.1} parent=1 // pred_region
      %4221 = dma.done [#allocation5], 16
    $region41: #{tpu_custom_call.1} parent=1 // pred_fallthru
      _
    // Predicated region
    $region42: #{tpu_custom_call.1} parent=1 // pred_check
      _
    $region43: #{tpu_custom_call.1} parent=1 // pred_check_branch
      %4223 = sbr.rel (0) target = $region45
    $region44: #{tpu_custom_call.1} parent=1 // pred_region
      %4225 = dma.done [#allocation5], 16
    $region45: #{tpu_custom_call.1} parent=1 // pred_fallthru
      _
    %4226 = vsyncpa [#allocation3], 1
    %4227 = vsyncpa [#allocation5], 1

</llo_original>
